<compile_context>
chip_gen: v7x
topology: tpu7x:2x2x1
jax: 0.10.0
libtpu: 0.0.40
codegen_flags: <defaults>
</compile_context>

<pallas_src>
import jax
import jax.numpy as jnp
from jax.experimental import pallas as pl
from jax.experimental.pallas import tpu as pltpu

_STAGE1_TILE = 512      # rows (pooled conv1 positions) per grid step
_STAGE2_TILE = 128      # images per grid step (sized for v7x 64 MiB VMEM)
_VMEM_LIMIT = 32 * 1024 * 1024


def _round_up(x, m):
    return ((x + m - 1) // m) * m


# ------------------------------ Pallas kernels ------------------------------

def _stage1_kernel(p_ref, w_ref, b_ref, o_ref):
    """Fused conv1(5x5, valid) + bias + ReLU + MaxPool(2,2).

    p_ref : (4, TM, 75) bf16 -- im2col patches, leading dim = 2x2 pool offset
    w_ref : (75, 6)     bf16
    b_ref : (1, 6)      f32
    o_ref : (TM, 6)     bf16 -- pooled conv1 activations (rows = (n, r, c))
    """
    d4, tm, kdim = p_ref.shape
    p = p_ref[...].reshape(d4 * tm, kdim)            # leading-dim collapse (TM % 16 == 0)
    acc = jnp.dot(p, w_ref[...], preferred_element_type=jnp.float32)   # (4*TM, 6)
    pooled = jnp.maximum(jnp.maximum(acc[0:tm], acc[tm:2 * tm]),
                         jnp.maximum(acc[2 * tm:3 * tm], acc[3 * tm:4 * tm]))
    o_ref[...] = jnp.maximum(pooled + b_ref[...], 0.0).astype(o_ref.dtype)


def _stage2_head_kernel(p_ref, w2_ref, b2_ref, w3_ref, b3_ref,
                        w4_ref, b4_ref, w5_ref, b5_ref, o_ref):
    """Fused conv2 + bias + ReLU + MaxPool + flatten + fc1/ReLU + fc2/ReLU + fc3.

    p_ref  : (4, 25, TN, 150) bf16 -- conv2 im2col patches
                                      [pool offset, pooled position, image, (ki,kj,c)]
    w2_ref : (150, 16) bf16  (dense conv2 weight; no block-diagonal)
    w3_ref : (400, 120) bf16 (fc1; rows ordered (position, channel) == (h,w,c) flatten)
    o_ref  : (TN, classes) f32
    """
    d4, npos, tn, kdim = p_ref.shape
    co = w2_ref.shape[1]                             # 16
    m = npos * tn

    # conv2 for all 4 pool offsets and all 25 positions in ONE matmul.
    p = p_ref[...].reshape(d4 * m, kdim)             # rows ordered (offset, pos, n)
    conv = jnp.dot(p, w2_ref[...], preferred_element_type=jnp.float32)   # (4*m, 16)

    # MaxPool(2,2): max over the 4 contiguous row blocks (static sublane slices).
    pooled = jnp.maximum(jnp.maximum(conv[0:m], conv[m:2 * m]),
                         jnp.maximum(conv[2 * m:3 * m], conv[3 * m:4 * m]))  # (25*TN, 16)
    h = jnp.maximum(pooled + b2_ref[...], 0.0).astype(jnp.bfloat16)

    # fc1: y[n,:] = sum_pos h[pos, n, :] @ W1[pos]   (25 per-position dots, f32 acc).
    w3 = w3_ref[...]
    acc = jnp.zeros((tn, w3.shape[1]), jnp.float32)
    for pp in range(npos):
        acc += jnp.dot(h[pp * tn:(pp + 1) * tn, :],
                       w3[co * pp:co * (pp + 1), :],
                       preferred_element_type=jnp.float32)
    h1 = jnp.maximum(acc + b3_ref[...], 0.0).astype(jnp.bfloat16)        # (TN, 120)

    h2 = jnp.maximum(jnp.dot(h1, w4_ref[...], preferred_element_type=jnp.float32)
                     + b4_ref[...], 0.0).astype(jnp.bfloat16)            # (TN, 84)
    o_ref[...] = (jnp.dot(h2, w5_ref[...], preferred_element_type=jnp.float32)
                  + b5_ref[...])


# ------------------------------ pallas_call wrappers ------------------------------

def stage1(patches, w1, b1, *, tile):
    _, mpad, kdim = patches.shape
    cout = w1.shape[1]
    flops = 2 * 4 * mpad * kdim * cout
    bytes_acc = patches.size * 2 + w1.size * 2 + b1.size * 4 + mpad * cout * 2
    return pl.pallas_call(
        _stage1_kernel,
        grid=(mpad // tile,),
        in_specs=[pl.BlockSpec((4, tile, kdim), lambda i: (0, i, 0)),
                  pl.BlockSpec((kdim, cout), lambda i: (0, 0)),
                  pl.BlockSpec((1, cout), lambda i: (0, 0))],
        out_specs=pl.BlockSpec((tile, cout), lambda i: (i, 0)),
        out_shape=jax.ShapeDtypeStruct((mpad, cout), jnp.bfloat16),
        compiler_params=pltpu.CompilerParams(
            dimension_semantics=("parallel",),
            vmem_limit_bytes=_VMEM_LIMIT),
        cost_estimate=pl.CostEstimate(flops=flops, transcendentals=0,
                                      bytes_accessed=bytes_acc),
    )(patches, w1, b1)


def stage2_head(patches, p, *, tile):
    _, npos, npad, kdim = patches.shape
    classes = p["fc3_w"].shape[1]
    flops = (2 * 4 * npos * npad * kdim * p["conv2_w"].shape[1]
             + 2 * npad * (400 * 120 + 120 * 84 + 84 * classes))
    bytes_acc = (patches.size * 2
                 + sum(p[k].size * 2 for k in ("conv2_w", "fc1_w", "fc2_w", "fc3_w"))
                 + sum(p[k].size * 4 for k in ("conv2_b", "fc1_b", "fc2_b", "fc3_b"))
                 + npad * classes * 4)
    return pl.pallas_call(
        _stage2_head_kernel,
        grid=(npad // tile,),
        in_specs=[pl.BlockSpec((4, npos, tile, kdim), lambda i: (0, 0, i, 0)),
                  pl.BlockSpec(p["conv2_w"].shape, lambda i: (0, 0)),
                  pl.BlockSpec(p["conv2_b"].shape, lambda i: (0, 0)),
                  pl.BlockSpec(p["fc1_w"].shape, lambda i: (0, 0)),
                  pl.BlockSpec(p["fc1_b"].shape, lambda i: (0, 0)),
                  pl.BlockSpec(p["fc2_w"].shape, lambda i: (0, 0)),
                  pl.BlockSpec(p["fc2_b"].shape, lambda i: (0, 0)),
                  pl.BlockSpec(p["fc3_w"].shape, lambda i: (0, 0)),
                  pl.BlockSpec(p["fc3_b"].shape, lambda i: (0, 0))],
        out_specs=pl.BlockSpec((tile, classes), lambda i: (i, 0)),
        out_shape=jax.ShapeDtypeStruct((npad, classes), jnp.float32),
        compiler_params=pltpu.CompilerParams(
            dimension_semantics=("parallel",),
            vmem_limit_bytes=_VMEM_LIMIT),
        cost_estimate=pl.CostEstimate(flops=flops, transcendentals=0,
                                      bytes_accessed=bytes_acc),
    )(patches, p["conv2_w"], p["conv2_b"], p["fc1_w"], p["fc1_b"],
      p["fc2_w"], p["fc2_b"], p["fc3_w"], p["fc3_b"])


# ------------------------------ XLA glue (patch extraction) ------------------------------

def _conv1_pool_patches(x):
    """(N,32,32,3) bf16 -> (4, N*196, 75): im2col patches for the fused
    'conv1(5x5, valid) -> MaxPool(2,2)' stage, one slab per 2x2 pool offset.
    Columns ordered (ki, kj, channel); rows ordered (n, r, c)."""
    n = x.shape[0]
    slabs = []
    for dr in range(2):
        for dc in range(2):
            taps = []
            for i in range(5):
                for j in range(5):
                    taps.append(x[:, dr + i: dr + i + 28: 2,
                                     dc + j: dc + j + 28: 2, :])
            pat = jnp.concatenate(taps, axis=-1)              # (N, 14, 14, 75)
            slabs.append(pat.reshape(n * 196, 75))
    return jnp.stack(slabs, axis=0)                           # (4, N*196, 75)


def _conv2_pool_patches(h):
    """(N,14,14,6) bf16 -> (4, 25, N, 150): conv2 patches indexed
    [pool offset, pooled output position, image, (ki,kj,channel)]."""
    n = h.shape[0]
    slabs = []
    for dr in range(2):
        for dc in range(2):
            pos = []
            for r in range(5):
                for cc in range(5):
                    patch = h[:, 2 * r + dr: 2 * r + dr + 5,
                                 2 * cc + dc: 2 * cc + dc + 5, :]
                    pos.append(patch.reshape(n, 150))
            slabs.append(jnp.stack(pos, axis=0))              # (25, N, 150)
    return jnp.stack(slabs, axis=0)                           # (4, 25, N, 150)


# ------------------------------ parameters ------------------------------

def _uniform(key, shape, bound):
    return jax.random.uniform(key, shape, jnp.float32, -bound, bound)


def init_params(key, classes):
    ks = jax.random.split(key, 10)
    bf = jnp.bfloat16
    f1 = (3 * 5 * 5) ** -0.5
    w1 = _uniform(ks[0], (5, 5, 3, 6), f1).reshape(75, 6)     # (ki,kj,cin) x cout
    b1 = _uniform(ks[1], (1, 6), f1)
    f2 = (6 * 5 * 5) ** -0.5
    w2 = _uniform(ks[2], (5, 5, 6, 16), f2).reshape(150, 16)  # dense conv2 weight
    b2 = _uniform(ks[3], (1, 16), f2)
    f3 = 400 ** -0.5
    fc1_w = _uniform(ks[4], (400, 120), f3)                   # rows ordered (pos, channel)
    fc1_b = _uniform(ks[5], (1, 120), f3)
    f4 = 120 ** -0.5
    fc2_w = _uniform(ks[6], (120, 84), f4)
    fc2_b = _uniform(ks[7], (1, 84), f4)
    f5 = 84 ** -0.5
    fc3_w = _uniform(ks[8], (84, classes), f5)
    fc3_b = _uniform(ks[9], (1, classes), f5)
    # Weights feeding the MXU are stored bf16 (f32 accumulation in-kernel);
    # biases / elementwise math stay f32.
    return dict(conv1_w=w1.astype(bf), conv1_b=b1,
                conv2_w=w2.astype(bf), conv2_b=b2,
                fc1_w=fc1_w.astype(bf), fc1_b=fc1_b,
                fc2_w=fc2_w.astype(bf), fc2_b=fc2_b,
                fc3_w=fc3_w.astype(bf), fc3_b=fc3_b)


# ------------------------------ forward ------------------------------

def cnn_cifar_forward(params, x_nchw):
    x = jnp.transpose(x_nchw, (0, 2, 3, 1)).astype(jnp.bfloat16)   # NCHW -> NHWC, bf16
    n = x.shape[0]

    # Stage 1: conv1(3->6, 5x5) + ReLU + MaxPool(2,2), gridded over pooled rows.
    m = n * 14 * 14
    tm = _STAGE1_TILE if m >= _STAGE1_TILE else _round_up(m, 16)
    mpad = _round_up(m, tm)
    p1 = _conv1_pool_patches(x)                                     # (4, m, 75) bf16
    if mpad != m:
        p1 = jnp.pad(p1, ((0, 0), (0, mpad - m), (0, 0)))
    h1 = stage1(p1, params["conv1_w"], params["conv1_b"], tile=tm)  # (mpad, 6) bf16
    h1 = h1[:m].reshape(n, 14, 14, 6)

    # Stage 2 + head: conv2 + ReLU + MaxPool + flatten + fc1..fc3, gridded over batch.
    tn = _STAGE2_TILE if n >= _STAGE2_TILE else _round_up(n, 16)
    npad = _round_up(n, tn)
    p2 = _conv2_pool_patches(h1)                                    # (4, 25, n, 150) bf16
    if npad != n:
        p2 = jnp.pad(p2, ((0, 0), (0, 0), (0, npad - n), (0, 0)))
    out = stage2_head(p2, params, tile=tn)                          # (npad, classes) f32
    return out[:n]


if __name__ == "__main__":
    classes = 10
    key = jax.random.PRNGKey(0)
    kp, kx = jax.random.split(key)
    params = init_params(kp, classes)
    # CNNCifar's flatten (16*5*5) implies 3x32x32 inputs.
    x = jax.random.normal(kx, (2, 3, 32, 32), jnp.float32)
    out = jax.jit(cnn_cifar_forward)(params, x)
    jax.block_until_ready(out)
    assert out.shape == (2, classes), out.shape
    assert bool(jnp.all(jnp.isfinite(out)))
    print("KERNEL_OK")
</pallas_src>

<mosaic_0001>
module attributes {stable_mosaic.version = 11 : i64} {
  func.func @_stage1_kernel(%arg0: i32, %arg1: memref<4x400x75xbf16, #tpu.memory_space<vmem>>, %arg2: memref<75x6xbf16, #tpu.memory_space<vmem>>, %arg3: memref<1x6xf32, #tpu.memory_space<vmem>>, %arg4: memref<400x6xbf16, #tpu.memory_space<vmem>>) attributes {dimension_semantics = [#tpu.dimension_semantics<parallel>], iteration_bounds = array<i64: 1>, scalar_prefetch = 0 : i64, scratch_operands = 0 : i64, tpu.core_type = #tpu.core_type<tc>, window_params = [{transform_indices = @transform_0, window_bounds = array<i64: 4, 400, 75>}, {pipeline_mode = #tpu.pipeline_mode<synchronous>, transform_indices = @transform_1, window_bounds = array<i64: 75, 6>}, {pipeline_mode = #tpu.pipeline_mode<synchronous>, transform_indices = @transform_2, window_bounds = array<i64: 1, 6>}, {transform_indices = @transform_3, window_bounds = array<i64: 400, 6>}]} {
    %c0 = arith.constant 0 : index
    %c0_0 = arith.constant 0 : index
    %c0_1 = arith.constant 0 : index
    %0 = vector.load %arg1[%c0, %c0_0, %c0_1] : memref<4x400x75xbf16, #tpu.memory_space<vmem>>, vector<4x400x75xbf16>
    %1 = vector.shape_cast %0 : vector<4x400x75xbf16> to vector<1600x75xbf16>
    %c0_2 = arith.constant 0 : index
    %c0_3 = arith.constant 0 : index
    %2 = vector.load %arg2[%c0_2, %c0_3] : memref<75x6xbf16, #tpu.memory_space<vmem>>, vector<75x6xbf16>
    %cst = arith.constant dense<0.000000e+00> : vector<1600x6xf32>
    %3 = tpu.matmul %1, %2, %cst {dimension_numbers = #tpu.dot_dimension_numbers<[1], [0], [0], [1], [0, 0, 1, 1], [], []>} : vector<1600x75xbf16>, vector<75x6xbf16>, vector<1600x6xf32> -> vector<1600x6xf32>
    %4 = vector.extract_strided_slice %3 {offsets = [0, 0], sizes = [400, 6], strides = [1, 1]} : vector<1600x6xf32> to vector<400x6xf32>
    %5 = vector.extract_strided_slice %3 {offsets = [400, 0], sizes = [400, 6], strides = [1, 1]} : vector<1600x6xf32> to vector<400x6xf32>
    %6 = arith.maximumf %4, %5 : vector<400x6xf32>
    %7 = vector.extract_strided_slice %3 {offsets = [800, 0], sizes = [400, 6], strides = [1, 1]} : vector<1600x6xf32> to vector<400x6xf32>
    %8 = vector.extract_strided_slice %3 {offsets = [1200, 0], sizes = [400, 6], strides = [1, 1]} : vector<1600x6xf32> to vector<400x6xf32>
    %9 = arith.maximumf %7, %8 : vector<400x6xf32>
    %10 = arith.maximumf %6, %9 : vector<400x6xf32>
    %c0_4 = arith.constant 0 : index
    %c0_5 = arith.constant 0 : index
    %11 = vector.load %arg3[%c0_4, %c0_5] : memref<1x6xf32, #tpu.memory_space<vmem>>, vector<1x6xf32>
    %12 = vector.broadcast %11 : vector<1x6xf32> to vector<400x6xf32>
    %13 = arith.addf %10, %12 : vector<400x6xf32>
    %cst_6 = arith.constant 0.000000e+00 : f32
    %14 = vector.broadcast %cst_6 : f32 to vector<400x6xf32>
    %15 = arith.maximumf %13, %14 : vector<400x6xf32>
    %16 = arith.truncf %15 : vector<400x6xf32> to vector<400x6xbf16>
    %c0_7 = arith.constant 0 : index
    %c0_8 = arith.constant 0 : index
    %17 = vector.load %arg4[%c0_7, %c0_8] : memref<400x6xbf16, #tpu.memory_space<vmem>>, vector<400x6xbf16>
    tpu.vector_store %arg4[%c0_7, %c0_8], %16 {strides = array<i32>} : memref<400x6xbf16, #tpu.memory_space<vmem>>, vector<400x6xbf16>,
    return
  }
  func.func @transform_0(%arg0: i32) -> (i32, i32, i32) {
    %c0_i32 = arith.constant 0 : i32
    %c0_i32_0 = arith.constant 0 : i32
    %c0_i32_1 = arith.constant 0 : i32
    return %c0_i32, %arg0, %c0_i32_0 : i32, i32, i32
  }
  func.func @transform_1(%arg0: i32) -> (i32, i32) {
    %c0_i32 = arith.constant 0 : i32
    %c0_i32_0 = arith.constant 0 : i32
    %c0_i32_1 = arith.constant 0 : i32
    return %c0_i32, %c0_i32_0 : i32, i32
  }
  func.func @transform_2(%arg0: i32) -> (i32, i32) {
    %c0_i32 = arith.constant 0 : i32
    %c0_i32_0 = arith.constant 0 : i32
    %c0_i32_1 = arith.constant 0 : i32
    return %c0_i32, %c0_i32_0 : i32, i32
  }
  func.func @transform_3(%arg0: i32) -> (i32, i32) {
    %c0_i32 = arith.constant 0 : i32
    %c0_i32_0 = arith.constant 0 : i32
    return %arg0, %c0_i32 : i32, i32
  }
}

module attributes {stable_mosaic.version = 11 : i64} {
  func.func @_stage2_head_kernel(%arg0: i32, %arg1: memref<4x25x16x150xbf16, #tpu.memory_space<vmem>>, %arg2: memref<150x16xbf16, #tpu.memory_space<vmem>>, %arg3: memref<1x16xf32, #tpu.memory_space<vmem>>, %arg4: memref<400x120xbf16, #tpu.memory_space<vmem>>, %arg5: memref<1x120xf32, #tpu.memory_space<vmem>>, %arg6: memref<120x84xbf16, #tpu.memory_space<vmem>>, %arg7: memref<1x84xf32, #tpu.memory_space<vmem>>, %arg8: memref<84x10xbf16, #tpu.memory_space<vmem>>, %arg9: memref<1x10xf32, #tpu.memory_space<vmem>>, %arg10: memref<16x10xf32, #tpu.memory_space<vmem>>) attributes {dimension_semantics = [#tpu.dimension_semantics<parallel>], iteration_bounds = array<i64: 1>, scalar_prefetch = 0 : i64, scratch_operands = 0 : i64, tpu.core_type = #tpu.core_type<tc>, window_params = [{transform_indices = @transform_0, window_bounds = array<i64: 4, 25, 16, 150>}, {pipeline_mode = #tpu.pipeline_mode<synchronous>, transform_indices = @transform_1, window_bounds = array<i64: 150, 16>}, {pipeline_mode = #tpu.pipeline_mode<synchronous>, transform_indices = @transform_2, window_bounds = array<i64: 1, 16>}, {pipeline_mode = #tpu.pipeline_mode<synchronous>, transform_indices = @transform_3, window_bounds = array<i64: 400, 120>}, {pipeline_mode = #tpu.pipeline_mode<synchronous>, transform_indices = @transform_4, window_bounds = array<i64: 1, 120>}, {pipeline_mode = #tpu.pipeline_mode<synchronous>, transform_indices = @transform_5, window_bounds = array<i64: 120, 84>}, {pipeline_mode = #tpu.pipeline_mode<synchronous>, transform_indices = @transform_6, window_bounds = array<i64: 1, 84>}, {pipeline_mode = #tpu.pipeline_mode<synchronous>, transform_indices = @transform_7, window_bounds = array<i64: 84, 10>}, {pipeline_mode = #tpu.pipeline_mode<synchronous>, transform_indices = @transform_8, window_bounds = array<i64: 1, 10>}, {transform_indices = @transform_9, window_bounds = array<i64: 16, 10>}]} {
    %c0 = arith.constant 0 : index
    %c0_0 = arith.constant 0 : index
    %c0_1 = arith.constant 0 : index
    %c0_2 = arith.constant 0 : index
    %0 = vector.load %arg1[%c0, %c0_0, %c0_1, %c0_2] : memref<4x25x16x150xbf16, #tpu.memory_space<vmem>>, vector<4x25x16x150xbf16>
    %1 = vector.shape_cast %0 : vector<4x25x16x150xbf16> to vector<1600x150xbf16>
    %c0_3 = arith.constant 0 : index
    %c0_4 = arith.constant 0 : index
    %2 = vector.load %arg2[%c0_3, %c0_4] : memref<150x16xbf16, #tpu.memory_space<vmem>>, vector<150x16xbf16>
    %cst = arith.constant dense<0.000000e+00> : vector<1600x16xf32>
    %3 = tpu.matmul %1, %2, %cst {dimension_numbers = #tpu.dot_dimension_numbers<[1], [0], [0], [1], [0, 0, 1, 1], [], []>} : vector<1600x150xbf16>, vector<150x16xbf16>, vector<1600x16xf32> -> vector<1600x16xf32>
    %4 = vector.extract_strided_slice %3 {offsets = [0, 0], sizes = [400, 16], strides = [1, 1]} : vector<1600x16xf32> to vector<400x16xf32>
    %5 = vector.extract_strided_slice %3 {offsets = [400, 0], sizes = [400, 16], strides = [1, 1]} : vector<1600x16xf32> to vector<400x16xf32>
    %6 = arith.maximumf %4, %5 : vector<400x16xf32>
    %7 = vector.extract_strided_slice %3 {offsets = [800, 0], sizes = [400, 16], strides = [1, 1]} : vector<1600x16xf32> to vector<400x16xf32>
    %8 = vector.extract_strided_slice %3 {offsets = [1200, 0], sizes = [400, 16], strides = [1, 1]} : vector<1600x16xf32> to vector<400x16xf32>
    %9 = arith.maximumf %7, %8 : vector<400x16xf32>
    %10 = arith.maximumf %6, %9 : vector<400x16xf32>
    %c0_5 = arith.constant 0 : index
    %c0_6 = arith.constant 0 : index
    %11 = vector.load %arg3[%c0_5, %c0_6] : memref<1x16xf32, #tpu.memory_space<vmem>>, vector<1x16xf32>
    %12 = vector.broadcast %11 : vector<1x16xf32> to vector<400x16xf32>
    %13 = arith.addf %10, %12 : vector<400x16xf32>
    %cst_7 = arith.constant 0.000000e+00 : f32
    %14 = vector.broadcast %cst_7 : f32 to vector<400x16xf32>
    %15 = arith.maximumf %13, %14 : vector<400x16xf32>
    %16 = arith.truncf %15 : vector<400x16xf32> to vector<400x16xbf16>
    %c0_8 = arith.constant 0 : index
    %c0_9 = arith.constant 0 : index
    %17 = vector.load %arg4[%c0_8, %c0_9] : memref<400x120xbf16, #tpu.memory_space<vmem>>, vector<400x120xbf16>
    %cst_10 = arith.constant 0.000000e+00 : f32
    %18 = vector.broadcast %cst_10 : f32 to vector<16x120xf32>
    %19 = vector.extract_strided_slice %16 {offsets = [0, 0], sizes = [16, 16], strides = [1, 1]} : vector<400x16xbf16> to vector<16x16xbf16>
    %20 = vector.extract_strided_slice %17 {offsets = [0, 0], sizes = [16, 120], strides = [1, 1]} : vector<400x120xbf16> to vector<16x120xbf16>
    %cst_11 = arith.constant dense<0.000000e+00> : vector<16x120xf32>
    %21 = tpu.matmul %19, %20, %cst_11 {dimension_numbers = #tpu.dot_dimension_numbers<[1], [0], [0], [1], [0, 0, 1, 1], [], []>} : vector<16x16xbf16>, vector<16x120xbf16>, vector<16x120xf32> -> vector<16x120xf32>
    %22 = arith.addf %18, %21 : vector<16x120xf32>
    %23 = vector.extract_strided_slice %16 {offsets = [16, 0], sizes = [16, 16], strides = [1, 1]} : vector<400x16xbf16> to vector<16x16xbf16>
    %24 = vector.extract_strided_slice %17 {offsets = [16, 0], sizes = [16, 120], strides = [1, 1]} : vector<400x120xbf16> to vector<16x120xbf16>
    %cst_12 = arith.constant dense<0.000000e+00> : vector<16x120xf32>
    %25 = tpu.matmul %23, %24, %cst_12 {dimension_numbers = #tpu.dot_dimension_numbers<[1], [0], [0], [1], [0, 0, 1, 1], [], []>} : vector<16x16xbf16>, vector<16x120xbf16>, vector<16x120xf32> -> vector<16x120xf32>
    %26 = arith.addf %22, %25 : vector<16x120xf32>
    %27 = vector.extract_strided_slice %16 {offsets = [32, 0], sizes = [16, 16], strides = [1, 1]} : vector<400x16xbf16> to vector<16x16xbf16>
    %28 = vector.extract_strided_slice %17 {offsets = [32, 0], sizes = [16, 120], strides = [1, 1]} : vector<400x120xbf16> to vector<16x120xbf16>
    %cst_13 = arith.constant dense<0.000000e+00> : vector<16x120xf32>
    %29 = tpu.matmul %27, %28, %cst_13 {dimension_numbers = #tpu.dot_dimension_numbers<[1], [0], [0], [1], [0, 0, 1, 1], [], []>} : vector<16x16xbf16>, vector<16x120xbf16>, vector<16x120xf32> -> vector<16x120xf32>
    %30 = arith.addf %26, %29 : vector<16x120xf32>
    %31 = vector.extract_strided_slice %16 {offsets = [48, 0], sizes = [16, 16], strides = [1, 1]} : vector<400x16xbf16> to vector<16x16xbf16>
    %32 = vector.extract_strided_slice %17 {offsets = [48, 0], sizes = [16, 120], strides = [1, 1]} : vector<400x120xbf16> to vector<16x120xbf16>
    %cst_14 = arith.constant dense<0.000000e+00> : vector<16x120xf32>
    %33 = tpu.matmul %31, %32, %cst_14 {dimension_numbers = #tpu.dot_dimension_numbers<[1], [0], [0], [1], [0, 0, 1, 1], [], []>} : vector<16x16xbf16>, vector<16x120xbf16>, vector<16x120xf32> -> vector<16x120xf32>
    %34 = arith.addf %30, %33 : vector<16x120xf32>
    %35 = vector.extract_strided_slice %16 {offsets = [64, 0], sizes = [16, 16], strides = [1, 1]} : vector<400x16xbf16> to vector<16x16xbf16>
    %36 = vector.extract_strided_slice %17 {offsets = [64, 0], sizes = [16, 120], strides = [1, 1]} : vector<400x120xbf16> to vector<16x120xbf16>
    %cst_15 = arith.constant dense<0.000000e+00> : vector<16x120xf32>
    %37 = tpu.matmul %35, %36, %cst_15 {dimension_numbers = #tpu.dot_dimension_numbers<[1], [0], [0], [1], [0, 0, 1, 1], [], []>} : vector<16x16xbf16>, vector<16x120xbf16>, vector<16x120xf32> -> vector<16x120xf32>
    %38 = arith.addf %34, %37 : vector<16x120xf32>
    %39 = vector.extract_strided_slice %16 {offsets = [80, 0], sizes = [16, 16], strides = [1, 1]} : vector<400x16xbf16> to vector<16x16xbf16>
    %40 = vector.extract_strided_slice %17 {offsets = [80, 0], sizes = [16, 120], strides = [1, 1]} : vector<400x120xbf16> to vector<16x120xbf16>
    %cst_16 = arith.constant dense<0.000000e+00> : vector<16x120xf32>
    %41 = tpu.matmul %39, %40, %cst_16 {dimension_numbers = #tpu.dot_dimension_numbers<[1], [0], [0], [1], [0, 0, 1, 1], [], []>} : vector<16x16xbf16>, vector<16x120xbf16>, vector<16x120xf32> -> vector<16x120xf32>
    %42 = arith.addf %38, %41 : vector<16x120xf32>
    %43 = vector.extract_strided_slice %16 {offsets = [96, 0], sizes = [16, 16], strides = [1, 1]} : vector<400x16xbf16> to vector<16x16xbf16>
    %44 = vector.extract_strided_slice %17 {offsets = [96, 0], sizes = [16, 120], strides = [1, 1]} : vector<400x120xbf16> to vector<16x120xbf16>
    %cst_17 = arith.constant dense<0.000000e+00> : vector<16x120xf32>
    %45 = tpu.matmul %43, %44, %cst_17 {dimension_numbers = #tpu.dot_dimension_numbers<[1], [0], [0], [1], [0, 0, 1, 1], [], []>} : vector<16x16xbf16>, vector<16x120xbf16>, vector<16x120xf32> -> vector<16x120xf32>
    %46 = arith.addf %42, %45 : vector<16x120xf32>
    %47 = vector.extract_strided_slice %16 {offsets = [112, 0], sizes = [16, 16], strides = [1, 1]} : vector<400x16xbf16> to vector<16x16xbf16>
    %48 = vector.extract_strided_slice %17 {offsets = [112, 0], sizes = [16, 120], strides = [1, 1]} : vector<400x120xbf16> to vector<16x120xbf16>
    %cst_18 = arith.constant dense<0.000000e+00> : vector<16x120xf32>
    %49 = tpu.matmul %47, %48, %cst_18 {dimension_numbers = #tpu.dot_dimension_numbers<[1], [0], [0], [1], [0, 0, 1, 1], [], []>} : vector<16x16xbf16>, vector<16x120xbf16>, vector<16x120xf32> -> vector<16x120xf32>
    %50 = arith.addf %46, %49 : vector<16x120xf32>
    %51 = vector.extract_strided_slice %16 {offsets = [128, 0], sizes = [16, 16], strides = [1, 1]} : vector<400x16xbf16> to vector<16x16xbf16>
    %52 = vector.extract_strided_slice %17 {offsets = [128, 0], sizes = [16, 120], strides = [1, 1]} : vector<400x120xbf16> to vector<16x120xbf16>
    %cst_19 = arith.constant dense<0.000000e+00> : vector<16x120xf32>
    %53 = tpu.matmul %51, %52, %cst_19 {dimension_numbers = #tpu.dot_dimension_numbers<[1], [0], [0], [1], [0, 0, 1, 1], [], []>} : vector<16x16xbf16>, vector<16x120xbf16>, vector<16x120xf32> -> vector<16x120xf32>
    %54 = arith.addf %50, %53 : vector<16x120xf32>
    %55 = vector.extract_strided_slice %16 {offsets = [144, 0], sizes = [16, 16], strides = [1, 1]} : vector<400x16xbf16> to vector<16x16xbf16>
    %56 = vector.extract_strided_slice %17 {offsets = [144, 0], sizes = [16, 120], strides = [1, 1]} : vector<400x120xbf16> to vector<16x120xbf16>
    %cst_20 = arith.constant dense<0.000000e+00> : vector<16x120xf32>
    %57 = tpu.matmul %55, %56, %cst_20 {dimension_numbers = #tpu.dot_dimension_numbers<[1], [0], [0], [1], [0, 0, 1, 1], [], []>} : vector<16x16xbf16>, vector<16x120xbf16>, vector<16x120xf32> -> vector<16x120xf32>
    %58 = arith.addf %54, %57 : vector<16x120xf32>
    %59 = vector.extract_strided_slice %16 {offsets = [160, 0], sizes = [16, 16], strides = [1, 1]} : vector<400x16xbf16> to vector<16x16xbf16>
    %60 = vector.extract_strided_slice %17 {offsets = [160, 0], sizes = [16, 120], strides = [1, 1]} : vector<400x120xbf16> to vector<16x120xbf16>
    %cst_21 = arith.constant dense<0.000000e+00> : vector<16x120xf32>
    %61 = tpu.matmul %59, %60, %cst_21 {dimension_numbers = #tpu.dot_dimension_numbers<[1], [0], [0], [1], [0, 0, 1, 1], [], []>} : vector<16x16xbf16>, vector<16x120xbf16>, vector<16x120xf32> -> vector<16x120xf32>
    %62 = arith.addf %58, %61 : vector<16x120xf32>
    %63 = vector.extract_strided_slice %16 {offsets = [176, 0], sizes = [16, 16], strides = [1, 1]} : vector<400x16xbf16> to vector<16x16xbf16>
    %64 = vector.extract_strided_slice %17 {offsets = [176, 0], sizes = [16, 120], strides = [1, 1]} : vector<400x120xbf16> to vector<16x120xbf16>
    %cst_22 = arith.constant dense<0.000000e+00> : vector<16x120xf32>
    %65 = tpu.matmul %63, %64, %cst_22 {dimension_numbers = #tpu.dot_dimension_numbers<[1], [0], [0], [1], [0, 0, 1, 1], [], []>} : vector<16x16xbf16>, vector<16x120xbf16>, vector<16x120xf32> -> vector<16x120xf32>
    %66 = arith.addf %62, %65 : vector<16x120xf32>
    %67 = vector.extract_strided_slice %16 {offsets = [192, 0], sizes = [16, 16], strides = [1, 1]} : vector<400x16xbf16> to vector<16x16xbf16>
    %68 = vector.extract_strided_slice %17 {offsets = [192, 0], sizes = [16, 120], strides = [1, 1]} : vector<400x120xbf16> to vector<16x120xbf16>
    %cst_23 = arith.constant dense<0.000000e+00> : vector<16x120xf32>
    %69 = tpu.matmul %67, %68, %cst_23 {dimension_numbers = #tpu.dot_dimension_numbers<[1], [0], [0], [1], [0, 0, 1, 1], [], []>} : vector<16x16xbf16>, vector<16x120xbf16>, vector<16x120xf32> -> vector<16x120xf32>
    %70 = arith.addf %66, %69 : vector<16x120xf32>
    %71 = vector.extract_strided_slice %16 {offsets = [208, 0], sizes = [16, 16], strides = [1, 1]} : vector<400x16xbf16> to vector<16x16xbf16>
    %72 = vector.extract_strided_slice %17 {offsets = [208, 0], sizes = [16, 120], strides = [1, 1]} : vector<400x120xbf16> to vector<16x120xbf16>
    %cst_24 = arith.constant dense<0.000000e+00> : vector<16x120xf32>
    %73 = tpu.matmul %71, %72, %cst_24 {dimension_numbers = #tpu.dot_dimension_numbers<[1], [0], [0], [1], [0, 0, 1, 1], [], []>} : vector<16x16xbf16>, vector<16x120xbf16>, vector<16x120xf32> -> vector<16x120xf32>
    %74 = arith.addf %70, %73 : vector<16x120xf32>
    %75 = vector.extract_strided_slice %16 {offsets = [224, 0], sizes = [16, 16], strides = [1, 1]} : vector<400x16xbf16> to vector<16x16xbf16>
    %76 = vector.extract_strided_slice %17 {offsets = [224, 0], sizes = [16, 120], strides = [1, 1]} : vector<400x120xbf16> to vector<16x120xbf16>
    %cst_25 = arith.constant dense<0.000000e+00> : vector<16x120xf32>
    %77 = tpu.matmul %75, %76, %cst_25 {dimension_numbers = #tpu.dot_dimension_numbers<[1], [0], [0], [1], [0, 0, 1, 1], [], []>} : vector<16x16xbf16>, vector<16x120xbf16>, vector<16x120xf32> -> vector<16x120xf32>
    %78 = arith.addf %74, %77 : vector<16x120xf32>
    %79 = vector.extract_strided_slice %16 {offsets = [240, 0], sizes = [16, 16], strides = [1, 1]} : vector<400x16xbf16> to vector<16x16xbf16>
    %80 = vector.extract_strided_slice %17 {offsets = [240, 0], sizes = [16, 120], strides = [1, 1]} : vector<400x120xbf16> to vector<16x120xbf16>
    %cst_26 = arith.constant dense<0.000000e+00> : vector<16x120xf32>
    %81 = tpu.matmul %79, %80, %cst_26 {dimension_numbers = #tpu.dot_dimension_numbers<[1], [0], [0], [1], [0, 0, 1, 1], [], []>} : vector<16x16xbf16>, vector<16x120xbf16>, vector<16x120xf32> -> vector<16x120xf32>
    %82 = arith.addf %78, %81 : vector<16x120xf32>
    %83 = vector.extract_strided_slice %16 {offsets = [256, 0], sizes = [16, 16], strides = [1, 1]} : vector<400x16xbf16> to vector<16x16xbf16>
    %84 = vector.extract_strided_slice %17 {offsets = [256, 0], sizes = [16, 120], strides = [1, 1]} : vector<400x120xbf16> to vector<16x120xbf16>
    %cst_27 = arith.constant dense<0.000000e+00> : vector<16x120xf32>
    %85 = tpu.matmul %83, %84, %cst_27 {dimension_numbers = #tpu.dot_dimension_numbers<[1], [0], [0], [1], [0, 0, 1, 1], [], []>} : vector<16x16xbf16>, vector<16x120xbf16>, vector<16x120xf32> -> vector<16x120xf32>
    %86 = arith.addf %82, %85 : vector<16x120xf32>
    %87 = vector.extract_strided_slice %16 {offsets = [272, 0], sizes = [16, 16], strides = [1, 1]} : vector<400x16xbf16> to vector<16x16xbf16>
    %88 = vector.extract_strided_slice %17 {offsets = [272, 0], sizes = [16, 120], strides = [1, 1]} : vector<400x120xbf16> to vector<16x120xbf16>
    %cst_28 = arith.constant dense<0.000000e+00> : vector<16x120xf32>
    %89 = tpu.matmul %87, %88, %cst_28 {dimension_numbers = #tpu.dot_dimension_numbers<[1], [0], [0], [1], [0, 0, 1, 1], [], []>} : vector<16x16xbf16>, vector<16x120xbf16>, vector<16x120xf32> -> vector<16x120xf32>
    %90 = arith.addf %86, %89 : vector<16x120xf32>
    %91 = vector.extract_strided_slice %16 {offsets = [288, 0], sizes = [16, 16], strides = [1, 1]} : vector<400x16xbf16> to vector<16x16xbf16>
    %92 = vector.extract_strided_slice %17 {offsets = [288, 0], sizes = [16, 120], strides = [1, 1]} : vector<400x120xbf16> to vector<16x120xbf16>
    %cst_29 = arith.constant dense<0.000000e+00> : vector<16x120xf32>
    %93 = tpu.matmul %91, %92, %cst_29 {dimension_numbers = #tpu.dot_dimension_numbers<[1], [0], [0], [1], [0, 0, 1, 1], [], []>} : vector<16x16xbf16>, vector<16x120xbf16>, vector<16x120xf32> -> vector<16x120xf32>
    %94 = arith.addf %90, %93 : vector<16x120xf32>
    %95 = vector.extract_strided_slice %16 {offsets = [304, 0], sizes = [16, 16], strides = [1, 1]} : vector<400x16xbf16> to vector<16x16xbf16>
    %96 = vector.extract_strided_slice %17 {offsets = [304, 0], sizes = [16, 120], strides = [1, 1]} : vector<400x120xbf16> to vector<16x120xbf16>
    %cst_30 = arith.constant dense<0.000000e+00> : vector<16x120xf32>
    %97 = tpu.matmul %95, %96, %cst_30 {dimension_numbers = #tpu.dot_dimension_numbers<[1], [0], [0], [1], [0, 0, 1, 1], [], []>} : vector<16x16xbf16>, vector<16x120xbf16>, vector<16x120xf32> -> vector<16x120xf32>
    %98 = arith.addf %94, %97 : vector<16x120xf32>
    %99 = vector.extract_strided_slice %16 {offsets = [320, 0], sizes = [16, 16], strides = [1, 1]} : vector<400x16xbf16> to vector<16x16xbf16>
    %100 = vector.extract_strided_slice %17 {offsets = [320, 0], sizes = [16, 120], strides = [1, 1]} : vector<400x120xbf16> to vector<16x120xbf16>
    %cst_31 = arith.constant dense<0.000000e+00> : vector<16x120xf32>
    %101 = tpu.matmul %99, %100, %cst_31 {dimension_numbers = #tpu.dot_dimension_numbers<[1], [0], [0], [1], [0, 0, 1, 1], [], []>} : vector<16x16xbf16>, vector<16x120xbf16>, vector<16x120xf32> -> vector<16x120xf32>
    %102 = arith.addf %98, %101 : vector<16x120xf32>
    %103 = vector.extract_strided_slice %16 {offsets = [336, 0], sizes = [16, 16], strides = [1, 1]} : vector<400x16xbf16> to vector<16x16xbf16>
    %104 = vector.extract_strided_slice %17 {offsets = [336, 0], sizes = [16, 120], strides = [1, 1]} : vector<400x120xbf16> to vector<16x120xbf16>
    %cst_32 = arith.constant dense<0.000000e+00> : vector<16x120xf32>
    %105 = tpu.matmul %103, %104, %cst_32 {dimension_numbers = #tpu.dot_dimension_numbers<[1], [0], [0], [1], [0, 0, 1, 1], [], []>} : vector<16x16xbf16>, vector<16x120xbf16>, vector<16x120xf32> -> vector<16x120xf32>
    %106 = arith.addf %102, %105 : vector<16x120xf32>
    %107 = vector.extract_strided_slice %16 {offsets = [352, 0], sizes = [16, 16], strides = [1, 1]} : vector<400x16xbf16> to vector<16x16xbf16>
    %108 = vector.extract_strided_slice %17 {offsets = [352, 0], sizes = [16, 120], strides = [1, 1]} : vector<400x120xbf16> to vector<16x120xbf16>
    %cst_33 = arith.constant dense<0.000000e+00> : vector<16x120xf32>
    %109 = tpu.matmul %107, %108, %cst_33 {dimension_numbers = #tpu.dot_dimension_numbers<[1], [0], [0], [1], [0, 0, 1, 1], [], []>} : vector<16x16xbf16>, vector<16x120xbf16>, vector<16x120xf32> -> vector<16x120xf32>
    %110 = arith.addf %106, %109 : vector<16x120xf32>
    %111 = vector.extract_strided_slice %16 {offsets = [368, 0], sizes = [16, 16], strides = [1, 1]} : vector<400x16xbf16> to vector<16x16xbf16>
    %112 = vector.extract_strided_slice %17 {offsets = [368, 0], sizes = [16, 120], strides = [1, 1]} : vector<400x120xbf16> to vector<16x120xbf16>
    %cst_34 = arith.constant dense<0.000000e+00> : vector<16x120xf32>
    %113 = tpu.matmul %111, %112, %cst_34 {dimension_numbers = #tpu.dot_dimension_numbers<[1], [0], [0], [1], [0, 0, 1, 1], [], []>} : vector<16x16xbf16>, vector<16x120xbf16>, vector<16x120xf32> -> vector<16x120xf32>
    %114 = arith.addf %110, %113 : vector<16x120xf32>
    %115 = vector.extract_strided_slice %16 {offsets = [384, 0], sizes = [16, 16], strides = [1, 1]} : vector<400x16xbf16> to vector<16x16xbf16>
    %116 = vector.extract_strided_slice %17 {offsets = [384, 0], sizes = [16, 120], strides = [1, 1]} : vector<400x120xbf16> to vector<16x120xbf16>
    %cst_35 = arith.constant dense<0.000000e+00> : vector<16x120xf32>
    %117 = tpu.matmul %115, %116, %cst_35 {dimension_numbers = #tpu.dot_dimension_numbers<[1], [0], [0], [1], [0, 0, 1, 1], [], []>} : vector<16x16xbf16>, vector<16x120xbf16>, vector<16x120xf32> -> vector<16x120xf32>
    %118 = arith.addf %114, %117 : vector<16x120xf32>
    %c0_36 = arith.constant 0 : index
    %c0_37 = arith.constant 0 : index
    %119 = vector.load %arg5[%c0_36, %c0_37] : memref<1x120xf32, #tpu.memory_space<vmem>>, vector<1x120xf32>
    %120 = vector.broadcast %119 : vector<1x120xf32> to vector<16x120xf32>
    %121 = arith.addf %118, %120 : vector<16x120xf32>
    %cst_38 = arith.constant 0.000000e+00 : f32
    %122 = vector.broadcast %cst_38 : f32 to vector<16x120xf32>
    %123 = arith.maximumf %121, %122 : vector<16x120xf32>
    %124 = arith.truncf %123 : vector<16x120xf32> to vector<16x120xbf16>
    %c0_39 = arith.constant 0 : index
    %c0_40 = arith.constant 0 : index
    %125 = vector.load %arg6[%c0_39, %c0_40] : memref<120x84xbf16, #tpu.memory_space<vmem>>, vector<120x84xbf16>
    %cst_41 = arith.constant dense<0.000000e+00> : vector<16x84xf32>
    %126 = tpu.matmul %124, %125, %cst_41 {dimension_numbers = #tpu.dot_dimension_numbers<[1], [0], [0], [1], [0, 0, 1, 1], [], []>} : vector<16x120xbf16>, vector<120x84xbf16>, vector<16x84xf32> -> vector<16x84xf32>
    %c0_42 = arith.constant 0 : index
    %c0_43 = arith.constant 0 : index
    %127 = vector.load %arg7[%c0_42, %c0_43] : memref<1x84xf32, #tpu.memory_space<vmem>>, vector<1x84xf32>
    %128 = vector.broadcast %127 : vector<1x84xf32> to vector<16x84xf32>
    %129 = arith.addf %126, %128 : vector<16x84xf32>
    %cst_44 = arith.constant 0.000000e+00 : f32
    %130 = vector.broadcast %cst_44 : f32 to vector<16x84xf32>
    %131 = arith.maximumf %129, %130 : vector<16x84xf32>
    %132 = arith.truncf %131 : vector<16x84xf32> to vector<16x84xbf16>
    %c0_45 = arith.constant 0 : index
    %c0_46 = arith.constant 0 : index
    %133 = vector.load %arg8[%c0_45, %c0_46] : memref<84x10xbf16, #tpu.memory_space<vmem>>, vector<84x10xbf16>
    %cst_47 = arith.constant dense<0.000000e+00> : vector<16x10xf32>
    %134 = tpu.matmul %132, %133, %cst_47 {dimension_numbers = #tpu.dot_dimension_numbers<[1], [0], [0], [1], [0, 0, 1, 1], [], []>} : vector<16x84xbf16>, vector<84x10xbf16>, vector<16x10xf32> -> vector<16x10xf32>
    %c0_48 = arith.constant 0 : index
    %c0_49 = arith.constant 0 : index
    %135 = vector.load %arg9[%c0_48, %c0_49] : memref<1x10xf32, #tpu.memory_space<vmem>>, vector<1x10xf32>
    %136 = vector.broadcast %135 : vector<1x10xf32> to vector<16x10xf32>
    %137 = arith.addf %134, %136 : vector<16x10xf32>
    %c0_50 = arith.constant 0 : index
    %c0_51 = arith.constant 0 : index
    %138 = vector.load %arg10[%c0_50, %c0_51] : memref<16x10xf32, #tpu.memory_space<vmem>>, vector<16x10xf32>
    tpu.vector_store %arg10[%c0_50, %c0_51], %137 {strides = array<i32>} : memref<16x10xf32, #tpu.memory_space<vmem>>, vector<16x10xf32>,
    return
  }
  func.func @transform_0(%arg0: i32) -> (i32, i32, i32, i32) {
    %c0_i32 = arith.constant 0 : i32
    %c0_i32_0 = arith.constant 0 : i32
    %c0_i32_1 = arith.constant 0 : i32
    %c0_i32_2 = arith.constant 0 : i32
    return %c0_i32, %c0_i32_0, %arg0, %c0_i32_1 : i32, i32, i32, i32
  }
  func.func @transform_1(%arg0: i32) -> (i32, i32) {
    %c0_i32 = arith.constant 0 : i32
    %c0_i32_0 = arith.constant 0 : i32
    %c0_i32_1 = arith.constant 0 : i32
    return %c0_i32, %c0_i32_0 : i32, i32
  }
  func.func @transform_2(%arg0: i32) -> (i32, i32) {
    %c0_i32 = arith.constant 0 : i32
    %c0_i32_0 = arith.constant 0 : i32
    %c0_i32_1 = arith.constant 0 : i32
    return %c0_i32, %c0_i32_0 : i32, i32
  }
  func.func @transform_3(%arg0: i32) -> (i32, i32) {
    %c0_i32 = arith.constant 0 : i32
    %c0_i32_0 = arith.constant 0 : i32
    %c0_i32_1 = arith.constant 0 : i32
    return %c0_i32, %c0_i32_0 : i32, i32
  }
  func.func @transform_4(%arg0: i32) -> (i32, i32) {
    %c0_i32 = arith.constant 0 : i32
    %c0_i32_0 = arith.constant 0 : i32
    %c0_i32_1 = arith.constant 0 : i32
    return %c0_i32, %c0_i32_0 : i32, i32
  }
  func.func @transform_5(%arg0: i32) -> (i32, i32) {
    %c0_i32 = arith.constant 0 : i32
    %c0_i32_0 = arith.constant 0 : i32
    %c0_i32_1 = arith.constant 0 : i32
    return %c0_i32, %c0_i32_0 : i32, i32
  }
  func.func @transform_6(%arg0: i32) -> (i32, i32) {
    %c0_i32 = arith.constant 0 : i32
    %c0_i32_0 = arith.constant 0 : i32
    %c0_i32_1 = arith.constant 0 : i32
    return %c0_i32, %c0_i32_0 : i32, i32
  }
  func.func @transform_7(%arg0: i32) -> (i32, i32) {
    %c0_i32 = arith.constant 0 : i32
    %c0_i32_0 = arith.constant 0 : i32
    %c0_i32_1 = arith.constant 0 : i32
    return %c0_i32, %c0_i32_0 : i32, i32
  }
  func.func @transform_8(%arg0: i32) -> (i32, i32) {
    %c0_i32 = arith.constant 0 : i32
    %c0_i32_0 = arith.constant 0 : i32
    %c0_i32_1 = arith.constant 0 : i32
    return %c0_i32, %c0_i32_0 : i32, i32
  }
  func.func @transform_9(%arg0: i32) -> (i32, i32) {
    %c0_i32 = arith.constant 0 : i32
    %c0_i32_0 = arith.constant 0 : i32
    return %arg0, %c0_i32 : i32, i32
  }
}

</mosaic_0001>

<llo_original>
// kernel: cnn_cifar_forward.2
$region0: #{cnn_cifar_forward.2}
  #allocation0 [shape = 'u32[]', space=smem, size = 0x4, offset = 0x4, fixed_abs, tag = 'smem constant byte address 0x4 - core index']
  #allocation1 [shape = 'u32[144,128]{1,0:T(1,128)}', space=vmem, size = 0x12000, scoped, tag = 'internal scratch']
  %s0 = inlined_call_operand.vmem [shape: bf16[4,400,75], index: 0, kind: input, shape index: {}]
  %s1 = inlined_call_operand.vmem [shape: bf16[75,6], index: 1, kind: input, shape index: {}]
  %s2 = inlined_call_operand.vmem [shape: f32[1,6], index: 2, kind: input, shape index: {}]
  %s3 = inlined_call_operand.vmem [shape: bf16[400,6], index: 3, kind: output, shape index: {}]
  %s4 = sld [smem:[#allocation0]]
  $region22: #{cnn_cifar_forward.2} parent=0
    _
  %s6 = ssub.s32 1, %s4
  %s7 = scalar_select 0, %s6, %s4
  // Predicated region
  $region2: #{cnn_cifar_forward.2} parent=0 // pred_check
    _
  $region3: #{cnn_cifar_forward.2} parent=0 // pred_check_branch
    %9 = sbr.rel (0) target = $region5
  $region4: #{cnn_cifar_forward.2} parent=0 // pred_region
    _
  $region5: #{cnn_cifar_forward.2} parent=0 // pred_fallthru
    _
  // Predicated region
  $region6: #{cnn_cifar_forward.2} parent=0 // pred_check
    _
  $region7: #{cnn_cifar_forward.2} parent=0 // pred_check_branch
    %11 = sbr.rel (0) target = $region9
  $region8: #{cnn_cifar_forward.2} parent=0 // pred_region
    _
  $region9: #{cnn_cifar_forward.2} parent=0 // pred_fallthru
    _
  // Predicated region
  $region10: #{cnn_cifar_forward.2} parent=0 // pred_check
    _
  $region11: #{cnn_cifar_forward.2} parent=0 // pred_check_branch
    %13 = sbr.rel (0) target = $region13
  $region12: #{cnn_cifar_forward.2} parent=0 // pred_region
    _
  $region13: #{cnn_cifar_forward.2} parent=0 // pred_fallthru
    _
  %v15 = vld [vmem:[%s0] sm:$0xf]
  %v16 = vld [vmem:[%s0 + $0x4] sm:$0xf]
  %v17 = vld [vmem:[%s0 + $0x8] sm:$0xf]
  %v18 = vld [vmem:[%s0 + $0xc] sm:$0xf]
  %v19 = vld [vmem:[%s0 + $0x10] sm:$0xf]
  %v20 = vld [vmem:[%s0 + $0x14] sm:$0xf]
  %v21 = vld [vmem:[%s0 + $0x18] sm:$0xf]
  %v22 = vld [vmem:[%s0 + $0x1c] sm:$0xf]
  %v23 = vld [vmem:[%s0 + $0x20] sm:$0xf]
  %v24 = vld [vmem:[%s0 + $0x24] sm:$0xf]
  %v25 = vld [vmem:[%s0 + $0x28] sm:$0xf]
  %v26 = vld [vmem:[%s0 + $0x2c] sm:$0xf]
  %v27 = vld [vmem:[%s0 + $0x30] sm:$0xf]
  %v28 = vld [vmem:[%s0 + $0x34] sm:$0xf]
  %v29 = vld [vmem:[%s0 + $0x38] sm:$0xf]
  %v30 = vld [vmem:[%s0 + $0x3c] sm:$0xf]
  %v31 = vld [vmem:[%s0 + $0x40] sm:$0xf]
  %v32 = vld [vmem:[%s0 + $0x44] sm:$0xf]
  %v33 = vld [vmem:[%s0 + $0x48] sm:$0xf]
  %v34 = vld [vmem:[%s0 + $0x4c] sm:$0xf]
  %v35 = vld [vmem:[%s0 + $0x50] sm:$0xf]
  %v36 = vld [vmem:[%s0 + $0x54] sm:$0xf]
  %v37 = vld [vmem:[%s0 + $0x58] sm:$0xf]
  %v38 = vld [vmem:[%s0 + $0x5c] sm:$0xf]
  %v39 = vld [vmem:[%s0 + $0x60] sm:$0xf]
  %v40 = vld [vmem:[%s0 + $0x64] sm:$0xf]
  %v41 = vld [vmem:[%s0 + $0x68] sm:$0xf]
  %v42 = vld [vmem:[%s0 + $0x6c] sm:$0xf]
  %v43 = vld [vmem:[%s0 + $0x70] sm:$0xf]
  %v44 = vld [vmem:[%s0 + $0x74] sm:$0xf]
  %v45 = vld [vmem:[%s0 + $0x78] sm:$0xf]
  %v46 = vld [vmem:[%s0 + $0x7c] sm:$0xf]
  %v47 = vld [vmem:[%s0 + $0x80] sm:$0xf]
  %v48 = vld [vmem:[%s0 + $0x84] sm:$0xf]
  %v49 = vld [vmem:[%s0 + $0x88] sm:$0xf]
  %v50 = vld [vmem:[%s0 + $0x8c] sm:$0xf]
  %v51 = vld [vmem:[%s0 + $0x90] sm:$0xf]
  %v52 = vld [vmem:[%s0 + $0x94] sm:$0xf]
  %v53 = vld [vmem:[%s0 + $0x98] sm:$0xf]
  %v54 = vld [vmem:[%s0 + $0x9c] sm:$0xf]
  %v55 = vld [vmem:[%s0 + $0xa0] sm:$0xf]
  %v56 = vld [vmem:[%s0 + $0xa4] sm:$0xf]
  %v57 = vld [vmem:[%s0 + $0xa8] sm:$0xf]
  %v58 = vld [vmem:[%s0 + $0xac] sm:$0xf]
  %v59 = vld [vmem:[%s0 + $0xb0] sm:$0xf]
  %v60 = vld [vmem:[%s0 + $0xb4] sm:$0xf]
  %v61 = vld [vmem:[%s0 + $0xb8] sm:$0xf]
  %v62 = vld [vmem:[%s0 + $0xbc] sm:$0xf]
  %v63 = vld [vmem:[%s0 + $0xc0] sm:$0xf]
  %v64 = vld [vmem:[%s0 + $0xc4] sm:$0xf]
  %v65 = vld [vmem:[%s0 + $0xc8] sm:$0xf]
  %v66 = vld [vmem:[%s0 + $0xcc] sm:$0xf]
  %v67 = vld [vmem:[%s0 + $0xd0] sm:$0xf]
  %v68 = vld [vmem:[%s0 + $0xd4] sm:$0xf]
  %v69 = vld [vmem:[%s0 + $0xd8] sm:$0xf]
  %v70 = vld [vmem:[%s0 + $0xdc] sm:$0xf]
  %v71 = vld [vmem:[%s0 + $0xe0] sm:$0xf]
  %v72 = vld [vmem:[%s0 + $0xe4] sm:$0xf]
  %v73 = vld [vmem:[%s0 + $0xe8] sm:$0xf]
  %v74 = vld [vmem:[%s0 + $0xec] sm:$0xf]
  %v75 = vld [vmem:[%s0 + $0xf0] sm:$0xf]
  %v76 = vld [vmem:[%s0 + $0xf4] sm:$0xf]
  %v77 = vld [vmem:[%s0 + $0xf8] sm:$0xf]
  %v78 = vld [vmem:[%s0 + $0xfc] sm:$0xf]
  %v79 = vld [vmem:[%s0 + $0x100] sm:$0xf]
  %v80 = vld [vmem:[%s0 + $0x104] sm:$0xf]
  %v81 = vld [vmem:[%s0 + $0x108] sm:$0xf]
  %v82 = vld [vmem:[%s0 + $0x10c] sm:$0xf]
  %v83 = vld [vmem:[%s0 + $0x110] sm:$0xf]
  %v84 = vld [vmem:[%s0 + $0x114] sm:$0xf]
  %v85 = vld [vmem:[%s0 + $0x118] sm:$0xf]
  %v86 = vld [vmem:[%s0 + $0x11c] sm:$0xf]
  %v87 = vld [vmem:[%s0 + $0x120] sm:$0xf]
  %v88 = vld [vmem:[%s0 + $0x124] sm:$0xf]
  %v89 = vld [vmem:[%s0 + $0x128] sm:$0xf]
  %v90 = vld [vmem:[%s0 + $0x12c] sm:$0xf]
  %v91 = vld [vmem:[%s0 + $0x130] sm:$0xf]
  %v92 = vld [vmem:[%s0 + $0x134] sm:$0xf]
  %v93 = vld [vmem:[%s0 + $0x138] sm:$0xf]
  %v94 = vld [vmem:[%s0 + $0x13c] sm:$0xf]
  %v95 = vld [vmem:[%s0 + $0x140] sm:$0xf]
  %v96 = vld [vmem:[%s0 + $0x144] sm:$0xf]
  %v97 = vld [vmem:[%s0 + $0x148] sm:$0xf]
  %v98 = vld [vmem:[%s0 + $0x14c] sm:$0xf]
  %v99 = vld [vmem:[%s0 + $0x150] sm:$0xf]
  %v100 = vld [vmem:[%s0 + $0x154] sm:$0xf]
  %v101 = vld [vmem:[%s0 + $0x158] sm:$0xf]
  %v102 = vld [vmem:[%s0 + $0x15c] sm:$0xf]
  %v103 = vld [vmem:[%s0 + $0x160] sm:$0xf]
  %v104 = vld [vmem:[%s0 + $0x164] sm:$0xf]
  %v105 = vld [vmem:[%s0 + $0x168] sm:$0xf]
  %v106 = vld [vmem:[%s0 + $0x16c] sm:$0xf]
  %v107 = vld [vmem:[%s0 + $0x170] sm:$0xf]
  %v108 = vld [vmem:[%s0 + $0x174] sm:$0xf]
  %v109 = vld [vmem:[%s0 + $0x178] sm:$0xf]
  %v110 = vld [vmem:[%s0 + $0x17c] sm:$0xf]
  %v111 = vld [vmem:[%s0 + $0x180] sm:$0xf]
  %v112 = vld [vmem:[%s0 + $0x184] sm:$0xf]
  %v113 = vld [vmem:[%s0 + $0x188] sm:$0xf]
  %v114 = vld [vmem:[%s0 + $0x18c] sm:$0xf]
  %v115 = vld [vmem:[%s0 + $0x190] sm:$0xf]
  %v116 = vld [vmem:[%s0 + $0x194] sm:$0xf]
  %v117 = vld [vmem:[%s0 + $0x198] sm:$0xf]
  %v118 = vld [vmem:[%s0 + $0x19c] sm:$0xf]
  %v119 = vld [vmem:[%s0 + $0x1a0] sm:$0xf]
  %v120 = vld [vmem:[%s0 + $0x1a4] sm:$0xf]
  %v121 = vld [vmem:[%s0 + $0x1a8] sm:$0xf]
  %v122 = vld [vmem:[%s0 + $0x1ac] sm:$0xf]
  %v123 = vld [vmem:[%s0 + $0x1b0] sm:$0xf]
  %v124 = vld [vmem:[%s0 + $0x1b4] sm:$0xf]
  %v125 = vld [vmem:[%s0 + $0x1b8] sm:$0xf]
  %v126 = vld [vmem:[%s0 + $0x1bc] sm:$0xf]
  %v127 = vld [vmem:[%s0 + $0x1c0] sm:$0xf]
  %v128 = vld [vmem:[%s0 + $0x1c4] sm:$0xf]
  %v129 = vld [vmem:[%s0 + $0x1c8] sm:$0xf]
  %v130 = vld [vmem:[%s0 + $0x1cc] sm:$0xf]
  %v131 = vld [vmem:[%s0 + $0x1d0] sm:$0xf]
  %v132 = vld [vmem:[%s0 + $0x1d4] sm:$0xf]
  %v133 = vld [vmem:[%s0 + $0x1d8] sm:$0xf]
  %v134 = vld [vmem:[%s0 + $0x1dc] sm:$0xf]
  %v135 = vld [vmem:[%s0 + $0x1e0] sm:$0xf]
  %v136 = vld [vmem:[%s0 + $0x1e4] sm:$0xf]
  %v137 = vld [vmem:[%s0 + $0x1e8] sm:$0xf]
  %v138 = vld [vmem:[%s0 + $0x1ec] sm:$0xf]
  %v139 = vld [vmem:[%s0 + $0x1f0] sm:$0xf]
  %v140 = vld [vmem:[%s0 + $0x1f4] sm:$0xf]
  %v141 = vld [vmem:[%s0 + $0x1f8] sm:$0xf]
  %v142 = vld [vmem:[%s0 + $0x1fc] sm:$0xf]
  %v143 = vld [vmem:[%s0 + $0x200] sm:$0xf]
  %v144 = vld [vmem:[%s0 + $0x204] sm:$0xf]
  %v145 = vld [vmem:[%s0 + $0x208] sm:$0xf]
  %v146 = vld [vmem:[%s0 + $0x20c] sm:$0xf]
  %v147 = vld [vmem:[%s0 + $0x210] sm:$0xf]
  %v148 = vld [vmem:[%s0 + $0x214] sm:$0xf]
  %v149 = vld [vmem:[%s0 + $0x218] sm:$0xf]
  %v150 = vld [vmem:[%s0 + $0x21c] sm:$0xf]
  %v151 = vld [vmem:[%s0 + $0x220] sm:$0xf]
  %v152 = vld [vmem:[%s0 + $0x224] sm:$0xf]
  %v153 = vld [vmem:[%s0 + $0x228] sm:$0xf]
  %v154 = vld [vmem:[%s0 + $0x22c] sm:$0xf]
  %v155 = vld [vmem:[%s0 + $0x230] sm:$0xf]
  %v156 = vld [vmem:[%s0 + $0x234] sm:$0xf]
  %v157 = vld [vmem:[%s0 + $0x238] sm:$0xf]
  %v158 = vld [vmem:[%s0 + $0x23c] sm:$0xf]
  %v159 = vld [vmem:[%s0 + $0x240] sm:$0xf]
  %v160 = vld [vmem:[%s0 + $0x244] sm:$0xf]
  %v161 = vld [vmem:[%s0 + $0x248] sm:$0xf]
  %v162 = vld [vmem:[%s0 + $0x24c] sm:$0xf]
  %v163 = vld [vmem:[%s0 + $0x250] sm:$0xf]
  %v164 = vld [vmem:[%s0 + $0x254] sm:$0xf]
  %v165 = vld [vmem:[%s0 + $0x258] sm:$0xf]
  %v166 = vld [vmem:[%s0 + $0x25c] sm:$0xf]
  %v167 = vld [vmem:[%s0 + $0x260] sm:$0xf]
  %v168 = vld [vmem:[%s0 + $0x264] sm:$0xf]
  %v169 = vld [vmem:[%s0 + $0x268] sm:$0xf]
  %v170 = vld [vmem:[%s0 + $0x26c] sm:$0xf]
  %v171 = vld [vmem:[%s0 + $0x270] sm:$0xf]
  %v172 = vld [vmem:[%s0 + $0x274] sm:$0xf]
  %v173 = vld [vmem:[%s0 + $0x278] sm:$0xf]
  %v174 = vld [vmem:[%s0 + $0x27c] sm:$0xf]
  %v175 = vld [vmem:[%s0 + $0x280] sm:$0xf]
  %v176 = vld [vmem:[%s0 + $0x284] sm:$0xf]
  %v177 = vld [vmem:[%s0 + $0x288] sm:$0xf]
  %v178 = vld [vmem:[%s0 + $0x28c] sm:$0xf]
  %v179 = vld [vmem:[%s0 + $0x290] sm:$0xf]
  %v180 = vld [vmem:[%s0 + $0x294] sm:$0xf]
  %v181 = vld [vmem:[%s0 + $0x298] sm:$0xf]
  %v182 = vld [vmem:[%s0 + $0x29c] sm:$0xf]
  %v183 = vld [vmem:[%s0 + $0x2a0] sm:$0xf]
  %v184 = vld [vmem:[%s0 + $0x2a4] sm:$0xf]
  %v185 = vld [vmem:[%s0 + $0x2a8] sm:$0xf]
  %v186 = vld [vmem:[%s0 + $0x2ac] sm:$0xf]
  %v187 = vld [vmem:[%s0 + $0x2b0] sm:$0xf]
  %v188 = vld [vmem:[%s0 + $0x2b4] sm:$0xf]
  %v189 = vld [vmem:[%s0 + $0x2b8] sm:$0xf]
  %v190 = vld [vmem:[%s0 + $0x2bc] sm:$0xf]
  %v191 = vld [vmem:[%s0 + $0x2c0] sm:$0xf]
  %v192 = vld [vmem:[%s0 + $0x2c4] sm:$0xf]
  %v193 = vld [vmem:[%s0 + $0x2c8] sm:$0xf]
  %v194 = vld [vmem:[%s0 + $0x2cc] sm:$0xf]
  %v195 = vld [vmem:[%s0 + $0x2d0] sm:$0xf]
  %v196 = vld [vmem:[%s0 + $0x2d4] sm:$0xf]
  %v197 = vld [vmem:[%s0 + $0x2d8] sm:$0xf]
  %v198 = vld [vmem:[%s0 + $0x2dc] sm:$0xf]
  %v199 = vld [vmem:[%s0 + $0x2e0] sm:$0xf]
  %v200 = vld [vmem:[%s0 + $0x2e4] sm:$0xf]
  %v201 = vld [vmem:[%s0 + $0x2e8] sm:$0xf]
  %v202 = vld [vmem:[%s0 + $0x2ec] sm:$0xf]
  %v203 = vld [vmem:[%s0 + $0x2f0] sm:$0xf]
  %v204 = vld [vmem:[%s0 + $0x2f4] sm:$0xf]
  %v205 = vld [vmem:[%s0 + $0x2f8] sm:$0xf]
  %v206 = vld [vmem:[%s0 + $0x2fc] sm:$0xf]
  %v207 = vld [vmem:[%s0 + $0x300] sm:$0xf]
  %v208 = vld [vmem:[%s0 + $0x304] sm:$0xf]
  %v209 = vld [vmem:[%s0 + $0x308] sm:$0xf]
  %v210 = vld [vmem:[%s0 + $0x30c] sm:$0xf]
  %v211 = vld [vmem:[%s0 + $0x310] sm:$0xf]
  %v212 = vld [vmem:[%s0 + $0x314] sm:$0xf]
  %v213 = vld [vmem:[%s0 + $0x318] sm:$0xf]
  %v214 = vld [vmem:[%s0 + $0x31c] sm:$0xf]
  %v215 = vld [vmem:[%s1] sm:$0xf]
  %v216 = vld [vmem:[%s1 + $0x4] sm:$0xf]
  %v217 = vld [vmem:[%s1 + $0x8] sm:$0xf]
  %v218 = vld [vmem:[%s1 + $0xc] sm:$0xf]
  %v219 = vld [vmem:[%s1 + $0x10] sm:$0xf]
  %v220 = vld [vmem:[%s1 + $0x14] sm:$0xf]
  %v221 = vld [vmem:[%s1 + $0x18] sm:$0xf]
  %v222 = vld [vmem:[%s1 + $0x1c] sm:$0xf]
  %v223 = vld [vmem:[%s1 + $0x20] sm:$0xf]
  %v224 = vld [vmem:[%s1 + $0x24] sm:$0x3]
  %v425 = vunpack.c.l.b16 %v15
  %v426 = vunpack.c.l.b16 %v16
  %v427 = vunpack.c.l.b16 %v17
  %v428 = vunpack.c.l.b16 %v18
  %v429 = vunpack.c.l.b16 %v19
  %v430 = vunpack.c.l.b16 %v20
  %v431 = vunpack.c.l.b16 %v21
  %v432 = vunpack.c.l.b16 %v22
  %v433 = vunpack.c.l.b16 %v23
  %v434 = vunpack.c.l.b16 %v24
  %v435 = vunpack.c.l.b16 %v25
  %v436 = vunpack.c.l.b16 %v26
  %v437 = vunpack.c.l.b16 %v27
  %v438 = vunpack.c.l.b16 %v28
  %v439 = vunpack.c.l.b16 %v29
  %v440 = vunpack.c.l.b16 %v30
  %v441 = vunpack.c.l.b16 %v31
  %v442 = vunpack.c.l.b16 %v32
  %v443 = vunpack.c.l.b16 %v33
  %v444 = vunpack.c.l.b16 %v34
  %v445 = vunpack.c.l.b16 %v35
  %v446 = vunpack.c.l.b16 %v36
  %v447 = vunpack.c.l.b16 %v37
  %v448 = vunpack.c.l.b16 %v38
  %v449 = vunpack.c.l.b16 %v39
  %v450 = vunpack.c.l.b16 %v40
  %v451 = vunpack.c.l.b16 %v41
  %v452 = vunpack.c.l.b16 %v42
  %v453 = vunpack.c.l.b16 %v43
  %v454 = vunpack.c.l.b16 %v44
  %v455 = vunpack.c.l.b16 %v45
  %v456 = vunpack.c.l.b16 %v46
  %v457 = vunpack.c.l.b16 %v47
  %v458 = vunpack.c.l.b16 %v48
  %v459 = vunpack.c.l.b16 %v49
  %v460 = vunpack.c.l.b16 %v50
  %v461 = vunpack.c.l.b16 %v51
  %v462 = vunpack.c.l.b16 %v52
  %v463 = vunpack.c.l.b16 %v53
  %v464 = vunpack.c.l.b16 %v54
  %v465 = vunpack.c.l.b16 %v55
  %v466 = vunpack.c.l.b16 %v56
  %v467 = vunpack.c.l.b16 %v57
  %v468 = vunpack.c.l.b16 %v58
  %v469 = vunpack.c.l.b16 %v59
  %v470 = vunpack.c.l.b16 %v60
  %v471 = vunpack.c.l.b16 %v61
  %v472 = vunpack.c.l.b16 %v62
  %v473 = vunpack.c.l.b16 %v63
  %v474 = vunpack.c.l.b16 %v64
  %v475 = vunpack.c.l.b16 %v65
  %v476 = vunpack.c.l.b16 %v66
  %v477 = vunpack.c.l.b16 %v67
  %v478 = vunpack.c.l.b16 %v68
  %v479 = vunpack.c.l.b16 %v69
  %v480 = vunpack.c.l.b16 %v70
  %v481 = vunpack.c.l.b16 %v71
  %v482 = vunpack.c.l.b16 %v72
  %v483 = vunpack.c.l.b16 %v73
  %v484 = vunpack.c.l.b16 %v74
  %v485 = vunpack.c.l.b16 %v75
  %v486 = vunpack.c.l.b16 %v76
  %v487 = vunpack.c.l.b16 %v77
  %v488 = vunpack.c.l.b16 %v78
  %v489 = vunpack.c.l.b16 %v79
  %v490 = vunpack.c.l.b16 %v80
  %v491 = vunpack.c.l.b16 %v81
  %v492 = vunpack.c.l.b16 %v82
  %v493 = vunpack.c.l.b16 %v83
  %v494 = vunpack.c.l.b16 %v84
  %v495 = vunpack.c.l.b16 %v85
  %v496 = vunpack.c.l.b16 %v86
  %v497 = vunpack.c.l.b16 %v87
  %v498 = vunpack.c.l.b16 %v88
  %v499 = vunpack.c.l.b16 %v89
  %v500 = vunpack.c.l.b16 %v90
  %v501 = vunpack.c.l.b16 %v91
  %v502 = vunpack.c.l.b16 %v92
  %v503 = vunpack.c.l.b16 %v93
  %v504 = vunpack.c.l.b16 %v94
  %v505 = vunpack.c.l.b16 %v95
  %v506 = vunpack.c.l.b16 %v96
  %v507 = vunpack.c.l.b16 %v97
  %v508 = vunpack.c.l.b16 %v98
  %v509 = vunpack.c.l.b16 %v99
  %v510 = vunpack.c.l.b16 %v100
  %v511 = vunpack.c.l.b16 %v101
  %v512 = vunpack.c.l.b16 %v102
  %v513 = vunpack.c.l.b16 %v103
  %v514 = vunpack.c.l.b16 %v104
  %v515 = vunpack.c.l.b16 %v105
  %v516 = vunpack.c.l.b16 %v106
  %v517 = vunpack.c.l.b16 %v107
  %v518 = vunpack.c.l.b16 %v108
  %v519 = vunpack.c.l.b16 %v109
  %v520 = vunpack.c.l.b16 %v110
  %v521 = vunpack.c.l.b16 %v111
  %v522 = vunpack.c.l.b16 %v112
  %v523 = vunpack.c.l.b16 %v113
  %v524 = vunpack.c.l.b16 %v114
  %v525 = vunpack.c.l.b16 %v115
  %v526 = vunpack.c.l.b16 %v116
  %v527 = vunpack.c.l.b16 %v117
  %v528 = vunpack.c.l.b16 %v118
  %v529 = vunpack.c.l.b16 %v119
  %v530 = vunpack.c.l.b16 %v120
  %v531 = vunpack.c.l.b16 %v121
  %v532 = vunpack.c.l.b16 %v122
  %v533 = vunpack.c.l.b16 %v123
  %v534 = vunpack.c.l.b16 %v124
  %v535 = vunpack.c.l.b16 %v125
  %v536 = vunpack.c.l.b16 %v126
  %v537 = vunpack.c.l.b16 %v127
  %v538 = vunpack.c.l.b16 %v128
  %v539 = vunpack.c.l.b16 %v129
  %v540 = vunpack.c.l.b16 %v130
  %v541 = vunpack.c.l.b16 %v131
  %v542 = vunpack.c.l.b16 %v132
  %v543 = vunpack.c.l.b16 %v133
  %v544 = vunpack.c.l.b16 %v134
  %v545 = vunpack.c.l.b16 %v135
  %v546 = vunpack.c.l.b16 %v136
  %v547 = vunpack.c.l.b16 %v137
  %v548 = vunpack.c.l.b16 %v138
  %v549 = vunpack.c.l.b16 %v139
  %v550 = vunpack.c.l.b16 %v140
  %v551 = vunpack.c.l.b16 %v141
  %v552 = vunpack.c.l.b16 %v142
  %v553 = vunpack.c.l.b16 %v143
  %v554 = vunpack.c.l.b16 %v144
  %v555 = vunpack.c.l.b16 %v145
  %v556 = vunpack.c.l.b16 %v146
  %v557 = vunpack.c.l.b16 %v147
  %v558 = vunpack.c.l.b16 %v148
  %v559 = vunpack.c.l.b16 %v149
  %v560 = vunpack.c.l.b16 %v150
  %v561 = vunpack.c.l.b16 %v151
  %v562 = vunpack.c.l.b16 %v152
  %v563 = vunpack.c.l.b16 %v153
  %v564 = vunpack.c.l.b16 %v154
  %v565 = vunpack.c.l.b16 %v155
  %v566 = vunpack.c.l.b16 %v156
  %v567 = vunpack.c.l.b16 %v157
  %v568 = vunpack.c.l.b16 %v158
  %v569 = vunpack.c.l.b16 %v159
  %v570 = vunpack.c.l.b16 %v160
  %v571 = vunpack.c.l.b16 %v161
  %v572 = vunpack.c.l.b16 %v162
  %v573 = vunpack.c.l.b16 %v163
  %v574 = vunpack.c.l.b16 %v164
  %v575 = vunpack.c.l.b16 %v165
  %v576 = vunpack.c.l.b16 %v166
  %v577 = vunpack.c.l.b16 %v167
  %v578 = vunpack.c.l.b16 %v168
  %v579 = vunpack.c.l.b16 %v169
  %v580 = vunpack.c.l.b16 %v170
  %v581 = vunpack.c.l.b16 %v171
  %v582 = vunpack.c.l.b16 %v172
  %v583 = vunpack.c.l.b16 %v173
  %v584 = vunpack.c.l.b16 %v174
  %v585 = vunpack.c.l.b16 %v175
  %v586 = vunpack.c.l.b16 %v176
  %v587 = vunpack.c.l.b16 %v177
  %v588 = vunpack.c.l.b16 %v178
  %v589 = vunpack.c.l.b16 %v179
  %v590 = vunpack.c.l.b16 %v180
  %v591 = vunpack.c.l.b16 %v181
  %v592 = vunpack.c.l.b16 %v182
  %v593 = vunpack.c.l.b16 %v183
  %v594 = vunpack.c.l.b16 %v184
  %v595 = vunpack.c.l.b16 %v185
  %v596 = vunpack.c.l.b16 %v186
  %v597 = vunpack.c.l.b16 %v187
  %v598 = vunpack.c.l.b16 %v188
  %v599 = vunpack.c.l.b16 %v189
  %v600 = vunpack.c.l.b16 %v190
  %v601 = vunpack.c.l.b16 %v191
  %v602 = vunpack.c.l.b16 %v192
  %v603 = vunpack.c.l.b16 %v193
  %v604 = vunpack.c.l.b16 %v194
  %v605 = vunpack.c.l.b16 %v195
  %v606 = vunpack.c.l.b16 %v196
  %v607 = vunpack.c.l.b16 %v197
  %v608 = vunpack.c.l.b16 %v198
  %v609 = vunpack.c.l.b16 %v199
  %v610 = vunpack.c.l.b16 %v200
  %v611 = vunpack.c.l.b16 %v201
  %v612 = vunpack.c.l.b16 %v202
  %v613 = vunpack.c.l.b16 %v203
  %v614 = vunpack.c.l.b16 %v204
  %v615 = vunpack.c.l.b16 %v205
  %v616 = vunpack.c.l.b16 %v206
  %v617 = vunpack.c.l.b16 %v207
  %v618 = vunpack.c.l.b16 %v208
  %v619 = vunpack.c.l.b16 %v209
  %v620 = vunpack.c.l.b16 %v210
  %v621 = vunpack.c.l.b16 %v211
  %v622 = vunpack.c.l.b16 %v212
  %v623 = vunpack.c.l.b16 %v213
  %v624 = vunpack.c.l.b16 %v214
  %v625 = vpack.c.b16 %v426, %v425
  %v626 = vpack.c.b16 %v428, %v427
  %v627 = vpack.c.b16 %v430, %v429
  %v628 = vpack.c.b16 %v432, %v431
  %v629 = vpack.c.b16 %v434, %v433
  %v630 = vpack.c.b16 %v436, %v435
  %v631 = vpack.c.b16 %v438, %v437
  %v632 = vpack.c.b16 %v440, %v439
  %v633 = vpack.c.b16 %v442, %v441
  %v634 = vpack.c.b16 %v444, %v443
  %v635 = vpack.c.b16 %v446, %v445
  %v636 = vpack.c.b16 %v448, %v447
  %v637 = vpack.c.b16 %v450, %v449
  %v638 = vpack.c.b16 %v452, %v451
  %v639 = vpack.c.b16 %v454, %v453
  %v640 = vpack.c.b16 %v456, %v455
  %v641 = vpack.c.b16 %v458, %v457
  %v642 = vpack.c.b16 %v460, %v459
  %v643 = vpack.c.b16 %v462, %v461
  %v644 = vpack.c.b16 %v464, %v463
  %v645 = vpack.c.b16 %v466, %v465
  %v646 = vpack.c.b16 %v468, %v467
  %v647 = vpack.c.b16 %v470, %v469
  %v648 = vpack.c.b16 %v472, %v471
  %v649 = vpack.c.b16 %v474, %v473
  %v650 = vpack.c.b16 %v476, %v475
  %v651 = vpack.c.b16 %v478, %v477
  %v652 = vpack.c.b16 %v480, %v479
  %v653 = vpack.c.b16 %v482, %v481
  %v654 = vpack.c.b16 %v484, %v483
  %v655 = vpack.c.b16 %v486, %v485
  %v656 = vpack.c.b16 %v488, %v487
  %v657 = vpack.c.b16 %v490, %v489
  %v658 = vpack.c.b16 %v492, %v491
  %v659 = vpack.c.b16 %v494, %v493
  %v660 = vpack.c.b16 %v496, %v495
  %v661 = vpack.c.b16 %v498, %v497
  %v662 = vpack.c.b16 %v500, %v499
  %v663 = vpack.c.b16 %v502, %v501
  %v664 = vpack.c.b16 %v504, %v503
  %v665 = vpack.c.b16 %v506, %v505
  %v666 = vpack.c.b16 %v508, %v507
  %v667 = vpack.c.b16 %v510, %v509
  %v668 = vpack.c.b16 %v512, %v511
  %v669 = vpack.c.b16 %v514, %v513
  %v670 = vpack.c.b16 %v516, %v515
  %v671 = vpack.c.b16 %v518, %v517
  %v672 = vpack.c.b16 %v520, %v519
  %v673 = vpack.c.b16 %v522, %v521
  %v674 = vpack.c.b16 %v524, %v523
  %v675 = vpack.c.b16 %v526, %v525
  %v676 = vpack.c.b16 %v528, %v527
  %v677 = vpack.c.b16 %v530, %v529
  %v678 = vpack.c.b16 %v532, %v531
  %v679 = vpack.c.b16 %v534, %v533
  %v680 = vpack.c.b16 %v536, %v535
  %v681 = vpack.c.b16 %v538, %v537
  %v682 = vpack.c.b16 %v540, %v539
  %v683 = vpack.c.b16 %v542, %v541
  %v684 = vpack.c.b16 %v544, %v543
  %v685 = vpack.c.b16 %v546, %v545
  %v686 = vpack.c.b16 %v548, %v547
  %v687 = vpack.c.b16 %v550, %v549
  %v688 = vpack.c.b16 %v552, %v551
  %v689 = vpack.c.b16 %v554, %v553
  %v690 = vpack.c.b16 %v556, %v555
  %v691 = vpack.c.b16 %v558, %v557
  %v692 = vpack.c.b16 %v560, %v559
  %v693 = vpack.c.b16 %v562, %v561
  %v694 = vpack.c.b16 %v564, %v563
  %v695 = vpack.c.b16 %v566, %v565
  %v696 = vpack.c.b16 %v568, %v567
  %v697 = vpack.c.b16 %v570, %v569
  %v698 = vpack.c.b16 %v572, %v571
  %v699 = vpack.c.b16 %v574, %v573
  %v700 = vpack.c.b16 %v576, %v575
  %v701 = vpack.c.b16 %v578, %v577
  %v702 = vpack.c.b16 %v580, %v579
  %v703 = vpack.c.b16 %v582, %v581
  %v704 = vpack.c.b16 %v584, %v583
  %v705 = vpack.c.b16 %v586, %v585
  %v706 = vpack.c.b16 %v588, %v587
  %v707 = vpack.c.b16 %v590, %v589
  %v708 = vpack.c.b16 %v592, %v591
  %v709 = vpack.c.b16 %v594, %v593
  %v710 = vpack.c.b16 %v596, %v595
  %v711 = vpack.c.b16 %v598, %v597
  %v712 = vpack.c.b16 %v600, %v599
  %v713 = vpack.c.b16 %v602, %v601
  %v714 = vpack.c.b16 %v604, %v603
  %v715 = vpack.c.b16 %v606, %v605
  %v716 = vpack.c.b16 %v608, %v607
  %v717 = vpack.c.b16 %v610, %v609
  %v718 = vpack.c.b16 %v612, %v611
  %v719 = vpack.c.b16 %v614, %v613
  %v720 = vpack.c.b16 %v616, %v615
  %v721 = vpack.c.b16 %v618, %v617
  %v722 = vpack.c.b16 %v620, %v619
  %v723 = vpack.c.b16 %v622, %v621
  %v724 = vpack.c.b16 %v624, %v623
  %v735 = vunpack.c.l.b16 %v215
  %v736 = vunpack.c.l.b16 %v216
  %v737 = vunpack.c.l.b16 %v217
  %v738 = vunpack.c.l.b16 %v218
  %v739 = vunpack.c.l.b16 %v219
  %v740 = vunpack.c.l.b16 %v220
  %v741 = vunpack.c.l.b16 %v221
  %v742 = vunpack.c.l.b16 %v222
  %v743 = vunpack.c.l.b16 %v223
  %v744 = vunpack.c.l.b16 %v224
  %v745 = vpack.c.b16 %v736, %v735
  %v746 = vpack.c.b16 %v738, %v737
  %v747 = vpack.c.b16 %v740, %v739
  %v748 = vpack.c.b16 %v742, %v741
  %v749 = vpack.c.b16 %v744, %v743
  %vm754 = vcmask 613376
  %v756 = vsel %vm754, %v625, 0
  %v759 = vsel %vm754, %v626, 0
  %v762 = vsel %vm754, %v627, 0
  %v765 = vsel %vm754, %v628, 0
  %v768 = vsel %vm754, %v629, 0
  %v771 = vsel %vm754, %v630, 0
  %v774 = vsel %vm754, %v631, 0
  %v777 = vsel %vm754, %v632, 0
  %v780 = vsel %vm754, %v633, 0
  %v783 = vsel %vm754, %v634, 0
  %v786 = vsel %vm754, %v635, 0
  %v789 = vsel %vm754, %v636, 0
  %v792 = vsel %vm754, %v637, 0
  %v795 = vsel %vm754, %v638, 0
  %v798 = vsel %vm754, %v639, 0
  %v801 = vsel %vm754, %v640, 0
  %v804 = vsel %vm754, %v641, 0
  %v807 = vsel %vm754, %v642, 0
  %v810 = vsel %vm754, %v643, 0
  %v813 = vsel %vm754, %v644, 0
  %v816 = vsel %vm754, %v645, 0
  %v819 = vsel %vm754, %v646, 0
  %v822 = vsel %vm754, %v647, 0
  %v825 = vsel %vm754, %v648, 0
  %v828 = vsel %vm754, %v649, 0
  %v831 = vsel %vm754, %v650, 0
  %v834 = vsel %vm754, %v651, 0
  %v837 = vsel %vm754, %v652, 0
  %v840 = vsel %vm754, %v653, 0
  %v843 = vsel %vm754, %v654, 0
  %v846 = vsel %vm754, %v655, 0
  %v849 = vsel %vm754, %v656, 0
  %v852 = vsel %vm754, %v657, 0
  %v855 = vsel %vm754, %v658, 0
  %v858 = vsel %vm754, %v659, 0
  %v861 = vsel %vm754, %v660, 0
  %v864 = vsel %vm754, %v661, 0
  %v867 = vsel %vm754, %v662, 0
  %v870 = vsel %vm754, %v663, 0
  %v873 = vsel %vm754, %v664, 0
  %v876 = vsel %vm754, %v665, 0
  %v879 = vsel %vm754, %v666, 0
  %v882 = vsel %vm754, %v667, 0
  %v885 = vsel %vm754, %v668, 0
  %v888 = vsel %vm754, %v669, 0
  %v891 = vsel %vm754, %v670, 0
  %v894 = vsel %vm754, %v671, 0
  %v897 = vsel %vm754, %v672, 0
  %v900 = vsel %vm754, %v673, 0
  %v903 = vsel %vm754, %v674, 0
  %v906 = vsel %vm754, %v675, 0
  %v909 = vsel %vm754, %v676, 0
  %v912 = vsel %vm754, %v677, 0
  %v915 = vsel %vm754, %v678, 0
  %v918 = vsel %vm754, %v679, 0
  %v921 = vsel %vm754, %v680, 0
  %v924 = vsel %vm754, %v681, 0
  %v927 = vsel %vm754, %v682, 0
  %v930 = vsel %vm754, %v683, 0
  %v933 = vsel %vm754, %v684, 0
  %v936 = vsel %vm754, %v685, 0
  %v939 = vsel %vm754, %v686, 0
  %v942 = vsel %vm754, %v687, 0
  %v945 = vsel %vm754, %v688, 0
  %v948 = vsel %vm754, %v689, 0
  %v951 = vsel %vm754, %v690, 0
  %v954 = vsel %vm754, %v691, 0
  %v957 = vsel %vm754, %v692, 0
  %v960 = vsel %vm754, %v693, 0
  %v963 = vsel %vm754, %v694, 0
  %v966 = vsel %vm754, %v695, 0
  %v969 = vsel %vm754, %v696, 0
  %v972 = vsel %vm754, %v697, 0
  %v975 = vsel %vm754, %v698, 0
  %v978 = vsel %vm754, %v699, 0
  %v981 = vsel %vm754, %v700, 0
  %v984 = vsel %vm754, %v701, 0
  %v987 = vsel %vm754, %v702, 0
  %v990 = vsel %vm754, %v703, 0
  %v993 = vsel %vm754, %v704, 0
  %v996 = vsel %vm754, %v705, 0
  %v999 = vsel %vm754, %v706, 0
  %v1002 = vsel %vm754, %v707, 0
  %v1005 = vsel %vm754, %v708, 0
  %v1008 = vsel %vm754, %v709, 0
  %v1011 = vsel %vm754, %v710, 0
  %v1014 = vsel %vm754, %v711, 0
  %v1017 = vsel %vm754, %v712, 0
  %v1020 = vsel %vm754, %v713, 0
  %v1023 = vsel %vm754, %v714, 0
  %v1026 = vsel %vm754, %v715, 0
  %v1029 = vsel %vm754, %v716, 0
  %v1032 = vsel %vm754, %v717, 0
  %v1035 = vsel %vm754, %v718, 0
  %v1038 = vsel %vm754, %v719, 0
  %v1041 = vsel %vm754, %v720, 0
  %v1044 = vsel %vm754, %v721, 0
  %v1047 = vsel %vm754, %v722, 0
  %v1050 = vsel %vm754, %v723, 0
  %v1053 = vsel %vm754, %v724, 0
  %vm1055 = vcmask 1044480
  %vm1056 = vcmask 1045504
  %v1057 = vsel %vm1055, 4294967295, 65535
  %v1058 = vsel %vm1056, %v1057, 0
  %v1060 = vand.u32 %v749, %v1058
  %1062 = vmatprep.subr.bf16.mxu0 0
  %1063 = vmatpush1.bf16.msra.mxu0 %v745
  %1064 = vmatprep.subr.bf16.mxu0 0
  %1065 = vmatpush1.bf16.msra.mxu0 %v746
  %1066 = vmatprep.subr.bf16.mxu0 0
  %1067 = vmatpush1.bf16.msra.mxu0 %v747
  %1068 = vmatprep.subr.bf16.mxu0 0
  %1069 = vmatpush1.bf16.msra.mxu0 %v748
  %1070 = vmatprep.subr.bf16.mxu0 0
  %1071 = vmatpush1.bf16.msra.mxu0 %v1060
  %1072 = vmatprep.subr.bf16.mxu0 0
  %1073 = vmatpush1.bf16.msra.mxu0 0
  %1074 = vmatprep.subr.bf16.mxu0 0
  %1075 = vmatpush1.bf16.msra.mxu0 0
  %1076 = vmatprep.subr.bf16.mxu0 0
  %1077 = vmatpush1.bf16.msra.mxu0 0
  %1078 = vmatprep.subr.bf16.mxu0 0
  %1079 = vmatpush1.bf16.msra.mxu0 0
  %1080 = vmatprep.subr.bf16.mxu0 0
  %1081 = vmatpush1.bf16.msra.mxu0 0
  %1082 = vmatprep.subr.bf16.mxu0 0
  %1083 = vmatpush1.bf16.msra.mxu0 0
  %1084 = vmatprep.subr.bf16.mxu0 0
  %1085 = vmatpush1.bf16.msra.mxu0 0
  %1086 = vmatprep.subr.bf16.mxu0 0
  %1087 = vmatpush1.bf16.msra.mxu0 0
  %1088 = vmatprep.subr.bf16.mxu0 0
  %1089 = vmatpush1.bf16.msra.mxu0 0
  %1090 = vmatprep.subr.bf16.mxu0 0
  %1091 = vmatpush1.bf16.msra.mxu0 0
  %1092 = vmatprep.subr.bf16.mxu0 0
  %1093 = vmatpush1.bf16.msra.mxu0 0
  %1094 = vmatprep.mubr.bf16.mxu0 0
  %1095 = vmatmul.mubr.bf16.gmra.mrb[0].mxu0 %v756
  %v1096 = vpop.f32.mrb[0].mxu0
  %v1097 = vadd.f32 0.0, %v1096
  %v1098 = vpop.f32.mrb[0].mxu0
  %v1099 = vpop.f32.mrb[0].mxu0
  %v1100 = vadd.f32 0.0, %v1099
  %v1101 = vpop.f32.mrb[0].mxu0
  %1102 = vmatprep.mubr.bf16.mxu0 0
  %1103 = vmatmul.mubr.bf16.gmra.mrb[0].mxu0 %v759
  %v1104 = vpop.f32.mrb[0].mxu0
  %v1105 = vadd.f32 0.0, %v1104
  %v1106 = vpop.f32.mrb[0].mxu0
  %v1107 = vpop.f32.mrb[0].mxu0
  %v1108 = vadd.f32 0.0, %v1107
  %v1109 = vpop.f32.mrb[0].mxu0
  %1110 = vmatprep.mubr.bf16.mxu0 0
  %1111 = vmatmul.mubr.bf16.gmra.mrb[0].mxu0 %v762
  %v1112 = vpop.f32.mrb[0].mxu0
  %v1113 = vadd.f32 0.0, %v1112
  %v1114 = vpop.f32.mrb[0].mxu0
  %v1115 = vpop.f32.mrb[0].mxu0
  %v1116 = vadd.f32 0.0, %v1115
  %v1117 = vpop.f32.mrb[0].mxu0
  %1118 = vmatprep.mubr.bf16.mxu0 0
  %1119 = vmatmul.mubr.bf16.gmra.mrb[0].mxu0 %v765
  %v1120 = vpop.f32.mrb[0].mxu0
  %v1121 = vadd.f32 0.0, %v1120
  %v1122 = vpop.f32.mrb[0].mxu0
  %v1123 = vpop.f32.mrb[0].mxu0
  %v1124 = vadd.f32 0.0, %v1123
  %v1125 = vpop.f32.mrb[0].mxu0
  %1126 = vmatprep.mubr.bf16.mxu0 0
  %1127 = vmatmul.mubr.bf16.gmra.mrb[0].mxu0 %v768
  %v1128 = vpop.f32.mrb[0].mxu0
  %v1129 = vadd.f32 0.0, %v1128
  %v1130 = vpop.f32.mrb[0].mxu0
  %v1131 = vpop.f32.mrb[0].mxu0
  %v1132 = vadd.f32 0.0, %v1131
  %v1133 = vpop.f32.mrb[0].mxu0
  %1134 = vmatprep.mubr.bf16.mxu0 0
  %1135 = vmatmul.mubr.bf16.gmra.mrb[0].mxu0 %v771
  %v1136 = vpop.f32.mrb[0].mxu0
  %v1137 = vadd.f32 0.0, %v1136
  %v1138 = vpop.f32.mrb[0].mxu0
  %v1139 = vpop.f32.mrb[0].mxu0
  %v1140 = vadd.f32 0.0, %v1139
  %v1141 = vpop.f32.mrb[0].mxu0
  %1142 = vmatprep.mubr.bf16.mxu0 0
  %1143 = vmatmul.mubr.bf16.gmra.mrb[0].mxu0 %v774
  %v1144 = vpop.f32.mrb[0].mxu0
  %v1145 = vadd.f32 0.0, %v1144
  %v1146 = vpop.f32.mrb[0].mxu0
  %v1147 = vpop.f32.mrb[0].mxu0
  %v1148 = vadd.f32 0.0, %v1147
  %v1149 = vpop.f32.mrb[0].mxu0
  %1150 = vmatprep.mubr.bf16.mxu0 0
  %1151 = vmatmul.mubr.bf16.gmra.mrb[0].mxu0 %v777
  %v1152 = vpop.f32.mrb[0].mxu0
  %v1153 = vadd.f32 0.0, %v1152
  %v1154 = vpop.f32.mrb[0].mxu0
  %v1155 = vpop.f32.mrb[0].mxu0
  %v1156 = vadd.f32 0.0, %v1155
  %v1157 = vpop.f32.mrb[0].mxu0
  %1158 = vmatprep.mubr.bf16.mxu0 0
  %1159 = vmatmul.mubr.bf16.gmra.mrb[0].mxu0 %v780
  %v1160 = vpop.f32.mrb[0].mxu0
  %v1161 = vadd.f32 0.0, %v1160
  %v1162 = vpop.f32.mrb[0].mxu0
  %v1163 = vpop.f32.mrb[0].mxu0
  %v1164 = vadd.f32 0.0, %v1163
  %v1165 = vpop.f32.mrb[0].mxu0
  %1166 = vmatprep.mubr.bf16.mxu0 0
  %1167 = vmatmul.mubr.bf16.gmra.mrb[0].mxu0 %v783
  %v1168 = vpop.f32.mrb[0].mxu0
  %v1169 = vadd.f32 0.0, %v1168
  %v1170 = vpop.f32.mrb[0].mxu0
  %v1171 = vpop.f32.mrb[0].mxu0
  %v1172 = vadd.f32 0.0, %v1171
  %v1173 = vpop.f32.mrb[0].mxu0
  %1174 = vmatprep.mubr.bf16.mxu0 0
  %1175 = vmatmul.mubr.bf16.gmra.mrb[0].mxu0 %v786
  %v1176 = vpop.f32.mrb[0].mxu0
  %v1177 = vadd.f32 0.0, %v1176
  %v1178 = vpop.f32.mrb[0].mxu0
  %v1179 = vpop.f32.mrb[0].mxu0
  %v1180 = vadd.f32 0.0, %v1179
  %v1181 = vpop.f32.mrb[0].mxu0
  %1182 = vmatprep.mubr.bf16.mxu0 0
  %1183 = vmatmul.mubr.bf16.gmra.mrb[0].mxu0 %v789
  %v1184 = vpop.f32.mrb[0].mxu0
  %v1185 = vadd.f32 0.0, %v1184
  %v1186 = vpop.f32.mrb[0].mxu0
  %v1187 = vpop.f32.mrb[0].mxu0
  %v1188 = vadd.f32 0.0, %v1187
  %v1189 = vpop.f32.mrb[0].mxu0
  %1190 = vmatprep.mubr.bf16.mxu0 0
  %1191 = vmatmul.mubr.bf16.gmra.mrb[0].mxu0 %v792
  %v1192 = vpop.f32.mrb[0].mxu0
  %v1193 = vadd.f32 0.0, %v1192
  %v1194 = vpop.f32.mrb[0].mxu0
  %v1195 = vpop.f32.mrb[0].mxu0
  %v1196 = vadd.f32 0.0, %v1195
  %v1197 = vpop.f32.mrb[0].mxu0
  %1198 = vmatprep.mubr.bf16.mxu0 0
  %1199 = vmatmul.mubr.bf16.gmra.mrb[0].mxu0 %v795
  %v1200 = vpop.f32.mrb[0].mxu0
  %v1201 = vadd.f32 0.0, %v1200
  %v1202 = vpop.f32.mrb[0].mxu0
  %v1203 = vpop.f32.mrb[0].mxu0
  %v1204 = vadd.f32 0.0, %v1203
  %v1205 = vpop.f32.mrb[0].mxu0
  %1206 = vmatprep.mubr.bf16.mxu0 0
  %1207 = vmatmul.mubr.bf16.gmra.mrb[0].mxu0 %v798
  %v1208 = vpop.f32.mrb[0].mxu0
  %v1209 = vadd.f32 0.0, %v1208
  %v1210 = vpop.f32.mrb[0].mxu0
  %v1211 = vpop.f32.mrb[0].mxu0
  %v1212 = vadd.f32 0.0, %v1211
  %v1213 = vpop.f32.mrb[0].mxu0
  %1214 = vmatprep.mubr.bf16.mxu0 0
  %1215 = vmatmul.mubr.bf16.gmra.mrb[0].mxu0 %v801
  %v1216 = vpop.f32.mrb[0].mxu0
  %v1217 = vadd.f32 0.0, %v1216
  %v1218 = vpop.f32.mrb[0].mxu0
  %v1219 = vpop.f32.mrb[0].mxu0
  %v1220 = vadd.f32 0.0, %v1219
  %v1221 = vpop.f32.mrb[0].mxu0
  %1222 = vmatprep.mubr.bf16.mxu0 0
  %1223 = vmatmul.mubr.bf16.gmra.mrb[0].mxu0 %v804
  %v1224 = vpop.f32.mrb[0].mxu0
  %v1225 = vadd.f32 0.0, %v1224
  %v1226 = vpop.f32.mrb[0].mxu0
  %v1227 = vpop.f32.mrb[0].mxu0
  %v1228 = vadd.f32 0.0, %v1227
  %v1229 = vpop.f32.mrb[0].mxu0
  %1230 = vmatprep.mubr.bf16.mxu0 0
  %1231 = vmatmul.mubr.bf16.gmra.mrb[0].mxu0 %v807
  %v1232 = vpop.f32.mrb[0].mxu0
  %v1233 = vadd.f32 0.0, %v1232
  %v1234 = vpop.f32.mrb[0].mxu0
  %v1235 = vpop.f32.mrb[0].mxu0
  %v1236 = vadd.f32 0.0, %v1235
  %v1237 = vpop.f32.mrb[0].mxu0
  %1238 = vmatprep.mubr.bf16.mxu0 0
  %1239 = vmatmul.mubr.bf16.gmra.mrb[0].mxu0 %v810
  %v1240 = vpop.f32.mrb[0].mxu0
  %v1241 = vadd.f32 0.0, %v1240
  %v1242 = vpop.f32.mrb[0].mxu0
  %v1243 = vpop.f32.mrb[0].mxu0
  %v1244 = vadd.f32 0.0, %v1243
  %v1245 = vpop.f32.mrb[0].mxu0
  %1246 = vmatprep.mubr.bf16.mxu0 0
  %1247 = vmatmul.mubr.bf16.gmra.mrb[0].mxu0 %v813
  %v1248 = vpop.f32.mrb[0].mxu0
  %v1249 = vadd.f32 0.0, %v1248
  %v1250 = vpop.f32.mrb[0].mxu0
  %v1251 = vpop.f32.mrb[0].mxu0
  %v1252 = vadd.f32 0.0, %v1251
  %v1253 = vpop.f32.mrb[0].mxu0
  %1254 = vmatprep.mubr.bf16.mxu0 0
  %1255 = vmatmul.mubr.bf16.gmra.mrb[0].mxu0 %v816
  %v1256 = vpop.f32.mrb[0].mxu0
  %v1257 = vadd.f32 0.0, %v1256
  %v1258 = vpop.f32.mrb[0].mxu0
  %v1259 = vpop.f32.mrb[0].mxu0
  %v1260 = vadd.f32 0.0, %v1259
  %v1261 = vpop.f32.mrb[0].mxu0
  %1262 = vmatprep.mubr.bf16.mxu0 0
  %1263 = vmatmul.mubr.bf16.gmra.mrb[0].mxu0 %v819
  %v1264 = vpop.f32.mrb[0].mxu0
  %v1265 = vadd.f32 0.0, %v1264
  %v1266 = vpop.f32.mrb[0].mxu0
  %v1267 = vpop.f32.mrb[0].mxu0
  %v1268 = vadd.f32 0.0, %v1267
  %v1269 = vpop.f32.mrb[0].mxu0
  %1270 = vmatprep.mubr.bf16.mxu0 0
  %1271 = vmatmul.mubr.bf16.gmra.mrb[0].mxu0 %v822
  %v1272 = vpop.f32.mrb[0].mxu0
  %v1273 = vadd.f32 0.0, %v1272
  %v1274 = vpop.f32.mrb[0].mxu0
  %v1275 = vpop.f32.mrb[0].mxu0
  %v1276 = vadd.f32 0.0, %v1275
  %v1277 = vpop.f32.mrb[0].mxu0
  %1278 = vmatprep.mubr.bf16.mxu0 0
  %1279 = vmatmul.mubr.bf16.gmra.mrb[0].mxu0 %v825
  %v1280 = vpop.f32.mrb[0].mxu0
  %v1281 = vadd.f32 0.0, %v1280
  %v1282 = vpop.f32.mrb[0].mxu0
  %v1283 = vpop.f32.mrb[0].mxu0
  %v1284 = vadd.f32 0.0, %v1283
  %v1285 = vpop.f32.mrb[0].mxu0
  %1286 = vmatprep.mubr.bf16.mxu0 0
  %1287 = vmatmul.mubr.bf16.gmra.mrb[0].mxu0 %v828
  %v1288 = vpop.f32.mrb[0].mxu0
  %v1289 = vadd.f32 0.0, %v1288
  %v1290 = vpop.f32.mrb[0].mxu0
  %v1291 = vpop.f32.mrb[0].mxu0
  %v1292 = vadd.f32 0.0, %v1291
  %v1293 = vpop.f32.mrb[0].mxu0
  %1294 = vmatprep.mubr.bf16.mxu0 0
  %1295 = vmatmul.mubr.bf16.gmra.mrb[0].mxu0 %v831
  %v1296 = vpop.f32.mrb[0].mxu0
  %v1297 = vadd.f32 0.0, %v1296
  %v1298 = vpop.f32.mrb[0].mxu0
  %v1299 = vpop.f32.mrb[0].mxu0
  %v1300 = vadd.f32 0.0, %v1299
  %v1301 = vpop.f32.mrb[0].mxu0
  %1302 = vmatprep.mubr.bf16.mxu0 0
  %1303 = vmatmul.mubr.bf16.gmra.mrb[0].mxu0 %v834
  %v1304 = vpop.f32.mrb[0].mxu0
  %v1305 = vadd.f32 0.0, %v1304
  %v1306 = vpop.f32.mrb[0].mxu0
  %v1307 = vpop.f32.mrb[0].mxu0
  %v1308 = vadd.f32 0.0, %v1307
  %v1309 = vpop.f32.mrb[0].mxu0
  %1310 = vmatprep.mubr.bf16.mxu0 0
  %1311 = vmatmul.mubr.bf16.gmra.mrb[0].mxu0 %v837
  %v1312 = vpop.f32.mrb[0].mxu0
  %v1313 = vadd.f32 0.0, %v1312
  %v1314 = vpop.f32.mrb[0].mxu0
  %v1315 = vpop.f32.mrb[0].mxu0
  %v1316 = vadd.f32 0.0, %v1315
  %v1317 = vpop.f32.mrb[0].mxu0
  %1318 = vmatprep.mubr.bf16.mxu0 0
  %1319 = vmatmul.mubr.bf16.gmra.mrb[0].mxu0 %v840
  %v1320 = vpop.f32.mrb[0].mxu0
  %v1321 = vadd.f32 0.0, %v1320
  %v1322 = vpop.f32.mrb[0].mxu0
  %v1323 = vpop.f32.mrb[0].mxu0
  %v1324 = vadd.f32 0.0, %v1323
  %v1325 = vpop.f32.mrb[0].mxu0
  %1326 = vmatprep.mubr.bf16.mxu0 0
  %1327 = vmatmul.mubr.bf16.gmra.mrb[0].mxu0 %v843
  %v1328 = vpop.f32.mrb[0].mxu0
  %v1329 = vadd.f32 0.0, %v1328
  %v1330 = vpop.f32.mrb[0].mxu0
  %v1331 = vpop.f32.mrb[0].mxu0
  %v1332 = vadd.f32 0.0, %v1331
  %v1333 = vpop.f32.mrb[0].mxu0
  %1334 = vmatprep.mubr.bf16.mxu0 0
  %1335 = vmatmul.mubr.bf16.gmra.mrb[0].mxu0 %v846
  %v1336 = vpop.f32.mrb[0].mxu0
  %v1337 = vadd.f32 0.0, %v1336
  %v1338 = vpop.f32.mrb[0].mxu0
  %v1339 = vpop.f32.mrb[0].mxu0
  %v1340 = vadd.f32 0.0, %v1339
  %v1341 = vpop.f32.mrb[0].mxu0
  %1342 = vmatprep.mubr.bf16.mxu0 0
  %1343 = vmatmul.mubr.bf16.gmra.mrb[0].mxu0 %v849
  %v1344 = vpop.f32.mrb[0].mxu0
  %v1345 = vadd.f32 0.0, %v1344
  %v1346 = vpop.f32.mrb[0].mxu0
  %v1347 = vpop.f32.mrb[0].mxu0
  %v1348 = vadd.f32 0.0, %v1347
  %v1349 = vpop.f32.mrb[0].mxu0
  %1350 = vmatprep.mubr.bf16.mxu0 0
  %1351 = vmatmul.mubr.bf16.gmra.mrb[0].mxu0 %v852
  %v1352 = vpop.f32.mrb[0].mxu0
  %v1353 = vadd.f32 0.0, %v1352
  %v1354 = vpop.f32.mrb[0].mxu0
  %v1355 = vpop.f32.mrb[0].mxu0
  %v1356 = vadd.f32 0.0, %v1355
  %v1357 = vpop.f32.mrb[0].mxu0
  %1358 = vmatprep.mubr.bf16.mxu0 0
  %1359 = vmatmul.mubr.bf16.gmra.mrb[0].mxu0 %v855
  %v1360 = vpop.f32.mrb[0].mxu0
  %v1361 = vadd.f32 0.0, %v1360
  %v1362 = vpop.f32.mrb[0].mxu0
  %v1363 = vpop.f32.mrb[0].mxu0
  %v1364 = vadd.f32 0.0, %v1363
  %v1365 = vpop.f32.mrb[0].mxu0
  %1366 = vmatprep.mubr.bf16.mxu0 0
  %1367 = vmatmul.mubr.bf16.gmra.mrb[0].mxu0 %v858
  %v1368 = vpop.f32.mrb[0].mxu0
  %v1369 = vadd.f32 0.0, %v1368
  %v1370 = vpop.f32.mrb[0].mxu0
  %v1371 = vpop.f32.mrb[0].mxu0
  %v1372 = vadd.f32 0.0, %v1371
  %v1373 = vpop.f32.mrb[0].mxu0
  %1374 = vmatprep.mubr.bf16.mxu0 0
  %1375 = vmatmul.mubr.bf16.gmra.mrb[0].mxu0 %v861
  %v1376 = vpop.f32.mrb[0].mxu0
  %v1377 = vadd.f32 0.0, %v1376
  %v1378 = vpop.f32.mrb[0].mxu0
  %v1379 = vpop.f32.mrb[0].mxu0
  %v1380 = vadd.f32 0.0, %v1379
  %v1381 = vpop.f32.mrb[0].mxu0
  %1382 = vmatprep.mubr.bf16.mxu0 0
  %1383 = vmatmul.mubr.bf16.gmra.mrb[0].mxu0 %v864
  %v1384 = vpop.f32.mrb[0].mxu0
  %v1385 = vadd.f32 0.0, %v1384
  %v1386 = vpop.f32.mrb[0].mxu0
  %v1387 = vpop.f32.mrb[0].mxu0
  %v1388 = vadd.f32 0.0, %v1387
  %v1389 = vpop.f32.mrb[0].mxu0
  %1390 = vmatprep.mubr.bf16.mxu0 0
  %1391 = vmatmul.mubr.bf16.gmra.mrb[0].mxu0 %v867
  %v1392 = vpop.f32.mrb[0].mxu0
  %v1393 = vadd.f32 0.0, %v1392
  %v1394 = vpop.f32.mrb[0].mxu0
  %v1395 = vpop.f32.mrb[0].mxu0
  %v1396 = vadd.f32 0.0, %v1395
  %v1397 = vpop.f32.mrb[0].mxu0
  %1398 = vmatprep.mubr.bf16.mxu0 0
  %1399 = vmatmul.mubr.bf16.gmra.mrb[0].mxu0 %v870
  %v1400 = vpop.f32.mrb[0].mxu0
  %v1401 = vadd.f32 0.0, %v1400
  %v1402 = vpop.f32.mrb[0].mxu0
  %v1403 = vpop.f32.mrb[0].mxu0
  %v1404 = vadd.f32 0.0, %v1403
  %v1405 = vpop.f32.mrb[0].mxu0
  %1406 = vmatprep.mubr.bf16.mxu0 0
  %1407 = vmatmul.mubr.bf16.gmra.mrb[0].mxu0 %v873
  %v1408 = vpop.f32.mrb[0].mxu0
  %v1409 = vadd.f32 0.0, %v1408
  %v1410 = vpop.f32.mrb[0].mxu0
  %v1411 = vpop.f32.mrb[0].mxu0
  %v1412 = vadd.f32 0.0, %v1411
  %v1413 = vpop.f32.mrb[0].mxu0
  %1414 = vmatprep.mubr.bf16.mxu0 0
  %1415 = vmatmul.mubr.bf16.gmra.mrb[0].mxu0 %v876
  %v1416 = vpop.f32.mrb[0].mxu0
  %v1417 = vadd.f32 0.0, %v1416
  %v1418 = vpop.f32.mrb[0].mxu0
  %v1419 = vpop.f32.mrb[0].mxu0
  %v1420 = vadd.f32 0.0, %v1419
  %v1421 = vpop.f32.mrb[0].mxu0
  %1422 = vmatprep.mubr.bf16.mxu0 0
  %1423 = vmatmul.mubr.bf16.gmra.mrb[0].mxu0 %v879
  %v1424 = vpop.f32.mrb[0].mxu0
  %v1425 = vadd.f32 0.0, %v1424
  %v1426 = vpop.f32.mrb[0].mxu0
  %v1427 = vpop.f32.mrb[0].mxu0
  %v1428 = vadd.f32 0.0, %v1427
  %v1429 = vpop.f32.mrb[0].mxu0
  %1430 = vmatprep.mubr.bf16.mxu0 0
  %1431 = vmatmul.mubr.bf16.gmra.mrb[0].mxu0 %v882
  %v1432 = vpop.f32.mrb[0].mxu0
  %v1433 = vadd.f32 0.0, %v1432
  %v1434 = vpop.f32.mrb[0].mxu0
  %v1435 = vpop.f32.mrb[0].mxu0
  %v1436 = vadd.f32 0.0, %v1435
  %v1437 = vpop.f32.mrb[0].mxu0
  %1438 = vmatprep.mubr.bf16.mxu0 0
  %1439 = vmatmul.mubr.bf16.gmra.mrb[0].mxu0 %v885
  %v1440 = vpop.f32.mrb[0].mxu0
  %v1441 = vadd.f32 0.0, %v1440
  %v1442 = vpop.f32.mrb[0].mxu0
  %v1443 = vpop.f32.mrb[0].mxu0
  %v1444 = vadd.f32 0.0, %v1443
  %v1445 = vpop.f32.mrb[0].mxu0
  %1446 = vmatprep.mubr.bf16.mxu0 0
  %1447 = vmatmul.mubr.bf16.gmra.mrb[0].mxu0 %v888
  %v1448 = vpop.f32.mrb[0].mxu0
  %v1449 = vadd.f32 0.0, %v1448
  %v1450 = vpop.f32.mrb[0].mxu0
  %v1451 = vpop.f32.mrb[0].mxu0
  %v1452 = vadd.f32 0.0, %v1451
  %v1453 = vpop.f32.mrb[0].mxu0
  %1454 = vmatprep.mubr.bf16.mxu0 0
  %1455 = vmatmul.mubr.bf16.gmra.mrb[0].mxu0 %v891
  %v1456 = vpop.f32.mrb[0].mxu0
  %v1457 = vadd.f32 0.0, %v1456
  %v1458 = vpop.f32.mrb[0].mxu0
  %v1459 = vpop.f32.mrb[0].mxu0
  %v1460 = vadd.f32 0.0, %v1459
  %v1461 = vpop.f32.mrb[0].mxu0
  %1462 = vmatprep.mubr.bf16.mxu0 0
  %1463 = vmatmul.mubr.bf16.gmra.mrb[0].mxu0 %v894
  %v1464 = vpop.f32.mrb[0].mxu0
  %v1465 = vadd.f32 0.0, %v1464
  %v1466 = vpop.f32.mrb[0].mxu0
  %v1467 = vpop.f32.mrb[0].mxu0
  %v1468 = vadd.f32 0.0, %v1467
  %v1469 = vpop.f32.mrb[0].mxu0
  %1470 = vmatprep.mubr.bf16.mxu0 0
  %1471 = vmatmul.mubr.bf16.gmra.mrb[0].mxu0 %v897
  %v1472 = vpop.f32.mrb[0].mxu0
  %v1473 = vadd.f32 0.0, %v1472
  %v1474 = vpop.f32.mrb[0].mxu0
  %v1475 = vpop.f32.mrb[0].mxu0
  %v1476 = vadd.f32 0.0, %v1475
  %v1477 = vpop.f32.mrb[0].mxu0
  %1478 = vmatprep.mubr.bf16.mxu0 0
  %1479 = vmatmul.mubr.bf16.gmra.mrb[0].mxu0 %v900
  %v1480 = vpop.f32.mrb[0].mxu0
  %v1481 = vadd.f32 0.0, %v1480
  %v1482 = vpop.f32.mrb[0].mxu0
  %v1483 = vpop.f32.mrb[0].mxu0
  %v1484 = vadd.f32 0.0, %v1483
  %v1485 = vpop.f32.mrb[0].mxu0
  %1486 = vmatprep.mubr.bf16.mxu0 0
  %1487 = vmatmul.mubr.bf16.gmra.mrb[0].mxu0 %v903
  %v1488 = vpop.f32.mrb[0].mxu0
  %v1489 = vadd.f32 0.0, %v1488
  %v1490 = vpop.f32.mrb[0].mxu0
  %v1491 = vpop.f32.mrb[0].mxu0
  %v1492 = vadd.f32 0.0, %v1491
  %v1493 = vpop.f32.mrb[0].mxu0
  %1494 = vmatprep.mubr.bf16.mxu0 0
  %1495 = vmatmul.mubr.bf16.gmra.mrb[0].mxu0 %v906
  %v1496 = vpop.f32.mrb[0].mxu0
  %v1497 = vadd.f32 0.0, %v1496
  %v1498 = vpop.f32.mrb[0].mxu0
  %v1499 = vpop.f32.mrb[0].mxu0
  %v1500 = vadd.f32 0.0, %v1499
  %v1501 = vpop.f32.mrb[0].mxu0
  %1502 = vmatprep.mubr.bf16.mxu0 0
  %1503 = vmatmul.mubr.bf16.gmra.mrb[0].mxu0 %v909
  %v1504 = vpop.f32.mrb[0].mxu0
  %v1505 = vadd.f32 0.0, %v1504
  %v1506 = vpop.f32.mrb[0].mxu0
  %v1507 = vpop.f32.mrb[0].mxu0
  %v1508 = vadd.f32 0.0, %v1507
  %v1509 = vpop.f32.mrb[0].mxu0
  %1510 = vmatprep.mubr.bf16.mxu0 0
  %1511 = vmatmul.mubr.bf16.gmra.mrb[0].mxu0 %v912
  %v1512 = vpop.f32.mrb[0].mxu0
  %v1513 = vadd.f32 0.0, %v1512
  %v1514 = vpop.f32.mrb[0].mxu0
  %v1515 = vpop.f32.mrb[0].mxu0
  %v1516 = vadd.f32 0.0, %v1515
  %v1517 = vpop.f32.mrb[0].mxu0
  %1518 = vmatprep.mubr.bf16.mxu0 0
  %1519 = vmatmul.mubr.bf16.gmra.mrb[0].mxu0 %v915
  %v1520 = vpop.f32.mrb[0].mxu0
  %v1521 = vadd.f32 0.0, %v1520
  %v1522 = vpop.f32.mrb[0].mxu0
  %v1523 = vpop.f32.mrb[0].mxu0
  %v1524 = vadd.f32 0.0, %v1523
  %v1525 = vpop.f32.mrb[0].mxu0
  %1526 = vmatprep.mubr.bf16.mxu0 0
  %1527 = vmatmul.mubr.bf16.gmra.mrb[0].mxu0 %v918
  %v1528 = vpop.f32.mrb[0].mxu0
  %v1529 = vadd.f32 0.0, %v1528
  %v1530 = vpop.f32.mrb[0].mxu0
  %v1531 = vpop.f32.mrb[0].mxu0
  %v1532 = vadd.f32 0.0, %v1531
  %v1533 = vpop.f32.mrb[0].mxu0
  %1534 = vmatprep.mubr.bf16.mxu0 0
  %1535 = vmatmul.mubr.bf16.gmra.mrb[0].mxu0 %v921
  %v1536 = vpop.f32.mrb[0].mxu0
  %v1537 = vadd.f32 0.0, %v1536
  %v1538 = vpop.f32.mrb[0].mxu0
  %v1539 = vpop.f32.mrb[0].mxu0
  %v1540 = vadd.f32 0.0, %v1539
  %v1541 = vpop.f32.mrb[0].mxu0
  %1542 = vmatprep.mubr.bf16.mxu0 0
  %1543 = vmatmul.mubr.bf16.gmra.mrb[0].mxu0 %v924
  %v1544 = vpop.f32.mrb[0].mxu0
  %v1545 = vadd.f32 0.0, %v1544
  %v1546 = vpop.f32.mrb[0].mxu0
  %v1547 = vpop.f32.mrb[0].mxu0
  %v1548 = vadd.f32 0.0, %v1547
  %v1549 = vpop.f32.mrb[0].mxu0
  %1550 = vmatprep.mubr.bf16.mxu0 0
  %1551 = vmatmul.mubr.bf16.gmra.mrb[0].mxu0 %v927
  %v1552 = vpop.f32.mrb[0].mxu0
  %v1553 = vadd.f32 0.0, %v1552
  %v1554 = vpop.f32.mrb[0].mxu0
  %v1555 = vpop.f32.mrb[0].mxu0
  %v1556 = vadd.f32 0.0, %v1555
  %v1557 = vpop.f32.mrb[0].mxu0
  %1558 = vmatprep.mubr.bf16.mxu0 0
  %1559 = vmatmul.mubr.bf16.gmra.mrb[0].mxu0 %v930
  %v1560 = vpop.f32.mrb[0].mxu0
  %v1561 = vadd.f32 0.0, %v1560
  %v1562 = vpop.f32.mrb[0].mxu0
  %v1563 = vpop.f32.mrb[0].mxu0
  %v1564 = vadd.f32 0.0, %v1563
  %v1565 = vpop.f32.mrb[0].mxu0
  %1566 = vmatprep.mubr.bf16.mxu0 0
  %1567 = vmatmul.mubr.bf16.gmra.mrb[0].mxu0 %v933
  %v1568 = vpop.f32.mrb[0].mxu0
  %v1569 = vadd.f32 0.0, %v1568
  %v1570 = vpop.f32.mrb[0].mxu0
  %v1571 = vpop.f32.mrb[0].mxu0
  %v1572 = vadd.f32 0.0, %v1571
  %v1573 = vpop.f32.mrb[0].mxu0
  %1574 = vmatprep.mubr.bf16.mxu0 0
  %1575 = vmatmul.mubr.bf16.gmra.mrb[0].mxu0 %v936
  %v1576 = vpop.f32.mrb[0].mxu0
  %v1577 = vadd.f32 0.0, %v1576
  %v1578 = vpop.f32.mrb[0].mxu0
  %v1579 = vpop.f32.mrb[0].mxu0
  %v1580 = vadd.f32 0.0, %v1579
  %v1581 = vpop.f32.mrb[0].mxu0
  %1582 = vmatprep.mubr.bf16.mxu0 0
  %1583 = vmatmul.mubr.bf16.gmra.mrb[0].mxu0 %v939
  %v1584 = vpop.f32.mrb[0].mxu0
  %v1585 = vadd.f32 0.0, %v1584
  %v1586 = vpop.f32.mrb[0].mxu0
  %v1587 = vpop.f32.mrb[0].mxu0
  %v1588 = vadd.f32 0.0, %v1587
  %v1589 = vpop.f32.mrb[0].mxu0
  %1590 = vmatprep.mubr.bf16.mxu0 0
  %1591 = vmatmul.mubr.bf16.gmra.mrb[0].mxu0 %v942
  %v1592 = vpop.f32.mrb[0].mxu0
  %v1593 = vadd.f32 0.0, %v1592
  %v1594 = vpop.f32.mrb[0].mxu0
  %v1595 = vpop.f32.mrb[0].mxu0
  %v1596 = vadd.f32 0.0, %v1595
  %v1597 = vpop.f32.mrb[0].mxu0
  %1598 = vmatprep.mubr.bf16.mxu0 0
  %1599 = vmatmul.mubr.bf16.gmra.mrb[0].mxu0 %v945
  %v1600 = vpop.f32.mrb[0].mxu0
  %v1601 = vadd.f32 0.0, %v1600
  %v1602 = vpop.f32.mrb[0].mxu0
  %v1603 = vpop.f32.mrb[0].mxu0
  %v1604 = vadd.f32 0.0, %v1603
  %v1605 = vpop.f32.mrb[0].mxu0
  %1606 = vmatprep.mubr.bf16.mxu0 0
  %1607 = vmatmul.mubr.bf16.gmra.mrb[0].mxu0 %v948
  %v1608 = vpop.f32.mrb[0].mxu0
  %v1609 = vadd.f32 0.0, %v1608
  %v1610 = vpop.f32.mrb[0].mxu0
  %v1611 = vpop.f32.mrb[0].mxu0
  %v1612 = vadd.f32 0.0, %v1611
  %v1613 = vpop.f32.mrb[0].mxu0
  %1614 = vmatprep.mubr.bf16.mxu0 0
  %1615 = vmatmul.mubr.bf16.gmra.mrb[0].mxu0 %v951
  %v1616 = vpop.f32.mrb[0].mxu0
  %v1617 = vadd.f32 0.0, %v1616
  %v1618 = vpop.f32.mrb[0].mxu0
  %v1619 = vpop.f32.mrb[0].mxu0
  %v1620 = vadd.f32 0.0, %v1619
  %v1621 = vpop.f32.mrb[0].mxu0
  %1622 = vmatprep.mubr.bf16.mxu0 0
  %1623 = vmatmul.mubr.bf16.gmra.mrb[0].mxu0 %v954
  %v1624 = vpop.f32.mrb[0].mxu0
  %v1625 = vadd.f32 0.0, %v1624
  %v1626 = vpop.f32.mrb[0].mxu0
  %v1627 = vpop.f32.mrb[0].mxu0
  %v1628 = vadd.f32 0.0, %v1627
  %v1629 = vpop.f32.mrb[0].mxu0
  %1630 = vmatprep.mubr.bf16.mxu0 0
  %1631 = vmatmul.mubr.bf16.gmra.mrb[0].mxu0 %v957
  %v1632 = vpop.f32.mrb[0].mxu0
  %v1633 = vadd.f32 0.0, %v1632
  %v1634 = vpop.f32.mrb[0].mxu0
  %v1635 = vpop.f32.mrb[0].mxu0
  %v1636 = vadd.f32 0.0, %v1635
  %v1637 = vpop.f32.mrb[0].mxu0
  %1638 = vmatprep.mubr.bf16.mxu0 0
  %1639 = vmatmul.mubr.bf16.gmra.mrb[0].mxu0 %v960
  %v1640 = vpop.f32.mrb[0].mxu0
  %v1641 = vadd.f32 0.0, %v1640
  %v1642 = vpop.f32.mrb[0].mxu0
  %v1643 = vpop.f32.mrb[0].mxu0
  %v1644 = vadd.f32 0.0, %v1643
  %v1645 = vpop.f32.mrb[0].mxu0
  %1646 = vmatprep.mubr.bf16.mxu0 0
  %1647 = vmatmul.mubr.bf16.gmra.mrb[0].mxu0 %v963
  %v1648 = vpop.f32.mrb[0].mxu0
  %v1649 = vadd.f32 0.0, %v1648
  %v1650 = vpop.f32.mrb[0].mxu0
  %v1651 = vpop.f32.mrb[0].mxu0
  %v1652 = vadd.f32 0.0, %v1651
  %v1653 = vpop.f32.mrb[0].mxu0
  %1654 = vmatprep.mubr.bf16.mxu0 0
  %1655 = vmatmul.mubr.bf16.gmra.mrb[0].mxu0 %v966
  %v1656 = vpop.f32.mrb[0].mxu0
  %v1657 = vadd.f32 0.0, %v1656
  %v1658 = vpop.f32.mrb[0].mxu0
  %v1659 = vpop.f32.mrb[0].mxu0
  %v1660 = vadd.f32 0.0, %v1659
  %v1661 = vpop.f32.mrb[0].mxu0
  %1662 = vmatprep.mubr.bf16.mxu0 0
  %1663 = vmatmul.mubr.bf16.gmra.mrb[0].mxu0 %v969
  %v1664 = vpop.f32.mrb[0].mxu0
  %v1665 = vadd.f32 0.0, %v1664
  %v1666 = vpop.f32.mrb[0].mxu0
  %v1667 = vpop.f32.mrb[0].mxu0
  %v1668 = vadd.f32 0.0, %v1667
  %v1669 = vpop.f32.mrb[0].mxu0
  %1670 = vmatprep.mubr.bf16.mxu0 0
  %1671 = vmatmul.mubr.bf16.gmra.mrb[0].mxu0 %v972
  %v1672 = vpop.f32.mrb[0].mxu0
  %v1673 = vadd.f32 0.0, %v1672
  %v1674 = vpop.f32.mrb[0].mxu0
  %v1675 = vpop.f32.mrb[0].mxu0
  %v1676 = vadd.f32 0.0, %v1675
  %v1677 = vpop.f32.mrb[0].mxu0
  %1678 = vmatprep.mubr.bf16.mxu0 0
  %1679 = vmatmul.mubr.bf16.gmra.mrb[0].mxu0 %v975
  %v1680 = vpop.f32.mrb[0].mxu0
  %v1681 = vadd.f32 0.0, %v1680
  %v1682 = vpop.f32.mrb[0].mxu0
  %v1683 = vpop.f32.mrb[0].mxu0
  %v1684 = vadd.f32 0.0, %v1683
  %v1685 = vpop.f32.mrb[0].mxu0
  %1686 = vmatprep.mubr.bf16.mxu0 0
  %1687 = vmatmul.mubr.bf16.gmra.mrb[0].mxu0 %v978
  %v1688 = vpop.f32.mrb[0].mxu0
  %v1689 = vadd.f32 0.0, %v1688
  %v1690 = vpop.f32.mrb[0].mxu0
  %v1691 = vpop.f32.mrb[0].mxu0
  %v1692 = vadd.f32 0.0, %v1691
  %v1693 = vpop.f32.mrb[0].mxu0
  %1694 = vmatprep.mubr.bf16.mxu0 0
  %1695 = vmatmul.mubr.bf16.gmra.mrb[0].mxu0 %v981
  %v1696 = vpop.f32.mrb[0].mxu0
  %v1697 = vadd.f32 0.0, %v1696
  %v1698 = vpop.f32.mrb[0].mxu0
  %v1699 = vpop.f32.mrb[0].mxu0
  %v1700 = vadd.f32 0.0, %v1699
  %v1701 = vpop.f32.mrb[0].mxu0
  %1702 = vmatprep.mubr.bf16.mxu0 0
  %1703 = vmatmul.mubr.bf16.gmra.mrb[0].mxu0 %v984
  %v1704 = vpop.f32.mrb[0].mxu0
  %v1705 = vadd.f32 0.0, %v1704
  %v1706 = vpop.f32.mrb[0].mxu0
  %v1707 = vpop.f32.mrb[0].mxu0
  %v1708 = vadd.f32 0.0, %v1707
  %v1709 = vpop.f32.mrb[0].mxu0
  %1710 = vmatprep.mubr.bf16.mxu0 0
  %1711 = vmatmul.mubr.bf16.gmra.mrb[0].mxu0 %v987
  %v1712 = vpop.f32.mrb[0].mxu0
  %v1713 = vadd.f32 0.0, %v1712
  %v1714 = vpop.f32.mrb[0].mxu0
  %v1715 = vpop.f32.mrb[0].mxu0
  %v1716 = vadd.f32 0.0, %v1715
  %v1717 = vpop.f32.mrb[0].mxu0
  %1718 = vmatprep.mubr.bf16.mxu0 0
  %1719 = vmatmul.mubr.bf16.gmra.mrb[0].mxu0 %v990
  %v1720 = vpop.f32.mrb[0].mxu0
  %v1721 = vadd.f32 0.0, %v1720
  %v1722 = vpop.f32.mrb[0].mxu0
  %v1723 = vpop.f32.mrb[0].mxu0
  %v1724 = vadd.f32 0.0, %v1723
  %v1725 = vpop.f32.mrb[0].mxu0
  %1726 = vmatprep.mubr.bf16.mxu0 0
  %1727 = vmatmul.mubr.bf16.gmra.mrb[0].mxu0 %v993
  %v1728 = vpop.f32.mrb[0].mxu0
  %v1729 = vadd.f32 0.0, %v1728
  %v1730 = vpop.f32.mrb[0].mxu0
  %v1731 = vpop.f32.mrb[0].mxu0
  %v1732 = vadd.f32 0.0, %v1731
  %v1733 = vpop.f32.mrb[0].mxu0
  %1734 = vmatprep.mubr.bf16.mxu0 0
  %1735 = vmatmul.mubr.bf16.gmra.mrb[0].mxu0 %v996
  %v1736 = vpop.f32.mrb[0].mxu0
  %v1737 = vadd.f32 0.0, %v1736
  %v1738 = vpop.f32.mrb[0].mxu0
  %v1739 = vpop.f32.mrb[0].mxu0
  %v1740 = vadd.f32 0.0, %v1739
  %v1741 = vpop.f32.mrb[0].mxu0
  %1742 = vmatprep.mubr.bf16.mxu0 0
  %1743 = vmatmul.mubr.bf16.gmra.mrb[0].mxu0 %v999
  %v1744 = vpop.f32.mrb[0].mxu0
  %v1745 = vadd.f32 0.0, %v1744
  %v1746 = vpop.f32.mrb[0].mxu0
  %v1747 = vpop.f32.mrb[0].mxu0
  %v1748 = vadd.f32 0.0, %v1747
  %v1749 = vpop.f32.mrb[0].mxu0
  %1750 = vmatprep.mubr.bf16.mxu0 0
  %1751 = vmatmul.mubr.bf16.gmra.mrb[0].mxu0 %v1002
  %v1752 = vpop.f32.mrb[0].mxu0
  %v1753 = vadd.f32 0.0, %v1752
  %v1754 = vpop.f32.mrb[0].mxu0
  %v1755 = vpop.f32.mrb[0].mxu0
  %v1756 = vadd.f32 0.0, %v1755
  %v1757 = vpop.f32.mrb[0].mxu0
  %1758 = vmatprep.mubr.bf16.mxu0 0
  %1759 = vmatmul.mubr.bf16.gmra.mrb[0].mxu0 %v1005
  %v1760 = vpop.f32.mrb[0].mxu0
  %v1761 = vadd.f32 0.0, %v1760
  %v1762 = vpop.f32.mrb[0].mxu0
  %v1763 = vpop.f32.mrb[0].mxu0
  %v1764 = vadd.f32 0.0, %v1763
  %v1765 = vpop.f32.mrb[0].mxu0
  %1766 = vmatprep.mubr.bf16.mxu0 0
  %1767 = vmatmul.mubr.bf16.gmra.mrb[0].mxu0 %v1008
  %v1768 = vpop.f32.mrb[0].mxu0
  %v1769 = vadd.f32 0.0, %v1768
  %v1770 = vpop.f32.mrb[0].mxu0
  %v1771 = vpop.f32.mrb[0].mxu0
  %v1772 = vadd.f32 0.0, %v1771
  %v1773 = vpop.f32.mrb[0].mxu0
  %1774 = vmatprep.mubr.bf16.mxu0 0
  %1775 = vmatmul.mubr.bf16.gmra.mrb[0].mxu0 %v1011
  %v1776 = vpop.f32.mrb[0].mxu0
  %v1777 = vadd.f32 0.0, %v1776
  %v1778 = vpop.f32.mrb[0].mxu0
  %v1779 = vpop.f32.mrb[0].mxu0
  %v1780 = vadd.f32 0.0, %v1779
  %v1781 = vpop.f32.mrb[0].mxu0
  %1782 = vmatprep.mubr.bf16.mxu0 0
  %1783 = vmatmul.mubr.bf16.gmra.mrb[0].mxu0 %v1014
  %v1784 = vpop.f32.mrb[0].mxu0
  %v1785 = vadd.f32 0.0, %v1784
  %v1786 = vpop.f32.mrb[0].mxu0
  %v1787 = vpop.f32.mrb[0].mxu0
  %v1788 = vadd.f32 0.0, %v1787
  %v1789 = vpop.f32.mrb[0].mxu0
  %1790 = vmatprep.mubr.bf16.mxu0 0
  %1791 = vmatmul.mubr.bf16.gmra.mrb[0].mxu0 %v1017
  %v1792 = vpop.f32.mrb[0].mxu0
  %v1793 = vadd.f32 0.0, %v1792
  %v1794 = vpop.f32.mrb[0].mxu0
  %v1795 = vpop.f32.mrb[0].mxu0
  %v1796 = vadd.f32 0.0, %v1795
  %v1797 = vpop.f32.mrb[0].mxu0
  %1798 = vmatprep.mubr.bf16.mxu0 0
  %1799 = vmatmul.mubr.bf16.gmra.mrb[0].mxu0 %v1020
  %v1800 = vpop.f32.mrb[0].mxu0
  %v1801 = vadd.f32 0.0, %v1800
  %v1802 = vpop.f32.mrb[0].mxu0
  %v1803 = vpop.f32.mrb[0].mxu0
  %v1804 = vadd.f32 0.0, %v1803
  %v1805 = vpop.f32.mrb[0].mxu0
  %1806 = vmatprep.mubr.bf16.mxu0 0
  %1807 = vmatmul.mubr.bf16.gmra.mrb[0].mxu0 %v1023
  %v1808 = vpop.f32.mrb[0].mxu0
  %v1809 = vadd.f32 0.0, %v1808
  %v1810 = vpop.f32.mrb[0].mxu0
  %v1811 = vpop.f32.mrb[0].mxu0
  %v1812 = vadd.f32 0.0, %v1811
  %v1813 = vpop.f32.mrb[0].mxu0
  %1814 = vmatprep.mubr.bf16.mxu0 0
  %1815 = vmatmul.mubr.bf16.gmra.mrb[0].mxu0 %v1026
  %v1816 = vpop.f32.mrb[0].mxu0
  %v1817 = vadd.f32 0.0, %v1816
  %v1818 = vpop.f32.mrb[0].mxu0
  %v1819 = vpop.f32.mrb[0].mxu0
  %v1820 = vadd.f32 0.0, %v1819
  %v1821 = vpop.f32.mrb[0].mxu0
  %1822 = vmatprep.mubr.bf16.mxu0 0
  %1823 = vmatmul.mubr.bf16.gmra.mrb[0].mxu0 %v1029
  %v1824 = vpop.f32.mrb[0].mxu0
  %v1825 = vadd.f32 0.0, %v1824
  %v1826 = vpop.f32.mrb[0].mxu0
  %v1827 = vpop.f32.mrb[0].mxu0
  %v1828 = vadd.f32 0.0, %v1827
  %v1829 = vpop.f32.mrb[0].mxu0
  %1830 = vmatprep.mubr.bf16.mxu0 0
  %1831 = vmatmul.mubr.bf16.gmra.mrb[0].mxu0 %v1032
  %v1832 = vpop.f32.mrb[0].mxu0
  %v1833 = vadd.f32 0.0, %v1832
  %v1834 = vpop.f32.mrb[0].mxu0
  %v1835 = vpop.f32.mrb[0].mxu0
  %v1836 = vadd.f32 0.0, %v1835
  %v1837 = vpop.f32.mrb[0].mxu0
  %1838 = vmatprep.mubr.bf16.mxu0 0
  %1839 = vmatmul.mubr.bf16.gmra.mrb[0].mxu0 %v1035
  %v1840 = vpop.f32.mrb[0].mxu0
  %v1841 = vadd.f32 0.0, %v1840
  %v1842 = vpop.f32.mrb[0].mxu0
  %v1843 = vpop.f32.mrb[0].mxu0
  %v1844 = vadd.f32 0.0, %v1843
  %v1845 = vpop.f32.mrb[0].mxu0
  %1846 = vmatprep.mubr.bf16.mxu0 0
  %1847 = vmatmul.mubr.bf16.gmra.mrb[0].mxu0 %v1038
  %v1848 = vpop.f32.mrb[0].mxu0
  %v1849 = vadd.f32 0.0, %v1848
  %v1850 = vpop.f32.mrb[0].mxu0
  %v1851 = vpop.f32.mrb[0].mxu0
  %v1852 = vadd.f32 0.0, %v1851
  %v1853 = vpop.f32.mrb[0].mxu0
  %1854 = vmatprep.mubr.bf16.mxu0 0
  %1855 = vmatmul.mubr.bf16.gmra.mrb[0].mxu0 %v1041
  %v1856 = vpop.f32.mrb[0].mxu0
  %v1857 = vadd.f32 0.0, %v1856
  %v1858 = vpop.f32.mrb[0].mxu0
  %v1859 = vpop.f32.mrb[0].mxu0
  %v1860 = vadd.f32 0.0, %v1859
  %v1861 = vpop.f32.mrb[0].mxu0
  %1862 = vmatprep.mubr.bf16.mxu0 0
  %1863 = vmatmul.mubr.bf16.gmra.mrb[0].mxu0 %v1044
  %v1864 = vpop.f32.mrb[0].mxu0
  %v1865 = vadd.f32 0.0, %v1864
  %v1866 = vpop.f32.mrb[0].mxu0
  %v1867 = vpop.f32.mrb[0].mxu0
  %v1868 = vadd.f32 0.0, %v1867
  %v1869 = vpop.f32.mrb[0].mxu0
  %1870 = vmatprep.mubr.bf16.mxu0 0
  %1871 = vmatmul.mubr.bf16.gmra.mrb[0].mxu0 %v1047
  %v1872 = vpop.f32.mrb[0].mxu0
  %v1873 = vadd.f32 0.0, %v1872
  %v1874 = vpop.f32.mrb[0].mxu0
  %v1875 = vpop.f32.mrb[0].mxu0
  %v1876 = vadd.f32 0.0, %v1875
  %v1877 = vpop.f32.mrb[0].mxu0
  %1878 = vmatprep.mubr.bf16.mxu0 0
  %1879 = vmatmul.mubr.bf16.gmra.mrb[0].mxu0 %v1050
  %v1880 = vpop.f32.mrb[0].mxu0
  %v1881 = vadd.f32 0.0, %v1880
  %v1882 = vpop.f32.mrb[0].mxu0
  %v1883 = vpop.f32.mrb[0].mxu0
  %v1884 = vadd.f32 0.0, %v1883
  %v1885 = vpop.f32.mrb[0].mxu0
  %1886 = vmatprep.mubr.bf16.mxu0 0
  %1887 = vmatmul.mubr.bf16.gmra.mrb[0].mxu0 %v1053
  %v1888 = vpop.f32.mrb[0].mxu0
  %v1889 = vadd.f32 0.0, %v1888
  %v1890 = vpop.f32.mrb[0].mxu0
  %v1891 = vpop.f32.mrb[0].mxu0
  %v1892 = vadd.f32 0.0, %v1891
  %v1893 = vpop.f32.mrb[0].mxu0
  %1894 = vdwg.mxu0
  %v1895 = vmax.f32 %v1097, %v1297
  %v1896 = vmax.f32 %v1100, %v1300
  %v1897 = vmax.f32 %v1105, %v1305
  %v1898 = vmax.f32 %v1108, %v1308
  %v1899 = vmax.f32 %v1113, %v1313
  %v1900 = vmax.f32 %v1116, %v1316
  %v1901 = vmax.f32 %v1121, %v1321
  %v1902 = vmax.f32 %v1124, %v1324
  %v1903 = vmax.f32 %v1129, %v1329
  %v1904 = vmax.f32 %v1132, %v1332
  %v1905 = vmax.f32 %v1137, %v1337
  %v1906 = vmax.f32 %v1140, %v1340
  %v1907 = vmax.f32 %v1145, %v1345
  %v1908 = vmax.f32 %v1148, %v1348
  %v1909 = vmax.f32 %v1153, %v1353
  %v1910 = vmax.f32 %v1156, %v1356
  %v1911 = vmax.f32 %v1161, %v1361
  %v1912 = vmax.f32 %v1164, %v1364
  %v1913 = vmax.f32 %v1169, %v1369
  %v1914 = vmax.f32 %v1172, %v1372
  %v1915 = vmax.f32 %v1177, %v1377
  %v1916 = vmax.f32 %v1180, %v1380
  %v1917 = vmax.f32 %v1185, %v1385
  %v1918 = vmax.f32 %v1188, %v1388
  %v1919 = vmax.f32 %v1193, %v1393
  %v1920 = vmax.f32 %v1196, %v1396
  %v1921 = vmax.f32 %v1201, %v1401
  %v1922 = vmax.f32 %v1204, %v1404
  %v1923 = vmax.f32 %v1209, %v1409
  %v1924 = vmax.f32 %v1212, %v1412
  %v1925 = vmax.f32 %v1217, %v1417
  %v1926 = vmax.f32 %v1220, %v1420
  %v1927 = vmax.f32 %v1225, %v1425
  %v1928 = vmax.f32 %v1228, %v1428
  %v1929 = vmax.f32 %v1233, %v1433
  %v1930 = vmax.f32 %v1236, %v1436
  %v1931 = vmax.f32 %v1241, %v1441
  %v1932 = vmax.f32 %v1244, %v1444
  %v1933 = vmax.f32 %v1249, %v1449
  %v1934 = vmax.f32 %v1252, %v1452
  %v1935 = vmax.f32 %v1257, %v1457
  %v1936 = vmax.f32 %v1260, %v1460
  %v1937 = vmax.f32 %v1265, %v1465
  %v1938 = vmax.f32 %v1268, %v1468
  %v1939 = vmax.f32 %v1273, %v1473
  %v1940 = vmax.f32 %v1276, %v1476
  %v1941 = vmax.f32 %v1281, %v1481
  %v1942 = vmax.f32 %v1284, %v1484
  %v1943 = vmax.f32 %v1289, %v1489
  %v1944 = vmax.f32 %v1292, %v1492
  %v1945 = vmax.f32 %v1497, %v1697
  %v1946 = vmax.f32 %v1500, %v1700
  %v1947 = vmax.f32 %v1505, %v1705
  %v1948 = vmax.f32 %v1508, %v1708
  %v1949 = vmax.f32 %v1513, %v1713
  %v1950 = vmax.f32 %v1516, %v1716
  %v1951 = vmax.f32 %v1521, %v1721
  %v1952 = vmax.f32 %v1524, %v1724
  %v1953 = vmax.f32 %v1529, %v1729
  %v1954 = vmax.f32 %v1532, %v1732
  %v1955 = vmax.f32 %v1537, %v1737
  %v1956 = vmax.f32 %v1540, %v1740
  %v1957 = vmax.f32 %v1545, %v1745
  %v1958 = vmax.f32 %v1548, %v1748
  %v1959 = vmax.f32 %v1553, %v1753
  %v1960 = vmax.f32 %v1556, %v1756
  %v1961 = vmax.f32 %v1561, %v1761
  %v1962 = vmax.f32 %v1564, %v1764
  %v1963 = vmax.f32 %v1569, %v1769
  %v1964 = vmax.f32 %v1572, %v1772
  %v1965 = vmax.f32 %v1577, %v1777
  %v1966 = vmax.f32 %v1580, %v1780
  %v1967 = vmax.f32 %v1585, %v1785
  %v1968 = vmax.f32 %v1588, %v1788
  %v1969 = vmax.f32 %v1593, %v1793
  %v1970 = vmax.f32 %v1596, %v1796
  %v1971 = vmax.f32 %v1601, %v1801
  %v1972 = vmax.f32 %v1604, %v1804
  %v1973 = vmax.f32 %v1609, %v1809
  %v1974 = vmax.f32 %v1612, %v1812
  %v1975 = vmax.f32 %v1617, %v1817
  %v1976 = vmax.f32 %v1620, %v1820
  %v1977 = vmax.f32 %v1625, %v1825
  %v1978 = vmax.f32 %v1628, %v1828
  %v1979 = vmax.f32 %v1633, %v1833
  %v1980 = vmax.f32 %v1636, %v1836
  %v1981 = vmax.f32 %v1641, %v1841
  %v1982 = vmax.f32 %v1644, %v1844
  %v1983 = vmax.f32 %v1649, %v1849
  %v1984 = vmax.f32 %v1652, %v1852
  %v1985 = vmax.f32 %v1657, %v1857
  %v1986 = vmax.f32 %v1660, %v1860
  %v1987 = vmax.f32 %v1665, %v1865
  %v1988 = vmax.f32 %v1668, %v1868
  %v1989 = vmax.f32 %v1673, %v1873
  %v1990 = vmax.f32 %v1676, %v1876
  %v1991 = vmax.f32 %v1681, %v1881
  %v1992 = vmax.f32 %v1684, %v1884
  %v1993 = vmax.f32 %v1689, %v1889
  %v1994 = vmax.f32 %v1692, %v1892
  %v1995 = vmax.f32 %v1895, %v1945
  %v1996 = vmax.f32 %v1896, %v1946
  %v1997 = vmax.f32 %v1897, %v1947
  %v1998 = vmax.f32 %v1898, %v1948
  %v1999 = vmax.f32 %v1899, %v1949
  %v2000 = vmax.f32 %v1900, %v1950
  %v2001 = vmax.f32 %v1901, %v1951
  %v2002 = vmax.f32 %v1902, %v1952
  %v2003 = vmax.f32 %v1903, %v1953
  %v2004 = vmax.f32 %v1904, %v1954
  %v2005 = vmax.f32 %v1905, %v1955
  %v2006 = vmax.f32 %v1906, %v1956
  %v2007 = vmax.f32 %v1907, %v1957
  %v2008 = vmax.f32 %v1908, %v1958
  %v2009 = vmax.f32 %v1909, %v1959
  %v2010 = vmax.f32 %v1910, %v1960
  %v2011 = vmax.f32 %v1911, %v1961
  %v2012 = vmax.f32 %v1912, %v1962
  %v2013 = vmax.f32 %v1913, %v1963
  %v2014 = vmax.f32 %v1914, %v1964
  %v2015 = vmax.f32 %v1915, %v1965
  %v2016 = vmax.f32 %v1916, %v1966
  %v2017 = vmax.f32 %v1917, %v1967
  %v2018 = vmax.f32 %v1918, %v1968
  %v2019 = vmax.f32 %v1919, %v1969
  %v2020 = vmax.f32 %v1920, %v1970
  %v2021 = vmax.f32 %v1921, %v1971
  %v2022 = vmax.f32 %v1922, %v1972
  %v2023 = vmax.f32 %v1923, %v1973
  %v2024 = vmax.f32 %v1924, %v1974
  %v2025 = vmax.f32 %v1925, %v1975
  %v2026 = vmax.f32 %v1926, %v1976
  %v2027 = vmax.f32 %v1927, %v1977
  %v2028 = vmax.f32 %v1928, %v1978
  %v2029 = vmax.f32 %v1929, %v1979
  %v2030 = vmax.f32 %v1930, %v1980
  %v2031 = vmax.f32 %v1931, %v1981
  %v2032 = vmax.f32 %v1932, %v1982
  %v2033 = vmax.f32 %v1933, %v1983
  %v2034 = vmax.f32 %v1934, %v1984
  %v2035 = vmax.f32 %v1935, %v1985
  %v2036 = vmax.f32 %v1936, %v1986
  %v2037 = vmax.f32 %v1937, %v1987
  %v2038 = vmax.f32 %v1938, %v1988
  %v2039 = vmax.f32 %v1939, %v1989
  %v2040 = vmax.f32 %v1940, %v1990
  %v2041 = vmax.f32 %v1941, %v1991
  %v2042 = vmax.f32 %v1942, %v1992
  %v2043 = vmax.f32 %v1943, %v1993
  %v2044 = vmax.f32 %v1944, %v1994
  %v2045 = vld [vmem:[%s2] sm:$0x1]
  %v2047 = vlaneseq
  %v2048 = vshrl.u32 %v2047, 7
  %v2049 = vsub.s32 0, %v2048
  %v2050 = vrot.slane %v2045, %v2049
  %v2052 = vadd.f32 %v1995, %v2050
  %v2053 = vadd.f32 %v1996, %v2050
  %v2054 = vadd.f32 %v1997, %v2050
  %v2055 = vadd.f32 %v1998, %v2050
  %v2056 = vadd.f32 %v1999, %v2050
  %v2057 = vadd.f32 %v2000, %v2050
  %v2058 = vadd.f32 %v2001, %v2050
  %v2059 = vadd.f32 %v2002, %v2050
  %v2060 = vadd.f32 %v2003, %v2050
  %v2061 = vadd.f32 %v2004, %v2050
  %v2062 = vadd.f32 %v2005, %v2050
  %v2063 = vadd.f32 %v2006, %v2050
  %v2064 = vadd.f32 %v2007, %v2050
  %v2065 = vadd.f32 %v2008, %v2050
  %v2066 = vadd.f32 %v2009, %v2050
  %v2067 = vadd.f32 %v2010, %v2050
  %v2068 = vadd.f32 %v2011, %v2050
  %v2069 = vadd.f32 %v2012, %v2050
  %v2070 = vadd.f32 %v2013, %v2050
  %v2071 = vadd.f32 %v2014, %v2050
  %v2072 = vadd.f32 %v2015, %v2050
  %v2073 = vadd.f32 %v2016, %v2050
  %v2074 = vadd.f32 %v2017, %v2050
  %v2075 = vadd.f32 %v2018, %v2050
  %v2076 = vadd.f32 %v2019, %v2050
  %v2077 = vadd.f32 %v2020, %v2050
  %v2078 = vadd.f32 %v2021, %v2050
  %v2079 = vadd.f32 %v2022, %v2050
  %v2080 = vadd.f32 %v2023, %v2050
  %v2081 = vadd.f32 %v2024, %v2050
  %v2082 = vadd.f32 %v2025, %v2050
  %v2083 = vadd.f32 %v2026, %v2050
  %v2084 = vadd.f32 %v2027, %v2050
  %v2085 = vadd.f32 %v2028, %v2050
  %v2086 = vadd.f32 %v2029, %v2050
  %v2087 = vadd.f32 %v2030, %v2050
  %v2088 = vadd.f32 %v2031, %v2050
  %v2089 = vadd.f32 %v2032, %v2050
  %v2090 = vadd.f32 %v2033, %v2050
  %v2091 = vadd.f32 %v2034, %v2050
  %v2092 = vadd.f32 %v2035, %v2050
  %v2093 = vadd.f32 %v2036, %v2050
  %v2094 = vadd.f32 %v2037, %v2050
  %v2095 = vadd.f32 %v2038, %v2050
  %v2096 = vadd.f32 %v2039, %v2050
  %v2097 = vadd.f32 %v2040, %v2050
  %v2098 = vadd.f32 %v2041, %v2050
  %v2099 = vadd.f32 %v2042, %v2050
  %v2100 = vadd.f32 %v2043, %v2050
  %v2101 = vadd.f32 %v2044, %v2050
  %v2102 = vmax.f32 %v2052, 0.0
  %v2103 = vmax.f32 %v2053, 0.0
  %v2104 = vmax.f32 %v2054, 0.0
  %v2105 = vmax.f32 %v2055, 0.0
  %v2106 = vmax.f32 %v2056, 0.0
  %v2107 = vmax.f32 %v2057, 0.0
  %v2108 = vmax.f32 %v2058, 0.0
  %v2109 = vmax.f32 %v2059, 0.0
  %v2110 = vmax.f32 %v2060, 0.0
  %v2111 = vmax.f32 %v2061, 0.0
  %v2112 = vmax.f32 %v2062, 0.0
  %v2113 = vmax.f32 %v2063, 0.0
  %v2114 = vmax.f32 %v2064, 0.0
  %v2115 = vmax.f32 %v2065, 0.0
  %v2116 = vmax.f32 %v2066, 0.0
  %v2117 = vmax.f32 %v2067, 0.0
  %v2118 = vmax.f32 %v2068, 0.0
  %v2119 = vmax.f32 %v2069, 0.0
  %v2120 = vmax.f32 %v2070, 0.0
  %v2121 = vmax.f32 %v2071, 0.0
  %v2122 = vmax.f32 %v2072, 0.0
  %v2123 = vmax.f32 %v2073, 0.0
  %v2124 = vmax.f32 %v2074, 0.0
  %v2125 = vmax.f32 %v2075, 0.0
  %v2126 = vmax.f32 %v2076, 0.0
  %v2127 = vmax.f32 %v2077, 0.0
  %v2128 = vmax.f32 %v2078, 0.0
  %v2129 = vmax.f32 %v2079, 0.0
  %v2130 = vmax.f32 %v2080, 0.0
  %v2131 = vmax.f32 %v2081, 0.0
  %v2132 = vmax.f32 %v2082, 0.0
  %v2133 = vmax.f32 %v2083, 0.0
  %v2134 = vmax.f32 %v2084, 0.0
  %v2135 = vmax.f32 %v2085, 0.0
  %v2136 = vmax.f32 %v2086, 0.0
  %v2137 = vmax.f32 %v2087, 0.0
  %v2138 = vmax.f32 %v2088, 0.0
  %v2139 = vmax.f32 %v2089, 0.0
  %v2140 = vmax.f32 %v2090, 0.0
  %v2141 = vmax.f32 %v2091, 0.0
  %v2142 = vmax.f32 %v2092, 0.0
  %v2143 = vmax.f32 %v2093, 0.0
  %v2144 = vmax.f32 %v2094, 0.0
  %v2145 = vmax.f32 %v2095, 0.0
  %v2146 = vmax.f32 %v2096, 0.0
  %v2147 = vmax.f32 %v2097, 0.0
  %v2148 = vmax.f32 %v2098, 0.0
  %v2149 = vmax.f32 %v2099, 0.0
  %v2150 = vmax.f32 %v2100, 0.0
  %v2151 = vmax.f32 %v2101, 0.0
  %v2152 = vpack.c.bf16 %v2103, %v2102
  %v2153 = vpack.c.bf16 %v2105, %v2104
  %v2154 = vpack.c.bf16 %v2107, %v2106
  %v2155 = vpack.c.bf16 %v2109, %v2108
  %v2156 = vpack.c.bf16 %v2111, %v2110
  %v2157 = vpack.c.bf16 %v2113, %v2112
  %v2158 = vpack.c.bf16 %v2115, %v2114
  %v2159 = vpack.c.bf16 %v2117, %v2116
  %v2160 = vpack.c.bf16 %v2119, %v2118
  %v2161 = vpack.c.bf16 %v2121, %v2120
  %v2162 = vpack.c.bf16 %v2123, %v2122
  %v2163 = vpack.c.bf16 %v2125, %v2124
  %v2164 = vpack.c.bf16 %v2127, %v2126
  %v2165 = vpack.c.bf16 %v2129, %v2128
  %v2166 = vpack.c.bf16 %v2131, %v2130
  %v2167 = vpack.c.bf16 %v2133, %v2132
  %v2168 = vpack.c.bf16 %v2135, %v2134
  %v2169 = vpack.c.bf16 %v2137, %v2136
  %v2170 = vpack.c.bf16 %v2139, %v2138
  %v2171 = vpack.c.bf16 %v2141, %v2140
  %v2172 = vpack.c.bf16 %v2143, %v2142
  %v2173 = vpack.c.bf16 %v2145, %v2144
  %v2174 = vpack.c.bf16 %v2147, %v2146
  %v2175 = vpack.c.bf16 %v2149, %v2148
  %v2176 = vpack.c.bf16 %v2151, %v2150
  %v2202 = vunpack.c.l.b16 %v2152
  %v2203 = vunpack.c.h.b16 %v2152
  %v2204 = vunpack.c.l.b16 %v2153
  %v2205 = vunpack.c.h.b16 %v2153
  %v2206 = vunpack.c.l.b16 %v2154
  %v2207 = vunpack.c.h.b16 %v2154
  %v2208 = vunpack.c.l.b16 %v2155
  %v2209 = vunpack.c.h.b16 %v2155
  %v2210 = vunpack.c.l.b16 %v2156
  %v2211 = vunpack.c.h.b16 %v2156
  %v2212 = vunpack.c.l.b16 %v2157
  %v2213 = vunpack.c.h.b16 %v2157
  %v2214 = vunpack.c.l.b16 %v2158
  %v2215 = vunpack.c.h.b16 %v2158
  %v2216 = vunpack.c.l.b16 %v2159
  %v2217 = vunpack.c.h.b16 %v2159
  %v2218 = vunpack.c.l.b16 %v2160
  %v2219 = vunpack.c.h.b16 %v2160
  %v2220 = vunpack.c.l.b16 %v2161
  %v2221 = vunpack.c.h.b16 %v2161
  %v2222 = vunpack.c.l.b16 %v2162
  %v2223 = vunpack.c.h.b16 %v2162
  %v2224 = vunpack.c.l.b16 %v2163
  %v2225 = vunpack.c.h.b16 %v2163
  %v2226 = vunpack.c.l.b16 %v2164
  %v2227 = vunpack.c.h.b16 %v2164
  %v2228 = vunpack.c.l.b16 %v2165
  %v2229 = vunpack.c.h.b16 %v2165
  %v2230 = vunpack.c.l.b16 %v2166
  %v2231 = vunpack.c.h.b16 %v2166
  %v2232 = vunpack.c.l.b16 %v2167
  %v2233 = vunpack.c.h.b16 %v2167
  %v2234 = vunpack.c.l.b16 %v2168
  %v2235 = vunpack.c.h.b16 %v2168
  %v2236 = vunpack.c.l.b16 %v2169
  %v2237 = vunpack.c.h.b16 %v2169
  %v2238 = vunpack.c.l.b16 %v2170
  %v2239 = vunpack.c.h.b16 %v2170
  %v2240 = vunpack.c.l.b16 %v2171
  %v2241 = vunpack.c.h.b16 %v2171
  %v2242 = vunpack.c.l.b16 %v2172
  %v2243 = vunpack.c.h.b16 %v2172
  %v2244 = vunpack.c.l.b16 %v2173
  %v2245 = vunpack.c.h.b16 %v2173
  %v2246 = vunpack.c.l.b16 %v2174
  %v2247 = vunpack.c.h.b16 %v2174
  %v2248 = vunpack.c.l.b16 %v2175
  %v2249 = vunpack.c.h.b16 %v2175
  %v2250 = vunpack.c.l.b16 %v2176
  %v2251 = vunpack.c.h.b16 %v2176
  %v2252 = vpack.c.b16 %v2202, %v2202
  %v2253 = vpack.c.b16 %v2203, %v2203
  %v2254 = vpack.c.b16 %v2204, %v2204
  %v2255 = vpack.c.b16 %v2205, %v2205
  %v2256 = vpack.c.b16 %v2206, %v2206
  %v2257 = vpack.c.b16 %v2207, %v2207
  %v2258 = vpack.c.b16 %v2208, %v2208
  %v2259 = vpack.c.b16 %v2209, %v2209
  %v2260 = vpack.c.b16 %v2210, %v2210
  %v2261 = vpack.c.b16 %v2211, %v2211
  %v2262 = vpack.c.b16 %v2212, %v2212
  %v2263 = vpack.c.b16 %v2213, %v2213
  %v2264 = vpack.c.b16 %v2214, %v2214
  %v2265 = vpack.c.b16 %v2215, %v2215
  %v2266 = vpack.c.b16 %v2216, %v2216
  %v2267 = vpack.c.b16 %v2217, %v2217
  %v2268 = vpack.c.b16 %v2218, %v2218
  %v2269 = vpack.c.b16 %v2219, %v2219
  %v2270 = vpack.c.b16 %v2220, %v2220
  %v2271 = vpack.c.b16 %v2221, %v2221
  %v2272 = vpack.c.b16 %v2222, %v2222
  %v2273 = vpack.c.b16 %v2223, %v2223
  %v2274 = vpack.c.b16 %v2224, %v2224
  %v2275 = vpack.c.b16 %v2225, %v2225
  %v2276 = vpack.c.b16 %v2226, %v2226
  %v2277 = vpack.c.b16 %v2227, %v2227
  %v2278 = vpack.c.b16 %v2228, %v2228
  %v2279 = vpack.c.b16 %v2229, %v2229
  %v2280 = vpack.c.b16 %v2230, %v2230
  %v2281 = vpack.c.b16 %v2231, %v2231
  %v2282 = vpack.c.b16 %v2232, %v2232
  %v2283 = vpack.c.b16 %v2233, %v2233
  %v2284 = vpack.c.b16 %v2234, %v2234
  %v2285 = vpack.c.b16 %v2235, %v2235
  %v2286 = vpack.c.b16 %v2236, %v2236
  %v2287 = vpack.c.b16 %v2237, %v2237
  %v2288 = vpack.c.b16 %v2238, %v2238
  %v2289 = vpack.c.b16 %v2239, %v2239
  %v2290 = vpack.c.b16 %v2240, %v2240
  %v2291 = vpack.c.b16 %v2241, %v2241
  %v2292 = vpack.c.b16 %v2242, %v2242
  %v2293 = vpack.c.b16 %v2243, %v2243
  %v2294 = vpack.c.b16 %v2244, %v2244
  %v2295 = vpack.c.b16 %v2245, %v2245
  %v2296 = vpack.c.b16 %v2246, %v2246
  %v2297 = vpack.c.b16 %v2247, %v2247
  %v2298 = vpack.c.b16 %v2248, %v2248
  %v2299 = vpack.c.b16 %v2249, %v2249
  %v2300 = vpack.c.b16 %v2250, %v2250
  %v2301 = vpack.c.b16 %v2251, %v2251
  %vm2352 = vcmask 44032
  %2353 = vst.msk [vmem:[%s3] sm:$0xf] %vm2352, %v2252
  %2354 = vst.msk [vmem:[%s3 + $0x4] sm:$0xf] %vm2352, %v2253
  %2355 = vst.msk [vmem:[%s3 + $0x8] sm:$0xf] %vm2352, %v2254
  %2356 = vst.msk [vmem:[%s3 + $0xc] sm:$0xf] %vm2352, %v2255
  %2357 = vst.msk [vmem:[%s3 + $0x10] sm:$0xf] %vm2352, %v2256
  %2358 = vst.msk [vmem:[%s3 + $0x14] sm:$0xf] %vm2352, %v2257
  %2359 = vst.msk [vmem:[%s3 + $0x18] sm:$0xf] %vm2352, %v2258
  %2360 = vst.msk [vmem:[%s3 + $0x1c] sm:$0xf] %vm2352, %v2259
  %2361 = vst.msk [vmem:[%s3 + $0x20] sm:$0xf] %vm2352, %v2260
  %2362 = vst.msk [vmem:[%s3 + $0x24] sm:$0xf] %vm2352, %v2261
  %2363 = vst.msk [vmem:[%s3 + $0x28] sm:$0xf] %vm2352, %v2262
  %2364 = vst.msk [vmem:[%s3 + $0x2c] sm:$0xf] %vm2352, %v2263
  %2365 = vst.msk [vmem:[%s3 + $0x30] sm:$0xf] %vm2352, %v2264
  %2366 = vst.msk [vmem:[%s3 + $0x34] sm:$0xf] %vm2352, %v2265
  %2367 = vst.msk [vmem:[%s3 + $0x38] sm:$0xf] %vm2352, %v2266
  %2368 = vst.msk [vmem:[%s3 + $0x3c] sm:$0xf] %vm2352, %v2267
  %2369 = vst.msk [vmem:[%s3 + $0x40] sm:$0xf] %vm2352, %v2268
  %2370 = vst.msk [vmem:[%s3 + $0x44] sm:$0xf] %vm2352, %v2269
  %2371 = vst.msk [vmem:[%s3 + $0x48] sm:$0xf] %vm2352, %v2270
  %2372 = vst.msk [vmem:[%s3 + $0x4c] sm:$0xf] %vm2352, %v2271
  %2373 = vst.msk [vmem:[%s3 + $0x50] sm:$0xf] %vm2352, %v2272
  %2374 = vst.msk [vmem:[%s3 + $0x54] sm:$0xf] %vm2352, %v2273
  %2375 = vst.msk [vmem:[%s3 + $0x58] sm:$0xf] %vm2352, %v2274
  %2376 = vst.msk [vmem:[%s3 + $0x5c] sm:$0xf] %vm2352, %v2275
  %2377 = vst.msk [vmem:[%s3 + $0x60] sm:$0xf] %vm2352, %v2276
  %2378 = vst.msk [vmem:[%s3 + $0x64] sm:$0xf] %vm2352, %v2277
  %2379 = vst.msk [vmem:[%s3 + $0x68] sm:$0xf] %vm2352, %v2278
  %2380 = vst.msk [vmem:[%s3 + $0x6c] sm:$0xf] %vm2352, %v2279
  %2381 = vst.msk [vmem:[%s3 + $0x70] sm:$0xf] %vm2352, %v2280
  %2382 = vst.msk [vmem:[%s3 + $0x74] sm:$0xf] %vm2352, %v2281
  %2383 = vst.msk [vmem:[%s3 + $0x78] sm:$0xf] %vm2352, %v2282
  %2384 = vst.msk [vmem:[%s3 + $0x7c] sm:$0xf] %vm2352, %v2283
  %2385 = vst.msk [vmem:[%s3 + $0x80] sm:$0xf] %vm2352, %v2284
  %2386 = vst.msk [vmem:[%s3 + $0x84] sm:$0xf] %vm2352, %v2285
  %2387 = vst.msk [vmem:[%s3 + $0x88] sm:$0xf] %vm2352, %v2286
  %2388 = vst.msk [vmem:[%s3 + $0x8c] sm:$0xf] %vm2352, %v2287
  %2389 = vst.msk [vmem:[%s3 + $0x90] sm:$0xf] %vm2352, %v2288
  %2390 = vst.msk [vmem:[%s3 + $0x94] sm:$0xf] %vm2352, %v2289
  %2391 = vst.msk [vmem:[%s3 + $0x98] sm:$0xf] %vm2352, %v2290
  %2392 = vst.msk [vmem:[%s3 + $0x9c] sm:$0xf] %vm2352, %v2291
  %2393 = vst.msk [vmem:[%s3 + $0xa0] sm:$0xf] %vm2352, %v2292
  %2394 = vst.msk [vmem:[%s3 + $0xa4] sm:$0xf] %vm2352, %v2293
  %2395 = vst.msk [vmem:[%s3 + $0xa8] sm:$0xf] %vm2352, %v2294
  %2396 = vst.msk [vmem:[%s3 + $0xac] sm:$0xf] %vm2352, %v2295
  %2397 = vst.msk [vmem:[%s3 + $0xb0] sm:$0xf] %vm2352, %v2296
  %2398 = vst.msk [vmem:[%s3 + $0xb4] sm:$0xf] %vm2352, %v2297
  %2399 = vst.msk [vmem:[%s3 + $0xb8] sm:$0xf] %vm2352, %v2298
  %2400 = vst.msk [vmem:[%s3 + $0xbc] sm:$0xf] %vm2352, %v2299
  %2401 = vst.msk [vmem:[%s3 + $0xc0] sm:$0xf] %vm2352, %v2300
  %2402 = vst.msk [vmem:[%s3 + $0xc4] sm:$0xf] %vm2352, %v2301
  // Predicated region
  $region14: #{cnn_cifar_forward.2} parent=0 // pred_check
    _
  $region15: #{cnn_cifar_forward.2} parent=0 // pred_check_branch
    %2404 = sbr.rel (0) target = $region17
  $region16: #{cnn_cifar_forward.2} parent=0 // pred_region
    _
  $region17: #{cnn_cifar_forward.2} parent=0 // pred_fallthru
    _
  // Predicated region
  $region18: #{cnn_cifar_forward.2} parent=0 // pred_check
    _
  $region19: #{cnn_cifar_forward.2} parent=0 // pred_check_branch
    %2406 = sbr.rel (0) target = $region21
  $region20: #{cnn_cifar_forward.2} parent=0 // pred_region
    _
  $region21: #{cnn_cifar_forward.2} parent=0 // pred_fallthru
    _

// kernel: cnn_cifar_forward.3
$region0: #{cnn_cifar_forward.3}
  #allocation0 [shape = 'u32[]', space=smem, size = 0x4, offset = 0x4, fixed_abs, tag = 'smem constant byte address 0x4 - core index']
  #allocation1 [shape = 'u32[144,128]{1,0:T(1,128)}', space=vmem, size = 0x12000, scoped, tag = 'internal scratch']
  %s0 = inlined_call_operand.vmem [shape: bf16[4,25,16,150], index: 0, kind: input, shape index: {}]
  %s1 = inlined_call_operand.vmem [shape: bf16[150,16], index: 1, kind: input, shape index: {}]
  %s2 = inlined_call_operand.vmem [shape: f32[1,16], index: 2, kind: input, shape index: {}]
  %s3 = inlined_call_operand.vmem [shape: bf16[400,120], index: 3, kind: input, shape index: {}]
  %s4 = inlined_call_operand.vmem [shape: f32[1,120], index: 4, kind: input, shape index: {}]
  %s5 = inlined_call_operand.vmem [shape: bf16[120,84], index: 5, kind: input, shape index: {}]
  %s6 = inlined_call_operand.vmem [shape: f32[1,84], index: 6, kind: input, shape index: {}]
  %s7 = inlined_call_operand.vmem [shape: bf16[84,10], index: 7, kind: input, shape index: {}]
  %s8 = inlined_call_operand.vmem [shape: f32[1,10], index: 8, kind: input, shape index: {}]
  %s9 = inlined_call_operand.vmem [shape: f32[16,10], index: 9, kind: output, shape index: {}]
  %s10 = sld [smem:[#allocation0]]
  $region46: #{cnn_cifar_forward.3} parent=0
    _
  %s12 = ssub.s32 1, %s10
  %s13 = scalar_select 0, %s12, %s10
  // Predicated region
  $region2: #{cnn_cifar_forward.3} parent=0 // pred_check
    _
  $region3: #{cnn_cifar_forward.3} parent=0 // pred_check_branch
    %15 = sbr.rel (0) target = $region5
  $region4: #{cnn_cifar_forward.3} parent=0 // pred_region
    _
  $region5: #{cnn_cifar_forward.3} parent=0 // pred_fallthru
    _
  // Predicated region
  $region6: #{cnn_cifar_forward.3} parent=0 // pred_check
    _
  $region7: #{cnn_cifar_forward.3} parent=0 // pred_check_branch
    %17 = sbr.rel (0) target = $region9
  $region8: #{cnn_cifar_forward.3} parent=0 // pred_region
    _
  $region9: #{cnn_cifar_forward.3} parent=0 // pred_fallthru
    _
  // Predicated region
  $region10: #{cnn_cifar_forward.3} parent=0 // pred_check
    _
  $region11: #{cnn_cifar_forward.3} parent=0 // pred_check_branch
    %19 = sbr.rel (0) target = $region13
  $region12: #{cnn_cifar_forward.3} parent=0 // pred_region
    _
  $region13: #{cnn_cifar_forward.3} parent=0 // pred_fallthru
    _
  // Predicated region
  $region14: #{cnn_cifar_forward.3} parent=0 // pred_check
    _
  $region15: #{cnn_cifar_forward.3} parent=0 // pred_check_branch
    %21 = sbr.rel (0) target = $region17
  $region16: #{cnn_cifar_forward.3} parent=0 // pred_region
    _
  $region17: #{cnn_cifar_forward.3} parent=0 // pred_fallthru
    _
  // Predicated region
  $region18: #{cnn_cifar_forward.3} parent=0 // pred_check
    _
  $region19: #{cnn_cifar_forward.3} parent=0 // pred_check_branch
    %23 = sbr.rel (0) target = $region21
  $region20: #{cnn_cifar_forward.3} parent=0 // pred_region
    _
  $region21: #{cnn_cifar_forward.3} parent=0 // pred_fallthru
    _
  // Predicated region
  $region22: #{cnn_cifar_forward.3} parent=0 // pred_check
    _
  $region23: #{cnn_cifar_forward.3} parent=0 // pred_check_branch
    %25 = sbr.rel (0) target = $region25
  $region24: #{cnn_cifar_forward.3} parent=0 // pred_region
    _
  $region25: #{cnn_cifar_forward.3} parent=0 // pred_fallthru
    _
  // Predicated region
  $region26: #{cnn_cifar_forward.3} parent=0 // pred_check
    _
  $region27: #{cnn_cifar_forward.3} parent=0 // pred_check_branch
    %27 = sbr.rel (0) target = $region29
  $region28: #{cnn_cifar_forward.3} parent=0 // pred_region
    _
  $region29: #{cnn_cifar_forward.3} parent=0 // pred_fallthru
    _
  // Predicated region
  $region30: #{cnn_cifar_forward.3} parent=0 // pred_check
    _
  $region31: #{cnn_cifar_forward.3} parent=0 // pred_check_branch
    %29 = sbr.rel (0) target = $region33
  $region32: #{cnn_cifar_forward.3} parent=0 // pred_region
    _
  $region33: #{cnn_cifar_forward.3} parent=0 // pred_fallthru
    _
  // Predicated region
  $region34: #{cnn_cifar_forward.3} parent=0 // pred_check
    _
  $region35: #{cnn_cifar_forward.3} parent=0 // pred_check_branch
    %31 = sbr.rel (0) target = $region37
  $region36: #{cnn_cifar_forward.3} parent=0 // pred_region
    _
  $region37: #{cnn_cifar_forward.3} parent=0 // pred_fallthru
    _
  %v33 = vld [vmem:[%s0] sm:$0xff]
  %v34 = vld [vmem:[%s0 + $0x8] sm:$0xff]
  %v35 = vld [vmem:[%s0 + $0x10] sm:$0xff]
  %v36 = vld [vmem:[%s0 + $0x18] sm:$0xff]
  %v37 = vld [vmem:[%s0 + $0x20] sm:$0xff]
  %v38 = vld [vmem:[%s0 + $0x28] sm:$0xff]
  %v39 = vld [vmem:[%s0 + $0x30] sm:$0xff]
  %v40 = vld [vmem:[%s0 + $0x38] sm:$0xff]
  %v41 = vld [vmem:[%s0 + $0x40] sm:$0xff]
  %v42 = vld [vmem:[%s0 + $0x48] sm:$0xff]
  %v43 = vld [vmem:[%s0 + $0x50] sm:$0xff]
  %v44 = vld [vmem:[%s0 + $0x58] sm:$0xff]
  %v45 = vld [vmem:[%s0 + $0x60] sm:$0xff]
  %v46 = vld [vmem:[%s0 + $0x68] sm:$0xff]
  %v47 = vld [vmem:[%s0 + $0x70] sm:$0xff]
  %v48 = vld [vmem:[%s0 + $0x78] sm:$0xff]
  %v49 = vld [vmem:[%s0 + $0x80] sm:$0xff]
  %v50 = vld [vmem:[%s0 + $0x88] sm:$0xff]
  %v51 = vld [vmem:[%s0 + $0x90] sm:$0xff]
  %v52 = vld [vmem:[%s0 + $0x98] sm:$0xff]
  %v53 = vld [vmem:[%s0 + $0xa0] sm:$0xff]
  %v54 = vld [vmem:[%s0 + $0xa8] sm:$0xff]
  %v55 = vld [vmem:[%s0 + $0xb0] sm:$0xff]
  %v56 = vld [vmem:[%s0 + $0xb8] sm:$0xff]
  %v57 = vld [vmem:[%s0 + $0xc0] sm:$0xff]
  %v58 = vld [vmem:[%s0 + $0xc8] sm:$0xff]
  %v59 = vld [vmem:[%s0 + $0xd0] sm:$0xff]
  %v60 = vld [vmem:[%s0 + $0xd8] sm:$0xff]
  %v61 = vld [vmem:[%s0 + $0xe0] sm:$0xff]
  %v62 = vld [vmem:[%s0 + $0xe8] sm:$0xff]
  %v63 = vld [vmem:[%s0 + $0xf0] sm:$0xff]
  %v64 = vld [vmem:[%s0 + $0xf8] sm:$0xff]
  %v65 = vld [vmem:[%s0 + $0x100] sm:$0xff]
  %v66 = vld [vmem:[%s0 + $0x108] sm:$0xff]
  %v67 = vld [vmem:[%s0 + $0x110] sm:$0xff]
  %v68 = vld [vmem:[%s0 + $0x118] sm:$0xff]
  %v69 = vld [vmem:[%s0 + $0x120] sm:$0xff]
  %v70 = vld [vmem:[%s0 + $0x128] sm:$0xff]
  %v71 = vld [vmem:[%s0 + $0x130] sm:$0xff]
  %v72 = vld [vmem:[%s0 + $0x138] sm:$0xff]
  %v73 = vld [vmem:[%s0 + $0x140] sm:$0xff]
  %v74 = vld [vmem:[%s0 + $0x148] sm:$0xff]
  %v75 = vld [vmem:[%s0 + $0x150] sm:$0xff]
  %v76 = vld [vmem:[%s0 + $0x158] sm:$0xff]
  %v77 = vld [vmem:[%s0 + $0x160] sm:$0xff]
  %v78 = vld [vmem:[%s0 + $0x168] sm:$0xff]
  %v79 = vld [vmem:[%s0 + $0x170] sm:$0xff]
  %v80 = vld [vmem:[%s0 + $0x178] sm:$0xff]
  %v81 = vld [vmem:[%s0 + $0x180] sm:$0xff]
  %v82 = vld [vmem:[%s0 + $0x188] sm:$0xff]
  %v83 = vld [vmem:[%s0 + $0x190] sm:$0xff]
  %v84 = vld [vmem:[%s0 + $0x198] sm:$0xff]
  %v85 = vld [vmem:[%s0 + $0x1a0] sm:$0xff]
  %v86 = vld [vmem:[%s0 + $0x1a8] sm:$0xff]
  %v87 = vld [vmem:[%s0 + $0x1b0] sm:$0xff]
  %v88 = vld [vmem:[%s0 + $0x1b8] sm:$0xff]
  %v89 = vld [vmem:[%s0 + $0x1c0] sm:$0xff]
  %v90 = vld [vmem:[%s0 + $0x1c8] sm:$0xff]
  %v91 = vld [vmem:[%s0 + $0x1d0] sm:$0xff]
  %v92 = vld [vmem:[%s0 + $0x1d8] sm:$0xff]
  %v93 = vld [vmem:[%s0 + $0x1e0] sm:$0xff]
  %v94 = vld [vmem:[%s0 + $0x1e8] sm:$0xff]
  %v95 = vld [vmem:[%s0 + $0x1f0] sm:$0xff]
  %v96 = vld [vmem:[%s0 + $0x1f8] sm:$0xff]
  %v97 = vld [vmem:[%s0 + $0x200] sm:$0xff]
  %v98 = vld [vmem:[%s0 + $0x208] sm:$0xff]
  %v99 = vld [vmem:[%s0 + $0x210] sm:$0xff]
  %v100 = vld [vmem:[%s0 + $0x218] sm:$0xff]
  %v101 = vld [vmem:[%s0 + $0x220] sm:$0xff]
  %v102 = vld [vmem:[%s0 + $0x228] sm:$0xff]
  %v103 = vld [vmem:[%s0 + $0x230] sm:$0xff]
  %v104 = vld [vmem:[%s0 + $0x238] sm:$0xff]
  %v105 = vld [vmem:[%s0 + $0x240] sm:$0xff]
  %v106 = vld [vmem:[%s0 + $0x248] sm:$0xff]
  %v107 = vld [vmem:[%s0 + $0x250] sm:$0xff]
  %v108 = vld [vmem:[%s0 + $0x258] sm:$0xff]
  %v109 = vld [vmem:[%s0 + $0x260] sm:$0xff]
  %v110 = vld [vmem:[%s0 + $0x268] sm:$0xff]
  %v111 = vld [vmem:[%s0 + $0x270] sm:$0xff]
  %v112 = vld [vmem:[%s0 + $0x278] sm:$0xff]
  %v113 = vld [vmem:[%s0 + $0x280] sm:$0xff]
  %v114 = vld [vmem:[%s0 + $0x288] sm:$0xff]
  %v115 = vld [vmem:[%s0 + $0x290] sm:$0xff]
  %v116 = vld [vmem:[%s0 + $0x298] sm:$0xff]
  %v117 = vld [vmem:[%s0 + $0x2a0] sm:$0xff]
  %v118 = vld [vmem:[%s0 + $0x2a8] sm:$0xff]
  %v119 = vld [vmem:[%s0 + $0x2b0] sm:$0xff]
  %v120 = vld [vmem:[%s0 + $0x2b8] sm:$0xff]
  %v121 = vld [vmem:[%s0 + $0x2c0] sm:$0xff]
  %v122 = vld [vmem:[%s0 + $0x2c8] sm:$0xff]
  %v123 = vld [vmem:[%s0 + $0x2d0] sm:$0xff]
  %v124 = vld [vmem:[%s0 + $0x2d8] sm:$0xff]
  %v125 = vld [vmem:[%s0 + $0x2e0] sm:$0xff]
  %v126 = vld [vmem:[%s0 + $0x2e8] sm:$0xff]
  %v127 = vld [vmem:[%s0 + $0x2f0] sm:$0xff]
  %v128 = vld [vmem:[%s0 + $0x2f8] sm:$0xff]
  %v129 = vld [vmem:[%s0 + $0x300] sm:$0xff]
  %v130 = vld [vmem:[%s0 + $0x308] sm:$0xff]
  %v131 = vld [vmem:[%s0 + $0x310] sm:$0xff]
  %v132 = vld [vmem:[%s0 + $0x318] sm:$0xff]
  %v133 = vld [vmem:[%s0 + $0x320] sm:$0xff]
  %v134 = vld [vmem:[%s0 + $0x328] sm:$0xff]
  %v135 = vld [vmem:[%s0 + $0x330] sm:$0xff]
  %v136 = vld [vmem:[%s0 + $0x338] sm:$0xff]
  %v137 = vld [vmem:[%s0 + $0x340] sm:$0xff]
  %v138 = vld [vmem:[%s0 + $0x348] sm:$0xff]
  %v139 = vld [vmem:[%s0 + $0x350] sm:$0xff]
  %v140 = vld [vmem:[%s0 + $0x358] sm:$0xff]
  %v141 = vld [vmem:[%s0 + $0x360] sm:$0xff]
  %v142 = vld [vmem:[%s0 + $0x368] sm:$0xff]
  %v143 = vld [vmem:[%s0 + $0x370] sm:$0xff]
  %v144 = vld [vmem:[%s0 + $0x378] sm:$0xff]
  %v145 = vld [vmem:[%s0 + $0x380] sm:$0xff]
  %v146 = vld [vmem:[%s0 + $0x388] sm:$0xff]
  %v147 = vld [vmem:[%s0 + $0x390] sm:$0xff]
  %v148 = vld [vmem:[%s0 + $0x398] sm:$0xff]
  %v149 = vld [vmem:[%s0 + $0x3a0] sm:$0xff]
  %v150 = vld [vmem:[%s0 + $0x3a8] sm:$0xff]
  %v151 = vld [vmem:[%s0 + $0x3b0] sm:$0xff]
  %v152 = vld [vmem:[%s0 + $0x3b8] sm:$0xff]
  %v153 = vld [vmem:[%s0 + $0x3c0] sm:$0xff]
  %v154 = vld [vmem:[%s0 + $0x3c8] sm:$0xff]
  %v155 = vld [vmem:[%s0 + $0x3d0] sm:$0xff]
  %v156 = vld [vmem:[%s0 + $0x3d8] sm:$0xff]
  %v157 = vld [vmem:[%s0 + $0x3e0] sm:$0xff]
  %v158 = vld [vmem:[%s0 + $0x3e8] sm:$0xff]
  %v159 = vld [vmem:[%s0 + $0x3f0] sm:$0xff]
  %v160 = vld [vmem:[%s0 + $0x3f8] sm:$0xff]
  %v161 = vld [vmem:[%s0 + $0x400] sm:$0xff]
  %v162 = vld [vmem:[%s0 + $0x408] sm:$0xff]
  %v163 = vld [vmem:[%s0 + $0x410] sm:$0xff]
  %v164 = vld [vmem:[%s0 + $0x418] sm:$0xff]
  %v165 = vld [vmem:[%s0 + $0x420] sm:$0xff]
  %v166 = vld [vmem:[%s0 + $0x428] sm:$0xff]
  %v167 = vld [vmem:[%s0 + $0x430] sm:$0xff]
  %v168 = vld [vmem:[%s0 + $0x438] sm:$0xff]
  %v169 = vld [vmem:[%s0 + $0x440] sm:$0xff]
  %v170 = vld [vmem:[%s0 + $0x448] sm:$0xff]
  %v171 = vld [vmem:[%s0 + $0x450] sm:$0xff]
  %v172 = vld [vmem:[%s0 + $0x458] sm:$0xff]
  %v173 = vld [vmem:[%s0 + $0x460] sm:$0xff]
  %v174 = vld [vmem:[%s0 + $0x468] sm:$0xff]
  %v175 = vld [vmem:[%s0 + $0x470] sm:$0xff]
  %v176 = vld [vmem:[%s0 + $0x478] sm:$0xff]
  %v177 = vld [vmem:[%s0 + $0x480] sm:$0xff]
  %v178 = vld [vmem:[%s0 + $0x488] sm:$0xff]
  %v179 = vld [vmem:[%s0 + $0x490] sm:$0xff]
  %v180 = vld [vmem:[%s0 + $0x498] sm:$0xff]
  %v181 = vld [vmem:[%s0 + $0x4a0] sm:$0xff]
  %v182 = vld [vmem:[%s0 + $0x4a8] sm:$0xff]
  %v183 = vld [vmem:[%s0 + $0x4b0] sm:$0xff]
  %v184 = vld [vmem:[%s0 + $0x4b8] sm:$0xff]
  %v185 = vld [vmem:[%s0 + $0x4c0] sm:$0xff]
  %v186 = vld [vmem:[%s0 + $0x4c8] sm:$0xff]
  %v187 = vld [vmem:[%s0 + $0x4d0] sm:$0xff]
  %v188 = vld [vmem:[%s0 + $0x4d8] sm:$0xff]
  %v189 = vld [vmem:[%s0 + $0x4e0] sm:$0xff]
  %v190 = vld [vmem:[%s0 + $0x4e8] sm:$0xff]
  %v191 = vld [vmem:[%s0 + $0x4f0] sm:$0xff]
  %v192 = vld [vmem:[%s0 + $0x4f8] sm:$0xff]
  %v193 = vld [vmem:[%s0 + $0x500] sm:$0xff]
  %v194 = vld [vmem:[%s0 + $0x508] sm:$0xff]
  %v195 = vld [vmem:[%s0 + $0x510] sm:$0xff]
  %v196 = vld [vmem:[%s0 + $0x518] sm:$0xff]
  %v197 = vld [vmem:[%s0 + $0x520] sm:$0xff]
  %v198 = vld [vmem:[%s0 + $0x528] sm:$0xff]
  %v199 = vld [vmem:[%s0 + $0x530] sm:$0xff]
  %v200 = vld [vmem:[%s0 + $0x538] sm:$0xff]
  %v201 = vld [vmem:[%s0 + $0x540] sm:$0xff]
  %v202 = vld [vmem:[%s0 + $0x548] sm:$0xff]
  %v203 = vld [vmem:[%s0 + $0x550] sm:$0xff]
  %v204 = vld [vmem:[%s0 + $0x558] sm:$0xff]
  %v205 = vld [vmem:[%s0 + $0x560] sm:$0xff]
  %v206 = vld [vmem:[%s0 + $0x568] sm:$0xff]
  %v207 = vld [vmem:[%s0 + $0x570] sm:$0xff]
  %v208 = vld [vmem:[%s0 + $0x578] sm:$0xff]
  %v209 = vld [vmem:[%s0 + $0x580] sm:$0xff]
  %v210 = vld [vmem:[%s0 + $0x588] sm:$0xff]
  %v211 = vld [vmem:[%s0 + $0x590] sm:$0xff]
  %v212 = vld [vmem:[%s0 + $0x598] sm:$0xff]
  %v213 = vld [vmem:[%s0 + $0x5a0] sm:$0xff]
  %v214 = vld [vmem:[%s0 + $0x5a8] sm:$0xff]
  %v215 = vld [vmem:[%s0 + $0x5b0] sm:$0xff]
  %v216 = vld [vmem:[%s0 + $0x5b8] sm:$0xff]
  %v217 = vld [vmem:[%s0 + $0x5c0] sm:$0xff]
  %v218 = vld [vmem:[%s0 + $0x5c8] sm:$0xff]
  %v219 = vld [vmem:[%s0 + $0x5d0] sm:$0xff]
  %v220 = vld [vmem:[%s0 + $0x5d8] sm:$0xff]
  %v221 = vld [vmem:[%s0 + $0x5e0] sm:$0xff]
  %v222 = vld [vmem:[%s0 + $0x5e8] sm:$0xff]
  %v223 = vld [vmem:[%s0 + $0x5f0] sm:$0xff]
  %v224 = vld [vmem:[%s0 + $0x5f8] sm:$0xff]
  %v225 = vld [vmem:[%s0 + $0x600] sm:$0xff]
  %v226 = vld [vmem:[%s0 + $0x608] sm:$0xff]
  %v227 = vld [vmem:[%s0 + $0x610] sm:$0xff]
  %v228 = vld [vmem:[%s0 + $0x618] sm:$0xff]
  %v229 = vld [vmem:[%s0 + $0x620] sm:$0xff]
  %v230 = vld [vmem:[%s0 + $0x628] sm:$0xff]
  %v231 = vld [vmem:[%s0 + $0x630] sm:$0xff]
  %v232 = vld [vmem:[%s0 + $0x638] sm:$0xff]
  %v233 = vld [vmem:[%s1] sm:$0xf]
  %v234 = vld [vmem:[%s1 + $0x4] sm:$0xf]
  %v235 = vld [vmem:[%s1 + $0x8] sm:$0xf]
  %v236 = vld [vmem:[%s1 + $0xc] sm:$0xf]
  %v237 = vld [vmem:[%s1 + $0x10] sm:$0xf]
  %v238 = vld [vmem:[%s1 + $0x14] sm:$0xf]
  %v239 = vld [vmem:[%s1 + $0x18] sm:$0xf]
  %v240 = vld [vmem:[%s1 + $0x1c] sm:$0xf]
  %v241 = vld [vmem:[%s1 + $0x20] sm:$0xf]
  %v242 = vld [vmem:[%s1 + $0x24] sm:$0xf]
  %v243 = vld [vmem:[%s1 + $0x28] sm:$0xf]
  %v244 = vld [vmem:[%s1 + $0x2c] sm:$0xf]
  %v245 = vld [vmem:[%s1 + $0x30] sm:$0xf]
  %v246 = vld [vmem:[%s1 + $0x34] sm:$0xf]
  %v247 = vld [vmem:[%s1 + $0x38] sm:$0xf]
  %v248 = vld [vmem:[%s1 + $0x3c] sm:$0xf]
  %v249 = vld [vmem:[%s1 + $0x40] sm:$0xf]
  %v250 = vld [vmem:[%s1 + $0x44] sm:$0xf]
  %v251 = vld [vmem:[%s1 + $0x48] sm:$0x7]
  %v452 = vunpack.c.l.b16 %v33
  %v453 = vunpack.c.h.b16 %v33
  %v454 = vunpack.c.l.b16 %v34
  %v455 = vunpack.c.h.b16 %v34
  %v456 = vunpack.c.l.b16 %v35
  %v457 = vunpack.c.h.b16 %v35
  %v458 = vunpack.c.l.b16 %v36
  %v459 = vunpack.c.h.b16 %v36
  %v460 = vunpack.c.l.b16 %v37
  %v461 = vunpack.c.h.b16 %v37
  %v462 = vunpack.c.l.b16 %v38
  %v463 = vunpack.c.h.b16 %v38
  %v464 = vunpack.c.l.b16 %v39
  %v465 = vunpack.c.h.b16 %v39
  %v466 = vunpack.c.l.b16 %v40
  %v467 = vunpack.c.h.b16 %v40
  %v468 = vunpack.c.l.b16 %v41
  %v469 = vunpack.c.h.b16 %v41
  %v470 = vunpack.c.l.b16 %v42
  %v471 = vunpack.c.h.b16 %v42
  %v472 = vunpack.c.l.b16 %v43
  %v473 = vunpack.c.h.b16 %v43
  %v474 = vunpack.c.l.b16 %v44
  %v475 = vunpack.c.h.b16 %v44
  %v476 = vunpack.c.l.b16 %v45
  %v477 = vunpack.c.h.b16 %v45
  %v478 = vunpack.c.l.b16 %v46
  %v479 = vunpack.c.h.b16 %v46
  %v480 = vunpack.c.l.b16 %v47
  %v481 = vunpack.c.h.b16 %v47
  %v482 = vunpack.c.l.b16 %v48
  %v483 = vunpack.c.h.b16 %v48
  %v484 = vunpack.c.l.b16 %v49
  %v485 = vunpack.c.h.b16 %v49
  %v486 = vunpack.c.l.b16 %v50
  %v487 = vunpack.c.h.b16 %v50
  %v488 = vunpack.c.l.b16 %v51
  %v489 = vunpack.c.h.b16 %v51
  %v490 = vunpack.c.l.b16 %v52
  %v491 = vunpack.c.h.b16 %v52
  %v492 = vunpack.c.l.b16 %v53
  %v493 = vunpack.c.h.b16 %v53
  %v494 = vunpack.c.l.b16 %v54
  %v495 = vunpack.c.h.b16 %v54
  %v496 = vunpack.c.l.b16 %v55
  %v497 = vunpack.c.h.b16 %v55
  %v498 = vunpack.c.l.b16 %v56
  %v499 = vunpack.c.h.b16 %v56
  %v500 = vunpack.c.l.b16 %v57
  %v501 = vunpack.c.h.b16 %v57
  %v502 = vunpack.c.l.b16 %v58
  %v503 = vunpack.c.h.b16 %v58
  %v504 = vunpack.c.l.b16 %v59
  %v505 = vunpack.c.h.b16 %v59
  %v506 = vunpack.c.l.b16 %v60
  %v507 = vunpack.c.h.b16 %v60
  %v508 = vunpack.c.l.b16 %v61
  %v509 = vunpack.c.h.b16 %v61
  %v510 = vunpack.c.l.b16 %v62
  %v511 = vunpack.c.h.b16 %v62
  %v512 = vunpack.c.l.b16 %v63
  %v513 = vunpack.c.h.b16 %v63
  %v514 = vunpack.c.l.b16 %v64
  %v515 = vunpack.c.h.b16 %v64
  %v516 = vunpack.c.l.b16 %v65
  %v517 = vunpack.c.h.b16 %v65
  %v518 = vunpack.c.l.b16 %v66
  %v519 = vunpack.c.h.b16 %v66
  %v520 = vunpack.c.l.b16 %v67
  %v521 = vunpack.c.h.b16 %v67
  %v522 = vunpack.c.l.b16 %v68
  %v523 = vunpack.c.h.b16 %v68
  %v524 = vunpack.c.l.b16 %v69
  %v525 = vunpack.c.h.b16 %v69
  %v526 = vunpack.c.l.b16 %v70
  %v527 = vunpack.c.h.b16 %v70
  %v528 = vunpack.c.l.b16 %v71
  %v529 = vunpack.c.h.b16 %v71
  %v530 = vunpack.c.l.b16 %v72
  %v531 = vunpack.c.h.b16 %v72
  %v532 = vunpack.c.l.b16 %v73
  %v533 = vunpack.c.h.b16 %v73
  %v534 = vunpack.c.l.b16 %v74
  %v535 = vunpack.c.h.b16 %v74
  %v536 = vunpack.c.l.b16 %v75
  %v537 = vunpack.c.h.b16 %v75
  %v538 = vunpack.c.l.b16 %v76
  %v539 = vunpack.c.h.b16 %v76
  %v540 = vunpack.c.l.b16 %v77
  %v541 = vunpack.c.h.b16 %v77
  %v542 = vunpack.c.l.b16 %v78
  %v543 = vunpack.c.h.b16 %v78
  %v544 = vunpack.c.l.b16 %v79
  %v545 = vunpack.c.h.b16 %v79
  %v546 = vunpack.c.l.b16 %v80
  %v547 = vunpack.c.h.b16 %v80
  %v548 = vunpack.c.l.b16 %v81
  %v549 = vunpack.c.h.b16 %v81
  %v550 = vunpack.c.l.b16 %v82
  %v551 = vunpack.c.h.b16 %v82
  %v552 = vunpack.c.l.b16 %v83
  %v553 = vunpack.c.h.b16 %v83
  %v554 = vunpack.c.l.b16 %v84
  %v555 = vunpack.c.h.b16 %v84
  %v556 = vunpack.c.l.b16 %v85
  %v557 = vunpack.c.h.b16 %v85
  %v558 = vunpack.c.l.b16 %v86
  %v559 = vunpack.c.h.b16 %v86
  %v560 = vunpack.c.l.b16 %v87
  %v561 = vunpack.c.h.b16 %v87
  %v562 = vunpack.c.l.b16 %v88
  %v563 = vunpack.c.h.b16 %v88
  %v564 = vunpack.c.l.b16 %v89
  %v565 = vunpack.c.h.b16 %v89
  %v566 = vunpack.c.l.b16 %v90
  %v567 = vunpack.c.h.b16 %v90
  %v568 = vunpack.c.l.b16 %v91
  %v569 = vunpack.c.h.b16 %v91
  %v570 = vunpack.c.l.b16 %v92
  %v571 = vunpack.c.h.b16 %v92
  %v572 = vunpack.c.l.b16 %v93
  %v573 = vunpack.c.h.b16 %v93
  %v574 = vunpack.c.l.b16 %v94
  %v575 = vunpack.c.h.b16 %v94
  %v576 = vunpack.c.l.b16 %v95
  %v577 = vunpack.c.h.b16 %v95
  %v578 = vunpack.c.l.b16 %v96
  %v579 = vunpack.c.h.b16 %v96
  %v580 = vunpack.c.l.b16 %v97
  %v581 = vunpack.c.h.b16 %v97
  %v582 = vunpack.c.l.b16 %v98
  %v583 = vunpack.c.h.b16 %v98
  %v584 = vunpack.c.l.b16 %v99
  %v585 = vunpack.c.h.b16 %v99
  %v586 = vunpack.c.l.b16 %v100
  %v587 = vunpack.c.h.b16 %v100
  %v588 = vunpack.c.l.b16 %v101
  %v589 = vunpack.c.h.b16 %v101
  %v590 = vunpack.c.l.b16 %v102
  %v591 = vunpack.c.h.b16 %v102
  %v592 = vunpack.c.l.b16 %v103
  %v593 = vunpack.c.h.b16 %v103
  %v594 = vunpack.c.l.b16 %v104
  %v595 = vunpack.c.h.b16 %v104
  %v596 = vunpack.c.l.b16 %v105
  %v597 = vunpack.c.h.b16 %v105
  %v598 = vunpack.c.l.b16 %v106
  %v599 = vunpack.c.h.b16 %v106
  %v600 = vunpack.c.l.b16 %v107
  %v601 = vunpack.c.h.b16 %v107
  %v602 = vunpack.c.l.b16 %v108
  %v603 = vunpack.c.h.b16 %v108
  %v604 = vunpack.c.l.b16 %v109
  %v605 = vunpack.c.h.b16 %v109
  %v606 = vunpack.c.l.b16 %v110
  %v607 = vunpack.c.h.b16 %v110
  %v608 = vunpack.c.l.b16 %v111
  %v609 = vunpack.c.h.b16 %v111
  %v610 = vunpack.c.l.b16 %v112
  %v611 = vunpack.c.h.b16 %v112
  %v612 = vunpack.c.l.b16 %v113
  %v613 = vunpack.c.h.b16 %v113
  %v614 = vunpack.c.l.b16 %v114
  %v615 = vunpack.c.h.b16 %v114
  %v616 = vunpack.c.l.b16 %v115
  %v617 = vunpack.c.h.b16 %v115
  %v618 = vunpack.c.l.b16 %v116
  %v619 = vunpack.c.h.b16 %v116
  %v620 = vunpack.c.l.b16 %v117
  %v621 = vunpack.c.h.b16 %v117
  %v622 = vunpack.c.l.b16 %v118
  %v623 = vunpack.c.h.b16 %v118
  %v624 = vunpack.c.l.b16 %v119
  %v625 = vunpack.c.h.b16 %v119
  %v626 = vunpack.c.l.b16 %v120
  %v627 = vunpack.c.h.b16 %v120
  %v628 = vunpack.c.l.b16 %v121
  %v629 = vunpack.c.h.b16 %v121
  %v630 = vunpack.c.l.b16 %v122
  %v631 = vunpack.c.h.b16 %v122
  %v632 = vunpack.c.l.b16 %v123
  %v633 = vunpack.c.h.b16 %v123
  %v634 = vunpack.c.l.b16 %v124
  %v635 = vunpack.c.h.b16 %v124
  %v636 = vunpack.c.l.b16 %v125
  %v637 = vunpack.c.h.b16 %v125
  %v638 = vunpack.c.l.b16 %v126
  %v639 = vunpack.c.h.b16 %v126
  %v640 = vunpack.c.l.b16 %v127
  %v641 = vunpack.c.h.b16 %v127
  %v642 = vunpack.c.l.b16 %v128
  %v643 = vunpack.c.h.b16 %v128
  %v644 = vunpack.c.l.b16 %v129
  %v645 = vunpack.c.h.b16 %v129
  %v646 = vunpack.c.l.b16 %v130
  %v647 = vunpack.c.h.b16 %v130
  %v648 = vunpack.c.l.b16 %v131
  %v649 = vunpack.c.h.b16 %v131
  %v650 = vunpack.c.l.b16 %v132
  %v651 = vunpack.c.h.b16 %v132
  %v652 = vunpack.c.l.b16 %v133
  %v653 = vunpack.c.h.b16 %v133
  %v654 = vunpack.c.l.b16 %v134
  %v655 = vunpack.c.h.b16 %v134
  %v656 = vunpack.c.l.b16 %v135
  %v657 = vunpack.c.h.b16 %v135
  %v658 = vunpack.c.l.b16 %v136
  %v659 = vunpack.c.h.b16 %v136
  %v660 = vunpack.c.l.b16 %v137
  %v661 = vunpack.c.h.b16 %v137
  %v662 = vunpack.c.l.b16 %v138
  %v663 = vunpack.c.h.b16 %v138
  %v664 = vunpack.c.l.b16 %v139
  %v665 = vunpack.c.h.b16 %v139
  %v666 = vunpack.c.l.b16 %v140
  %v667 = vunpack.c.h.b16 %v140
  %v668 = vunpack.c.l.b16 %v141
  %v669 = vunpack.c.h.b16 %v141
  %v670 = vunpack.c.l.b16 %v142
  %v671 = vunpack.c.h.b16 %v142
  %v672 = vunpack.c.l.b16 %v143
  %v673 = vunpack.c.h.b16 %v143
  %v674 = vunpack.c.l.b16 %v144
  %v675 = vunpack.c.h.b16 %v144
  %v676 = vunpack.c.l.b16 %v145
  %v677 = vunpack.c.h.b16 %v145
  %v678 = vunpack.c.l.b16 %v146
  %v679 = vunpack.c.h.b16 %v146
  %v680 = vunpack.c.l.b16 %v147
  %v681 = vunpack.c.h.b16 %v147
  %v682 = vunpack.c.l.b16 %v148
  %v683 = vunpack.c.h.b16 %v148
  %v684 = vunpack.c.l.b16 %v149
  %v685 = vunpack.c.h.b16 %v149
  %v686 = vunpack.c.l.b16 %v150
  %v687 = vunpack.c.h.b16 %v150
  %v688 = vunpack.c.l.b16 %v151
  %v689 = vunpack.c.h.b16 %v151
  %v690 = vunpack.c.l.b16 %v152
  %v691 = vunpack.c.h.b16 %v152
  %v692 = vunpack.c.l.b16 %v153
  %v693 = vunpack.c.h.b16 %v153
  %v694 = vunpack.c.l.b16 %v154
  %v695 = vunpack.c.h.b16 %v154
  %v696 = vunpack.c.l.b16 %v155
  %v697 = vunpack.c.h.b16 %v155
  %v698 = vunpack.c.l.b16 %v156
  %v699 = vunpack.c.h.b16 %v156
  %v700 = vunpack.c.l.b16 %v157
  %v701 = vunpack.c.h.b16 %v157
  %v702 = vunpack.c.l.b16 %v158
  %v703 = vunpack.c.h.b16 %v158
  %v704 = vunpack.c.l.b16 %v159
  %v705 = vunpack.c.h.b16 %v159
  %v706 = vunpack.c.l.b16 %v160
  %v707 = vunpack.c.h.b16 %v160
  %v708 = vunpack.c.l.b16 %v161
  %v709 = vunpack.c.h.b16 %v161
  %v710 = vunpack.c.l.b16 %v162
  %v711 = vunpack.c.h.b16 %v162
  %v712 = vunpack.c.l.b16 %v163
  %v713 = vunpack.c.h.b16 %v163
  %v714 = vunpack.c.l.b16 %v164
  %v715 = vunpack.c.h.b16 %v164
  %v716 = vunpack.c.l.b16 %v165
  %v717 = vunpack.c.h.b16 %v165
  %v718 = vunpack.c.l.b16 %v166
  %v719 = vunpack.c.h.b16 %v166
  %v720 = vunpack.c.l.b16 %v167
  %v721 = vunpack.c.h.b16 %v167
  %v722 = vunpack.c.l.b16 %v168
  %v723 = vunpack.c.h.b16 %v168
  %v724 = vunpack.c.l.b16 %v169
  %v725 = vunpack.c.h.b16 %v169
  %v726 = vunpack.c.l.b16 %v170
  %v727 = vunpack.c.h.b16 %v170
  %v728 = vunpack.c.l.b16 %v171
  %v729 = vunpack.c.h.b16 %v171
  %v730 = vunpack.c.l.b16 %v172
  %v731 = vunpack.c.h.b16 %v172
  %v732 = vunpack.c.l.b16 %v173
  %v733 = vunpack.c.h.b16 %v173
  %v734 = vunpack.c.l.b16 %v174
  %v735 = vunpack.c.h.b16 %v174
  %v736 = vunpack.c.l.b16 %v175
  %v737 = vunpack.c.h.b16 %v175
  %v738 = vunpack.c.l.b16 %v176
  %v739 = vunpack.c.h.b16 %v176
  %v740 = vunpack.c.l.b16 %v177
  %v741 = vunpack.c.h.b16 %v177
  %v742 = vunpack.c.l.b16 %v178
  %v743 = vunpack.c.h.b16 %v178
  %v744 = vunpack.c.l.b16 %v179
  %v745 = vunpack.c.h.b16 %v179
  %v746 = vunpack.c.l.b16 %v180
  %v747 = vunpack.c.h.b16 %v180
  %v748 = vunpack.c.l.b16 %v181
  %v749 = vunpack.c.h.b16 %v181
  %v750 = vunpack.c.l.b16 %v182
  %v751 = vunpack.c.h.b16 %v182
  %v752 = vunpack.c.l.b16 %v183
  %v753 = vunpack.c.h.b16 %v183
  %v754 = vunpack.c.l.b16 %v184
  %v755 = vunpack.c.h.b16 %v184
  %v756 = vunpack.c.l.b16 %v185
  %v757 = vunpack.c.h.b16 %v185
  %v758 = vunpack.c.l.b16 %v186
  %v759 = vunpack.c.h.b16 %v186
  %v760 = vunpack.c.l.b16 %v187
  %v761 = vunpack.c.h.b16 %v187
  %v762 = vunpack.c.l.b16 %v188
  %v763 = vunpack.c.h.b16 %v188
  %v764 = vunpack.c.l.b16 %v189
  %v765 = vunpack.c.h.b16 %v189
  %v766 = vunpack.c.l.b16 %v190
  %v767 = vunpack.c.h.b16 %v190
  %v768 = vunpack.c.l.b16 %v191
  %v769 = vunpack.c.h.b16 %v191
  %v770 = vunpack.c.l.b16 %v192
  %v771 = vunpack.c.h.b16 %v192
  %v772 = vunpack.c.l.b16 %v193
  %v773 = vunpack.c.h.b16 %v193
  %v774 = vunpack.c.l.b16 %v194
  %v775 = vunpack.c.h.b16 %v194
  %v776 = vunpack.c.l.b16 %v195
  %v777 = vunpack.c.h.b16 %v195
  %v778 = vunpack.c.l.b16 %v196
  %v779 = vunpack.c.h.b16 %v196
  %v780 = vunpack.c.l.b16 %v197
  %v781 = vunpack.c.h.b16 %v197
  %v782 = vunpack.c.l.b16 %v198
  %v783 = vunpack.c.h.b16 %v198
  %v784 = vunpack.c.l.b16 %v199
  %v785 = vunpack.c.h.b16 %v199
  %v786 = vunpack.c.l.b16 %v200
  %v787 = vunpack.c.h.b16 %v200
  %v788 = vunpack.c.l.b16 %v201
  %v789 = vunpack.c.h.b16 %v201
  %v790 = vunpack.c.l.b16 %v202
  %v791 = vunpack.c.h.b16 %v202
  %v792 = vunpack.c.l.b16 %v203
  %v793 = vunpack.c.h.b16 %v203
  %v794 = vunpack.c.l.b16 %v204
  %v795 = vunpack.c.h.b16 %v204
  %v796 = vunpack.c.l.b16 %v205
  %v797 = vunpack.c.h.b16 %v205
  %v798 = vunpack.c.l.b16 %v206
  %v799 = vunpack.c.h.b16 %v206
  %v800 = vunpack.c.l.b16 %v207
  %v801 = vunpack.c.h.b16 %v207
  %v802 = vunpack.c.l.b16 %v208
  %v803 = vunpack.c.h.b16 %v208
  %v804 = vunpack.c.l.b16 %v209
  %v805 = vunpack.c.h.b16 %v209
  %v806 = vunpack.c.l.b16 %v210
  %v807 = vunpack.c.h.b16 %v210
  %v808 = vunpack.c.l.b16 %v211
  %v809 = vunpack.c.h.b16 %v211
  %v810 = vunpack.c.l.b16 %v212
  %v811 = vunpack.c.h.b16 %v212
  %v812 = vunpack.c.l.b16 %v213
  %v813 = vunpack.c.h.b16 %v213
  %v814 = vunpack.c.l.b16 %v214
  %v815 = vunpack.c.h.b16 %v214
  %v816 = vunpack.c.l.b16 %v215
  %v817 = vunpack.c.h.b16 %v215
  %v818 = vunpack.c.l.b16 %v216
  %v819 = vunpack.c.h.b16 %v216
  %v820 = vunpack.c.l.b16 %v217
  %v821 = vunpack.c.h.b16 %v217
  %v822 = vunpack.c.l.b16 %v218
  %v823 = vunpack.c.h.b16 %v218
  %v824 = vunpack.c.l.b16 %v219
  %v825 = vunpack.c.h.b16 %v219
  %v826 = vunpack.c.l.b16 %v220
  %v827 = vunpack.c.h.b16 %v220
  %v828 = vunpack.c.l.b16 %v221
  %v829 = vunpack.c.h.b16 %v221
  %v830 = vunpack.c.l.b16 %v222
  %v831 = vunpack.c.h.b16 %v222
  %v832 = vunpack.c.l.b16 %v223
  %v833 = vunpack.c.h.b16 %v223
  %v834 = vunpack.c.l.b16 %v224
  %v835 = vunpack.c.h.b16 %v224
  %v836 = vunpack.c.l.b16 %v225
  %v837 = vunpack.c.h.b16 %v225
  %v838 = vunpack.c.l.b16 %v226
  %v839 = vunpack.c.h.b16 %v226
  %v840 = vunpack.c.l.b16 %v227
  %v841 = vunpack.c.h.b16 %v227
  %v842 = vunpack.c.l.b16 %v228
  %v843 = vunpack.c.h.b16 %v228
  %v844 = vunpack.c.l.b16 %v229
  %v845 = vunpack.c.h.b16 %v229
  %v846 = vunpack.c.l.b16 %v230
  %v847 = vunpack.c.h.b16 %v230
  %v848 = vunpack.c.l.b16 %v231
  %v849 = vunpack.c.h.b16 %v231
  %v850 = vunpack.c.l.b16 %v232
  %v851 = vunpack.c.h.b16 %v232
  %v852 = vpack.c.b16 %v454, %v452
  %v853 = vpack.c.b16 %v455, %v453
  %v854 = vpack.c.b16 %v458, %v456
  %v855 = vpack.c.b16 %v459, %v457
  %v856 = vpack.c.b16 %v462, %v460
  %v857 = vpack.c.b16 %v463, %v461
  %v858 = vpack.c.b16 %v466, %v464
  %v859 = vpack.c.b16 %v467, %v465
  %v860 = vpack.c.b16 %v470, %v468
  %v861 = vpack.c.b16 %v471, %v469
  %v862 = vpack.c.b16 %v474, %v472
  %v863 = vpack.c.b16 %v475, %v473
  %v864 = vpack.c.b16 %v478, %v476
  %v865 = vpack.c.b16 %v479, %v477
  %v866 = vpack.c.b16 %v482, %v480
  %v867 = vpack.c.b16 %v483, %v481
  %v868 = vpack.c.b16 %v486, %v484
  %v869 = vpack.c.b16 %v487, %v485
  %v870 = vpack.c.b16 %v490, %v488
  %v871 = vpack.c.b16 %v491, %v489
  %v872 = vpack.c.b16 %v494, %v492
  %v873 = vpack.c.b16 %v495, %v493
  %v874 = vpack.c.b16 %v498, %v496
  %v875 = vpack.c.b16 %v499, %v497
  %v876 = vpack.c.b16 %v502, %v500
  %v877 = vpack.c.b16 %v503, %v501
  %v878 = vpack.c.b16 %v506, %v504
  %v879 = vpack.c.b16 %v507, %v505
  %v880 = vpack.c.b16 %v510, %v508
  %v881 = vpack.c.b16 %v511, %v509
  %v882 = vpack.c.b16 %v514, %v512
  %v883 = vpack.c.b16 %v515, %v513
  %v884 = vpack.c.b16 %v518, %v516
  %v885 = vpack.c.b16 %v519, %v517
  %v886 = vpack.c.b16 %v522, %v520
  %v887 = vpack.c.b16 %v523, %v521
  %v888 = vpack.c.b16 %v526, %v524
  %v889 = vpack.c.b16 %v527, %v525
  %v890 = vpack.c.b16 %v530, %v528
  %v891 = vpack.c.b16 %v531, %v529
  %v892 = vpack.c.b16 %v534, %v532
  %v893 = vpack.c.b16 %v535, %v533
  %v894 = vpack.c.b16 %v538, %v536
  %v895 = vpack.c.b16 %v539, %v537
  %v896 = vpack.c.b16 %v542, %v540
  %v897 = vpack.c.b16 %v543, %v541
  %v898 = vpack.c.b16 %v546, %v544
  %v899 = vpack.c.b16 %v547, %v545
  %v900 = vpack.c.b16 %v550, %v548
  %v901 = vpack.c.b16 %v551, %v549
  %v902 = vpack.c.b16 %v554, %v552
  %v903 = vpack.c.b16 %v555, %v553
  %v904 = vpack.c.b16 %v558, %v556
  %v905 = vpack.c.b16 %v559, %v557
  %v906 = vpack.c.b16 %v562, %v560
  %v907 = vpack.c.b16 %v563, %v561
  %v908 = vpack.c.b16 %v566, %v564
  %v909 = vpack.c.b16 %v567, %v565
  %v910 = vpack.c.b16 %v570, %v568
  %v911 = vpack.c.b16 %v571, %v569
  %v912 = vpack.c.b16 %v574, %v572
  %v913 = vpack.c.b16 %v575, %v573
  %v914 = vpack.c.b16 %v578, %v576
  %v915 = vpack.c.b16 %v579, %v577
  %v916 = vpack.c.b16 %v582, %v580
  %v917 = vpack.c.b16 %v583, %v581
  %v918 = vpack.c.b16 %v586, %v584
  %v919 = vpack.c.b16 %v587, %v585
  %v920 = vpack.c.b16 %v590, %v588
  %v921 = vpack.c.b16 %v591, %v589
  %v922 = vpack.c.b16 %v594, %v592
  %v923 = vpack.c.b16 %v595, %v593
  %v924 = vpack.c.b16 %v598, %v596
  %v925 = vpack.c.b16 %v599, %v597
  %v926 = vpack.c.b16 %v602, %v600
  %v927 = vpack.c.b16 %v603, %v601
  %v928 = vpack.c.b16 %v606, %v604
  %v929 = vpack.c.b16 %v607, %v605
  %v930 = vpack.c.b16 %v610, %v608
  %v931 = vpack.c.b16 %v611, %v609
  %v932 = vpack.c.b16 %v614, %v612
  %v933 = vpack.c.b16 %v615, %v613
  %v934 = vpack.c.b16 %v618, %v616
  %v935 = vpack.c.b16 %v619, %v617
  %v936 = vpack.c.b16 %v622, %v620
  %v937 = vpack.c.b16 %v623, %v621
  %v938 = vpack.c.b16 %v626, %v624
  %v939 = vpack.c.b16 %v627, %v625
  %v940 = vpack.c.b16 %v630, %v628
  %v941 = vpack.c.b16 %v631, %v629
  %v942 = vpack.c.b16 %v634, %v632
  %v943 = vpack.c.b16 %v635, %v633
  %v944 = vpack.c.b16 %v638, %v636
  %v945 = vpack.c.b16 %v639, %v637
  %v946 = vpack.c.b16 %v642, %v640
  %v947 = vpack.c.b16 %v643, %v641
  %v948 = vpack.c.b16 %v646, %v644
  %v949 = vpack.c.b16 %v647, %v645
  %v950 = vpack.c.b16 %v650, %v648
  %v951 = vpack.c.b16 %v651, %v649
  %v952 = vpack.c.b16 %v654, %v652
  %v953 = vpack.c.b16 %v655, %v653
  %v954 = vpack.c.b16 %v658, %v656
  %v955 = vpack.c.b16 %v659, %v657
  %v956 = vpack.c.b16 %v662, %v660
  %v957 = vpack.c.b16 %v663, %v661
  %v958 = vpack.c.b16 %v666, %v664
  %v959 = vpack.c.b16 %v667, %v665
  %v960 = vpack.c.b16 %v670, %v668
  %v961 = vpack.c.b16 %v671, %v669
  %v962 = vpack.c.b16 %v674, %v672
  %v963 = vpack.c.b16 %v675, %v673
  %v964 = vpack.c.b16 %v678, %v676
  %v965 = vpack.c.b16 %v679, %v677
  %v966 = vpack.c.b16 %v682, %v680
  %v967 = vpack.c.b16 %v683, %v681
  %v968 = vpack.c.b16 %v686, %v684
  %v969 = vpack.c.b16 %v687, %v685
  %v970 = vpack.c.b16 %v690, %v688
  %v971 = vpack.c.b16 %v691, %v689
  %v972 = vpack.c.b16 %v694, %v692
  %v973 = vpack.c.b16 %v695, %v693
  %v974 = vpack.c.b16 %v698, %v696
  %v975 = vpack.c.b16 %v699, %v697
  %v976 = vpack.c.b16 %v702, %v700
  %v977 = vpack.c.b16 %v703, %v701
  %v978 = vpack.c.b16 %v706, %v704
  %v979 = vpack.c.b16 %v707, %v705
  %v980 = vpack.c.b16 %v710, %v708
  %v981 = vpack.c.b16 %v711, %v709
  %v982 = vpack.c.b16 %v714, %v712
  %v983 = vpack.c.b16 %v715, %v713
  %v984 = vpack.c.b16 %v718, %v716
  %v985 = vpack.c.b16 %v719, %v717
  %v986 = vpack.c.b16 %v722, %v720
  %v987 = vpack.c.b16 %v723, %v721
  %v988 = vpack.c.b16 %v726, %v724
  %v989 = vpack.c.b16 %v727, %v725
  %v990 = vpack.c.b16 %v730, %v728
  %v991 = vpack.c.b16 %v731, %v729
  %v992 = vpack.c.b16 %v734, %v732
  %v993 = vpack.c.b16 %v735, %v733
  %v994 = vpack.c.b16 %v738, %v736
  %v995 = vpack.c.b16 %v739, %v737
  %v996 = vpack.c.b16 %v742, %v740
  %v997 = vpack.c.b16 %v743, %v741
  %v998 = vpack.c.b16 %v746, %v744
  %v999 = vpack.c.b16 %v747, %v745
  %v1000 = vpack.c.b16 %v750, %v748
  %v1001 = vpack.c.b16 %v751, %v749
  %v1002 = vpack.c.b16 %v754, %v752
  %v1003 = vpack.c.b16 %v755, %v753
  %v1004 = vpack.c.b16 %v758, %v756
  %v1005 = vpack.c.b16 %v759, %v757
  %v1006 = vpack.c.b16 %v762, %v760
  %v1007 = vpack.c.b16 %v763, %v761
  %v1008 = vpack.c.b16 %v766, %v764
  %v1009 = vpack.c.b16 %v767, %v765
  %v1010 = vpack.c.b16 %v770, %v768
  %v1011 = vpack.c.b16 %v771, %v769
  %v1012 = vpack.c.b16 %v774, %v772
  %v1013 = vpack.c.b16 %v775, %v773
  %v1014 = vpack.c.b16 %v778, %v776
  %v1015 = vpack.c.b16 %v779, %v777
  %v1016 = vpack.c.b16 %v782, %v780
  %v1017 = vpack.c.b16 %v783, %v781
  %v1018 = vpack.c.b16 %v786, %v784
  %v1019 = vpack.c.b16 %v787, %v785
  %v1020 = vpack.c.b16 %v790, %v788
  %v1021 = vpack.c.b16 %v791, %v789
  %v1022 = vpack.c.b16 %v794, %v792
  %v1023 = vpack.c.b16 %v795, %v793
  %v1024 = vpack.c.b16 %v798, %v796
  %v1025 = vpack.c.b16 %v799, %v797
  %v1026 = vpack.c.b16 %v802, %v800
  %v1027 = vpack.c.b16 %v803, %v801
  %v1028 = vpack.c.b16 %v806, %v804
  %v1029 = vpack.c.b16 %v807, %v805
  %v1030 = vpack.c.b16 %v810, %v808
  %v1031 = vpack.c.b16 %v811, %v809
  %v1032 = vpack.c.b16 %v814, %v812
  %v1033 = vpack.c.b16 %v815, %v813
  %v1034 = vpack.c.b16 %v818, %v816
  %v1035 = vpack.c.b16 %v819, %v817
  %v1036 = vpack.c.b16 %v822, %v820
  %v1037 = vpack.c.b16 %v823, %v821
  %v1038 = vpack.c.b16 %v826, %v824
  %v1039 = vpack.c.b16 %v827, %v825
  %v1040 = vpack.c.b16 %v830, %v828
  %v1041 = vpack.c.b16 %v831, %v829
  %v1042 = vpack.c.b16 %v834, %v832
  %v1043 = vpack.c.b16 %v835, %v833
  %v1044 = vpack.c.b16 %v838, %v836
  %v1045 = vpack.c.b16 %v839, %v837
  %v1046 = vpack.c.b16 %v842, %v840
  %v1047 = vpack.c.b16 %v843, %v841
  %v1048 = vpack.c.b16 %v846, %v844
  %v1049 = vpack.c.b16 %v847, %v845
  %v1050 = vpack.c.b16 %v850, %v848
  %v1051 = vpack.c.b16 %v851, %v849
  %v1171 = vunpack.c.l.b16 %v233
  %v1172 = vunpack.c.l.b16 %v234
  %v1173 = vunpack.c.l.b16 %v235
  %v1174 = vunpack.c.l.b16 %v236
  %v1175 = vunpack.c.l.b16 %v237
  %v1176 = vunpack.c.l.b16 %v238
  %v1177 = vunpack.c.l.b16 %v239
  %v1178 = vunpack.c.l.b16 %v240
  %v1179 = vunpack.c.l.b16 %v241
  %v1180 = vunpack.c.l.b16 %v242
  %v1181 = vunpack.c.l.b16 %v243
  %v1182 = vunpack.c.l.b16 %v244
  %v1183 = vunpack.c.l.b16 %v245
  %v1184 = vunpack.c.l.b16 %v246
  %v1185 = vunpack.c.l.b16 %v247
  %v1186 = vunpack.c.l.b16 %v248
  %v1187 = vunpack.c.l.b16 %v249
  %v1188 = vunpack.c.l.b16 %v250
  %v1189 = vunpack.c.l.b16 %v251
  %v1190 = vpack.c.b16 %v1172, %v1171
  %v1191 = vpack.c.b16 %v1174, %v1173
  %v1192 = vpack.c.b16 %v1176, %v1175
  %v1193 = vpack.c.b16 %v1178, %v1177
  %v1194 = vpack.c.b16 %v1180, %v1179
  %v1195 = vpack.c.b16 %v1182, %v1181
  %v1196 = vpack.c.b16 %v1184, %v1183
  %v1197 = vpack.c.b16 %v1186, %v1185
  %v1198 = vpack.c.b16 %v1188, %v1187
  %v1199 = vpack.c.b16 %v1189, %v1189
  %vm1209 = vcmask 179200
  %v1211 = vsel %vm1209, %v853, 0
  %v1214 = vsel %vm1209, %v855, 0
  %v1217 = vsel %vm1209, %v857, 0
  %v1220 = vsel %vm1209, %v859, 0
  %v1223 = vsel %vm1209, %v861, 0
  %v1226 = vsel %vm1209, %v863, 0
  %v1229 = vsel %vm1209, %v865, 0
  %v1232 = vsel %vm1209, %v867, 0
  %v1235 = vsel %vm1209, %v869, 0
  %v1238 = vsel %vm1209, %v871, 0
  %v1241 = vsel %vm1209, %v873, 0
  %v1244 = vsel %vm1209, %v875, 0
  %v1247 = vsel %vm1209, %v877, 0
  %v1250 = vsel %vm1209, %v879, 0
  %v1253 = vsel %vm1209, %v881, 0
  %v1256 = vsel %vm1209, %v883, 0
  %v1259 = vsel %vm1209, %v885, 0
  %v1262 = vsel %vm1209, %v887, 0
  %v1265 = vsel %vm1209, %v889, 0
  %v1268 = vsel %vm1209, %v891, 0
  %v1271 = vsel %vm1209, %v893, 0
  %v1274 = vsel %vm1209, %v895, 0
  %v1277 = vsel %vm1209, %v897, 0
  %v1280 = vsel %vm1209, %v899, 0
  %v1283 = vsel %vm1209, %v901, 0
  %v1286 = vsel %vm1209, %v903, 0
  %v1289 = vsel %vm1209, %v905, 0
  %v1292 = vsel %vm1209, %v907, 0
  %v1295 = vsel %vm1209, %v909, 0
  %v1298 = vsel %vm1209, %v911, 0
  %v1301 = vsel %vm1209, %v913, 0
  %v1304 = vsel %vm1209, %v915, 0
  %v1307 = vsel %vm1209, %v917, 0
  %v1310 = vsel %vm1209, %v919, 0
  %v1313 = vsel %vm1209, %v921, 0
  %v1316 = vsel %vm1209, %v923, 0
  %v1319 = vsel %vm1209, %v925, 0
  %v1322 = vsel %vm1209, %v927, 0
  %v1325 = vsel %vm1209, %v929, 0
  %v1328 = vsel %vm1209, %v931, 0
  %v1331 = vsel %vm1209, %v933, 0
  %v1334 = vsel %vm1209, %v935, 0
  %v1337 = vsel %vm1209, %v937, 0
  %v1340 = vsel %vm1209, %v939, 0
  %v1343 = vsel %vm1209, %v941, 0
  %v1346 = vsel %vm1209, %v943, 0
  %v1349 = vsel %vm1209, %v945, 0
  %v1352 = vsel %vm1209, %v947, 0
  %v1355 = vsel %vm1209, %v949, 0
  %v1358 = vsel %vm1209, %v951, 0
  %v1361 = vsel %vm1209, %v953, 0
  %v1364 = vsel %vm1209, %v955, 0
  %v1367 = vsel %vm1209, %v957, 0
  %v1370 = vsel %vm1209, %v959, 0
  %v1373 = vsel %vm1209, %v961, 0
  %v1376 = vsel %vm1209, %v963, 0
  %v1379 = vsel %vm1209, %v965, 0
  %v1382 = vsel %vm1209, %v967, 0
  %v1385 = vsel %vm1209, %v969, 0
  %v1388 = vsel %vm1209, %v971, 0
  %v1391 = vsel %vm1209, %v973, 0
  %v1394 = vsel %vm1209, %v975, 0
  %v1397 = vsel %vm1209, %v977, 0
  %v1400 = vsel %vm1209, %v979, 0
  %v1403 = vsel %vm1209, %v981, 0
  %v1406 = vsel %vm1209, %v983, 0
  %v1409 = vsel %vm1209, %v985, 0
  %v1412 = vsel %vm1209, %v987, 0
  %v1415 = vsel %vm1209, %v989, 0
  %v1418 = vsel %vm1209, %v991, 0
  %v1421 = vsel %vm1209, %v993, 0
  %v1424 = vsel %vm1209, %v995, 0
  %v1427 = vsel %vm1209, %v997, 0
  %v1430 = vsel %vm1209, %v999, 0
  %v1433 = vsel %vm1209, %v1001, 0
  %v1436 = vsel %vm1209, %v1003, 0
  %v1439 = vsel %vm1209, %v1005, 0
  %v1442 = vsel %vm1209, %v1007, 0
  %v1445 = vsel %vm1209, %v1009, 0
  %v1448 = vsel %vm1209, %v1011, 0
  %v1451 = vsel %vm1209, %v1013, 0
  %v1454 = vsel %vm1209, %v1015, 0
  %v1457 = vsel %vm1209, %v1017, 0
  %v1460 = vsel %vm1209, %v1019, 0
  %v1463 = vsel %vm1209, %v1021, 0
  %v1466 = vsel %vm1209, %v1023, 0
  %v1469 = vsel %vm1209, %v1025, 0
  %v1472 = vsel %vm1209, %v1027, 0
  %v1475 = vsel %vm1209, %v1029, 0
  %v1478 = vsel %vm1209, %v1031, 0
  %v1481 = vsel %vm1209, %v1033, 0
  %v1484 = vsel %vm1209, %v1035, 0
  %v1487 = vsel %vm1209, %v1037, 0
  %v1490 = vsel %vm1209, %v1039, 0
  %v1493 = vsel %vm1209, %v1041, 0
  %v1496 = vsel %vm1209, %v1043, 0
  %v1499 = vsel %vm1209, %v1045, 0
  %v1502 = vsel %vm1209, %v1047, 0
  %v1505 = vsel %vm1209, %v1049, 0
  %v1508 = vsel %vm1209, %v1051, 0
  %vm1510 = vcmask 1042432
  %v1512 = vsel %vm1510, %v1199, 0
  %1514 = vmatprep.subr.bf16.mxu0 0
  %1515 = vmatpush1.bf16.msra.mxu0 %v1190
  %1516 = vmatprep.subr.bf16.mxu0 0
  %1517 = vmatpush1.bf16.msra.mxu0 %v1191
  %1518 = vmatprep.subr.bf16.mxu0 0
  %1519 = vmatpush1.bf16.msra.mxu0 %v1192
  %1520 = vmatprep.subr.bf16.mxu0 0
  %1521 = vmatpush1.bf16.msra.mxu0 %v1193
  %1522 = vmatprep.subr.bf16.mxu0 0
  %1523 = vmatpush1.bf16.msra.mxu0 %v1194
  %1524 = vmatprep.subr.bf16.mxu0 0
  %1525 = vmatpush1.bf16.msra.mxu0 %v1195
  %1526 = vmatprep.subr.bf16.mxu0 0
  %1527 = vmatpush1.bf16.msra.mxu0 %v1196
  %1528 = vmatprep.subr.bf16.mxu0 0
  %1529 = vmatpush1.bf16.msra.mxu0 %v1197
  %1530 = vmatprep.subr.bf16.mxu0 0
  %1531 = vmatpush1.bf16.msra.mxu0 %v1198
  %1532 = vmatprep.subr.bf16.mxu0 0
  %1533 = vmatpush1.bf16.msra.mxu0 %v1512
  %1534 = vmatprep.subr.bf16.mxu0 0
  %1535 = vmatpush1.bf16.msra.mxu0 0
  %1536 = vmatprep.subr.bf16.mxu0 0
  %1537 = vmatpush1.bf16.msra.mxu0 0
  %1538 = vmatprep.subr.bf16.mxu0 0
  %1539 = vmatpush1.bf16.msra.mxu0 0
  %1540 = vmatprep.subr.bf16.mxu0 0
  %1541 = vmatpush1.bf16.msra.mxu0 0
  %1542 = vmatprep.subr.bf16.mxu0 0
  %1543 = vmatpush1.bf16.msra.mxu0 0
  %1544 = vmatprep.subr.bf16.mxu0 0
  %1545 = vmatpush1.bf16.msra.mxu0 0
  %1546 = vmatprep.mubr.bf16.mxu0 %v1211
  %1547 = vmatmul.mubr.bf16.gmra.mrb[0].mxu0 %v852
  %v1548 = vpop.f32.mrb[0].mxu0
  %v1549 = vadd.f32 0.0, %v1548
  %v1550 = vpop.f32.mrb[0].mxu0
  %v1551 = vpop.f32.mrb[0].mxu0
  %v1552 = vadd.f32 0.0, %v1551
  %v1553 = vpop.f32.mrb[0].mxu0
  %1554 = vmatprep.mubr.bf16.mxu0 %v1214
  %1555 = vmatmul.mubr.bf16.gmra.mrb[0].mxu0 %v854
  %v1556 = vpop.f32.mrb[0].mxu0
  %v1557 = vadd.f32 0.0, %v1556
  %v1558 = vpop.f32.mrb[0].mxu0
  %v1559 = vpop.f32.mrb[0].mxu0
  %v1560 = vadd.f32 0.0, %v1559
  %v1561 = vpop.f32.mrb[0].mxu0
  %1562 = vmatprep.mubr.bf16.mxu0 %v1217
  %1563 = vmatmul.mubr.bf16.gmra.mrb[0].mxu0 %v856
  %v1564 = vpop.f32.mrb[0].mxu0
  %v1565 = vadd.f32 0.0, %v1564
  %v1566 = vpop.f32.mrb[0].mxu0
  %v1567 = vpop.f32.mrb[0].mxu0
  %v1568 = vadd.f32 0.0, %v1567
  %v1569 = vpop.f32.mrb[0].mxu0
  %1570 = vmatprep.mubr.bf16.mxu0 %v1220
  %1571 = vmatmul.mubr.bf16.gmra.mrb[0].mxu0 %v858
  %v1572 = vpop.f32.mrb[0].mxu0
  %v1573 = vadd.f32 0.0, %v1572
  %v1574 = vpop.f32.mrb[0].mxu0
  %v1575 = vpop.f32.mrb[0].mxu0
  %v1576 = vadd.f32 0.0, %v1575
  %v1577 = vpop.f32.mrb[0].mxu0
  %1578 = vmatprep.mubr.bf16.mxu0 %v1223
  %1579 = vmatmul.mubr.bf16.gmra.mrb[0].mxu0 %v860
  %v1580 = vpop.f32.mrb[0].mxu0
  %v1581 = vadd.f32 0.0, %v1580
  %v1582 = vpop.f32.mrb[0].mxu0
  %v1583 = vpop.f32.mrb[0].mxu0
  %v1584 = vadd.f32 0.0, %v1583
  %v1585 = vpop.f32.mrb[0].mxu0
  %1586 = vmatprep.mubr.bf16.mxu0 %v1226
  %1587 = vmatmul.mubr.bf16.gmra.mrb[0].mxu0 %v862
  %v1588 = vpop.f32.mrb[0].mxu0
  %v1589 = vadd.f32 0.0, %v1588
  %v1590 = vpop.f32.mrb[0].mxu0
  %v1591 = vpop.f32.mrb[0].mxu0
  %v1592 = vadd.f32 0.0, %v1591
  %v1593 = vpop.f32.mrb[0].mxu0
  %1594 = vmatprep.mubr.bf16.mxu0 %v1229
  %1595 = vmatmul.mubr.bf16.gmra.mrb[0].mxu0 %v864
  %v1596 = vpop.f32.mrb[0].mxu0
  %v1597 = vadd.f32 0.0, %v1596
  %v1598 = vpop.f32.mrb[0].mxu0
  %v1599 = vpop.f32.mrb[0].mxu0
  %v1600 = vadd.f32 0.0, %v1599
  %v1601 = vpop.f32.mrb[0].mxu0
  %1602 = vmatprep.mubr.bf16.mxu0 %v1232
  %1603 = vmatmul.mubr.bf16.gmra.mrb[0].mxu0 %v866
  %v1604 = vpop.f32.mrb[0].mxu0
  %v1605 = vadd.f32 0.0, %v1604
  %v1606 = vpop.f32.mrb[0].mxu0
  %v1607 = vpop.f32.mrb[0].mxu0
  %v1608 = vadd.f32 0.0, %v1607
  %v1609 = vpop.f32.mrb[0].mxu0
  %1610 = vmatprep.mubr.bf16.mxu0 %v1235
  %1611 = vmatmul.mubr.bf16.gmra.mrb[0].mxu0 %v868
  %v1612 = vpop.f32.mrb[0].mxu0
  %v1613 = vadd.f32 0.0, %v1612
  %v1614 = vpop.f32.mrb[0].mxu0
  %v1615 = vpop.f32.mrb[0].mxu0
  %v1616 = vadd.f32 0.0, %v1615
  %v1617 = vpop.f32.mrb[0].mxu0
  %1618 = vmatprep.mubr.bf16.mxu0 %v1238
  %1619 = vmatmul.mubr.bf16.gmra.mrb[0].mxu0 %v870
  %v1620 = vpop.f32.mrb[0].mxu0
  %v1621 = vadd.f32 0.0, %v1620
  %v1622 = vpop.f32.mrb[0].mxu0
  %v1623 = vpop.f32.mrb[0].mxu0
  %v1624 = vadd.f32 0.0, %v1623
  %v1625 = vpop.f32.mrb[0].mxu0
  %1626 = vmatprep.mubr.bf16.mxu0 %v1241
  %1627 = vmatmul.mubr.bf16.gmra.mrb[0].mxu0 %v872
  %v1628 = vpop.f32.mrb[0].mxu0
  %v1629 = vadd.f32 0.0, %v1628
  %v1630 = vpop.f32.mrb[0].mxu0
  %v1631 = vpop.f32.mrb[0].mxu0
  %v1632 = vadd.f32 0.0, %v1631
  %v1633 = vpop.f32.mrb[0].mxu0
  %1634 = vmatprep.mubr.bf16.mxu0 %v1244
  %1635 = vmatmul.mubr.bf16.gmra.mrb[0].mxu0 %v874
  %v1636 = vpop.f32.mrb[0].mxu0
  %v1637 = vadd.f32 0.0, %v1636
  %v1638 = vpop.f32.mrb[0].mxu0
  %v1639 = vpop.f32.mrb[0].mxu0
  %v1640 = vadd.f32 0.0, %v1639
  %v1641 = vpop.f32.mrb[0].mxu0
  %1642 = vmatprep.mubr.bf16.mxu0 %v1247
  %1643 = vmatmul.mubr.bf16.gmra.mrb[0].mxu0 %v876
  %v1644 = vpop.f32.mrb[0].mxu0
  %v1645 = vadd.f32 0.0, %v1644
  %v1646 = vpop.f32.mrb[0].mxu0
  %v1647 = vpop.f32.mrb[0].mxu0
  %v1648 = vadd.f32 0.0, %v1647
  %v1649 = vpop.f32.mrb[0].mxu0
  %1650 = vmatprep.mubr.bf16.mxu0 %v1250
  %1651 = vmatmul.mubr.bf16.gmra.mrb[0].mxu0 %v878
  %v1652 = vpop.f32.mrb[0].mxu0
  %v1653 = vadd.f32 0.0, %v1652
  %v1654 = vpop.f32.mrb[0].mxu0
  %v1655 = vpop.f32.mrb[0].mxu0
  %v1656 = vadd.f32 0.0, %v1655
  %v1657 = vpop.f32.mrb[0].mxu0
  %1658 = vmatprep.mubr.bf16.mxu0 %v1253
  %1659 = vmatmul.mubr.bf16.gmra.mrb[0].mxu0 %v880
  %v1660 = vpop.f32.mrb[0].mxu0
  %v1661 = vadd.f32 0.0, %v1660
  %v1662 = vpop.f32.mrb[0].mxu0
  %v1663 = vpop.f32.mrb[0].mxu0
  %v1664 = vadd.f32 0.0, %v1663
  %v1665 = vpop.f32.mrb[0].mxu0
  %1666 = vmatprep.mubr.bf16.mxu0 %v1256
  %1667 = vmatmul.mubr.bf16.gmra.mrb[0].mxu0 %v882
  %v1668 = vpop.f32.mrb[0].mxu0
  %v1669 = vadd.f32 0.0, %v1668
  %v1670 = vpop.f32.mrb[0].mxu0
  %v1671 = vpop.f32.mrb[0].mxu0
  %v1672 = vadd.f32 0.0, %v1671
  %v1673 = vpop.f32.mrb[0].mxu0
  %1674 = vmatprep.mubr.bf16.mxu0 %v1259
  %1675 = vmatmul.mubr.bf16.gmra.mrb[0].mxu0 %v884
  %v1676 = vpop.f32.mrb[0].mxu0
  %v1677 = vadd.f32 0.0, %v1676
  %v1678 = vpop.f32.mrb[0].mxu0
  %v1679 = vpop.f32.mrb[0].mxu0
  %v1680 = vadd.f32 0.0, %v1679
  %v1681 = vpop.f32.mrb[0].mxu0
  %1682 = vmatprep.mubr.bf16.mxu0 %v1262
  %1683 = vmatmul.mubr.bf16.gmra.mrb[0].mxu0 %v886
  %v1684 = vpop.f32.mrb[0].mxu0
  %v1685 = vadd.f32 0.0, %v1684
  %v1686 = vpop.f32.mrb[0].mxu0
  %v1687 = vpop.f32.mrb[0].mxu0
  %v1688 = vadd.f32 0.0, %v1687
  %v1689 = vpop.f32.mrb[0].mxu0
  %1690 = vmatprep.mubr.bf16.mxu0 %v1265
  %1691 = vmatmul.mubr.bf16.gmra.mrb[0].mxu0 %v888
  %v1692 = vpop.f32.mrb[0].mxu0
  %v1693 = vadd.f32 0.0, %v1692
  %v1694 = vpop.f32.mrb[0].mxu0
  %v1695 = vpop.f32.mrb[0].mxu0
  %v1696 = vadd.f32 0.0, %v1695
  %v1697 = vpop.f32.mrb[0].mxu0
  %1698 = vmatprep.mubr.bf16.mxu0 %v1268
  %1699 = vmatmul.mubr.bf16.gmra.mrb[0].mxu0 %v890
  %v1700 = vpop.f32.mrb[0].mxu0
  %v1701 = vadd.f32 0.0, %v1700
  %v1702 = vpop.f32.mrb[0].mxu0
  %v1703 = vpop.f32.mrb[0].mxu0
  %v1704 = vadd.f32 0.0, %v1703
  %v1705 = vpop.f32.mrb[0].mxu0
  %1706 = vmatprep.mubr.bf16.mxu0 %v1271
  %1707 = vmatmul.mubr.bf16.gmra.mrb[0].mxu0 %v892
  %v1708 = vpop.f32.mrb[0].mxu0
  %v1709 = vadd.f32 0.0, %v1708
  %v1710 = vpop.f32.mrb[0].mxu0
  %v1711 = vpop.f32.mrb[0].mxu0
  %v1712 = vadd.f32 0.0, %v1711
  %v1713 = vpop.f32.mrb[0].mxu0
  %1714 = vmatprep.mubr.bf16.mxu0 %v1274
  %1715 = vmatmul.mubr.bf16.gmra.mrb[0].mxu0 %v894
  %v1716 = vpop.f32.mrb[0].mxu0
  %v1717 = vadd.f32 0.0, %v1716
  %v1718 = vpop.f32.mrb[0].mxu0
  %v1719 = vpop.f32.mrb[0].mxu0
  %v1720 = vadd.f32 0.0, %v1719
  %v1721 = vpop.f32.mrb[0].mxu0
  %1722 = vmatprep.mubr.bf16.mxu0 %v1277
  %1723 = vmatmul.mubr.bf16.gmra.mrb[0].mxu0 %v896
  %v1724 = vpop.f32.mrb[0].mxu0
  %v1725 = vadd.f32 0.0, %v1724
  %v1726 = vpop.f32.mrb[0].mxu0
  %v1727 = vpop.f32.mrb[0].mxu0
  %v1728 = vadd.f32 0.0, %v1727
  %v1729 = vpop.f32.mrb[0].mxu0
  %1730 = vmatprep.mubr.bf16.mxu0 %v1280
  %1731 = vmatmul.mubr.bf16.gmra.mrb[0].mxu0 %v898
  %v1732 = vpop.f32.mrb[0].mxu0
  %v1733 = vadd.f32 0.0, %v1732
  %v1734 = vpop.f32.mrb[0].mxu0
  %v1735 = vpop.f32.mrb[0].mxu0
  %v1736 = vadd.f32 0.0, %v1735
  %v1737 = vpop.f32.mrb[0].mxu0
  %1738 = vmatprep.mubr.bf16.mxu0 %v1283
  %1739 = vmatmul.mubr.bf16.gmra.mrb[0].mxu0 %v900
  %v1740 = vpop.f32.mrb[0].mxu0
  %v1741 = vadd.f32 0.0, %v1740
  %v1742 = vpop.f32.mrb[0].mxu0
  %v1743 = vpop.f32.mrb[0].mxu0
  %v1744 = vadd.f32 0.0, %v1743
  %v1745 = vpop.f32.mrb[0].mxu0
  %1746 = vmatprep.mubr.bf16.mxu0 %v1286
  %1747 = vmatmul.mubr.bf16.gmra.mrb[0].mxu0 %v902
  %v1748 = vpop.f32.mrb[0].mxu0
  %v1749 = vadd.f32 0.0, %v1748
  %v1750 = vpop.f32.mrb[0].mxu0
  %v1751 = vpop.f32.mrb[0].mxu0
  %v1752 = vadd.f32 0.0, %v1751
  %v1753 = vpop.f32.mrb[0].mxu0
  %1754 = vmatprep.mubr.bf16.mxu0 %v1289
  %1755 = vmatmul.mubr.bf16.gmra.mrb[0].mxu0 %v904
  %v1756 = vpop.f32.mrb[0].mxu0
  %v1757 = vadd.f32 0.0, %v1756
  %v1758 = vpop.f32.mrb[0].mxu0
  %v1759 = vpop.f32.mrb[0].mxu0
  %v1760 = vadd.f32 0.0, %v1759
  %v1761 = vpop.f32.mrb[0].mxu0
  %1762 = vmatprep.mubr.bf16.mxu0 %v1292
  %1763 = vmatmul.mubr.bf16.gmra.mrb[0].mxu0 %v906
  %v1764 = vpop.f32.mrb[0].mxu0
  %v1765 = vadd.f32 0.0, %v1764
  %v1766 = vpop.f32.mrb[0].mxu0
  %v1767 = vpop.f32.mrb[0].mxu0
  %v1768 = vadd.f32 0.0, %v1767
  %v1769 = vpop.f32.mrb[0].mxu0
  %1770 = vmatprep.mubr.bf16.mxu0 %v1295
  %1771 = vmatmul.mubr.bf16.gmra.mrb[0].mxu0 %v908
  %v1772 = vpop.f32.mrb[0].mxu0
  %v1773 = vadd.f32 0.0, %v1772
  %v1774 = vpop.f32.mrb[0].mxu0
  %v1775 = vpop.f32.mrb[0].mxu0
  %v1776 = vadd.f32 0.0, %v1775
  %v1777 = vpop.f32.mrb[0].mxu0
  %1778 = vmatprep.mubr.bf16.mxu0 %v1298
  %1779 = vmatmul.mubr.bf16.gmra.mrb[0].mxu0 %v910
  %v1780 = vpop.f32.mrb[0].mxu0
  %v1781 = vadd.f32 0.0, %v1780
  %v1782 = vpop.f32.mrb[0].mxu0
  %v1783 = vpop.f32.mrb[0].mxu0
  %v1784 = vadd.f32 0.0, %v1783
  %v1785 = vpop.f32.mrb[0].mxu0
  %1786 = vmatprep.mubr.bf16.mxu0 %v1301
  %1787 = vmatmul.mubr.bf16.gmra.mrb[0].mxu0 %v912
  %v1788 = vpop.f32.mrb[0].mxu0
  %v1789 = vadd.f32 0.0, %v1788
  %v1790 = vpop.f32.mrb[0].mxu0
  %v1791 = vpop.f32.mrb[0].mxu0
  %v1792 = vadd.f32 0.0, %v1791
  %v1793 = vpop.f32.mrb[0].mxu0
  %1794 = vmatprep.mubr.bf16.mxu0 %v1304
  %1795 = vmatmul.mubr.bf16.gmra.mrb[0].mxu0 %v914
  %v1796 = vpop.f32.mrb[0].mxu0
  %v1797 = vadd.f32 0.0, %v1796
  %v1798 = vpop.f32.mrb[0].mxu0
  %v1799 = vpop.f32.mrb[0].mxu0
  %v1800 = vadd.f32 0.0, %v1799
  %v1801 = vpop.f32.mrb[0].mxu0
  %1802 = vmatprep.mubr.bf16.mxu0 %v1307
  %1803 = vmatmul.mubr.bf16.gmra.mrb[0].mxu0 %v916
  %v1804 = vpop.f32.mrb[0].mxu0
  %v1805 = vadd.f32 0.0, %v1804
  %v1806 = vpop.f32.mrb[0].mxu0
  %v1807 = vpop.f32.mrb[0].mxu0
  %v1808 = vadd.f32 0.0, %v1807
  %v1809 = vpop.f32.mrb[0].mxu0
  %1810 = vmatprep.mubr.bf16.mxu0 %v1310
  %1811 = vmatmul.mubr.bf16.gmra.mrb[0].mxu0 %v918
  %v1812 = vpop.f32.mrb[0].mxu0
  %v1813 = vadd.f32 0.0, %v1812
  %v1814 = vpop.f32.mrb[0].mxu0
  %v1815 = vpop.f32.mrb[0].mxu0
  %v1816 = vadd.f32 0.0, %v1815
  %v1817 = vpop.f32.mrb[0].mxu0
  %1818 = vmatprep.mubr.bf16.mxu0 %v1313
  %1819 = vmatmul.mubr.bf16.gmra.mrb[0].mxu0 %v920
  %v1820 = vpop.f32.mrb[0].mxu0
  %v1821 = vadd.f32 0.0, %v1820
  %v1822 = vpop.f32.mrb[0].mxu0
  %v1823 = vpop.f32.mrb[0].mxu0
  %v1824 = vadd.f32 0.0, %v1823
  %v1825 = vpop.f32.mrb[0].mxu0
  %1826 = vmatprep.mubr.bf16.mxu0 %v1316
  %1827 = vmatmul.mubr.bf16.gmra.mrb[0].mxu0 %v922
  %v1828 = vpop.f32.mrb[0].mxu0
  %v1829 = vadd.f32 0.0, %v1828
  %v1830 = vpop.f32.mrb[0].mxu0
  %v1831 = vpop.f32.mrb[0].mxu0
  %v1832 = vadd.f32 0.0, %v1831
  %v1833 = vpop.f32.mrb[0].mxu0
  %1834 = vmatprep.mubr.bf16.mxu0 %v1319
  %1835 = vmatmul.mubr.bf16.gmra.mrb[0].mxu0 %v924
  %v1836 = vpop.f32.mrb[0].mxu0
  %v1837 = vadd.f32 0.0, %v1836
  %v1838 = vpop.f32.mrb[0].mxu0
  %v1839 = vpop.f32.mrb[0].mxu0
  %v1840 = vadd.f32 0.0, %v1839
  %v1841 = vpop.f32.mrb[0].mxu0
  %1842 = vmatprep.mubr.bf16.mxu0 %v1322
  %1843 = vmatmul.mubr.bf16.gmra.mrb[0].mxu0 %v926
  %v1844 = vpop.f32.mrb[0].mxu0
  %v1845 = vadd.f32 0.0, %v1844
  %v1846 = vpop.f32.mrb[0].mxu0
  %v1847 = vpop.f32.mrb[0].mxu0
  %v1848 = vadd.f32 0.0, %v1847
  %v1849 = vpop.f32.mrb[0].mxu0
  %1850 = vmatprep.mubr.bf16.mxu0 %v1325
  %1851 = vmatmul.mubr.bf16.gmra.mrb[0].mxu0 %v928
  %v1852 = vpop.f32.mrb[0].mxu0
  %v1853 = vadd.f32 0.0, %v1852
  %v1854 = vpop.f32.mrb[0].mxu0
  %v1855 = vpop.f32.mrb[0].mxu0
  %v1856 = vadd.f32 0.0, %v1855
  %v1857 = vpop.f32.mrb[0].mxu0
  %1858 = vmatprep.mubr.bf16.mxu0 %v1328
  %1859 = vmatmul.mubr.bf16.gmra.mrb[0].mxu0 %v930
  %v1860 = vpop.f32.mrb[0].mxu0
  %v1861 = vadd.f32 0.0, %v1860
  %v1862 = vpop.f32.mrb[0].mxu0
  %v1863 = vpop.f32.mrb[0].mxu0
  %v1864 = vadd.f32 0.0, %v1863
  %v1865 = vpop.f32.mrb[0].mxu0
  %1866 = vmatprep.mubr.bf16.mxu0 %v1331
  %1867 = vmatmul.mubr.bf16.gmra.mrb[0].mxu0 %v932
  %v1868 = vpop.f32.mrb[0].mxu0
  %v1869 = vadd.f32 0.0, %v1868
  %v1870 = vpop.f32.mrb[0].mxu0
  %v1871 = vpop.f32.mrb[0].mxu0
  %v1872 = vadd.f32 0.0, %v1871
  %v1873 = vpop.f32.mrb[0].mxu0
  %1874 = vmatprep.mubr.bf16.mxu0 %v1334
  %1875 = vmatmul.mubr.bf16.gmra.mrb[0].mxu0 %v934
  %v1876 = vpop.f32.mrb[0].mxu0
  %v1877 = vadd.f32 0.0, %v1876
  %v1878 = vpop.f32.mrb[0].mxu0
  %v1879 = vpop.f32.mrb[0].mxu0
  %v1880 = vadd.f32 0.0, %v1879
  %v1881 = vpop.f32.mrb[0].mxu0
  %1882 = vmatprep.mubr.bf16.mxu0 %v1337
  %1883 = vmatmul.mubr.bf16.gmra.mrb[0].mxu0 %v936
  %v1884 = vpop.f32.mrb[0].mxu0
  %v1885 = vadd.f32 0.0, %v1884
  %v1886 = vpop.f32.mrb[0].mxu0
  %v1887 = vpop.f32.mrb[0].mxu0
  %v1888 = vadd.f32 0.0, %v1887
  %v1889 = vpop.f32.mrb[0].mxu0
  %1890 = vmatprep.mubr.bf16.mxu0 %v1340
  %1891 = vmatmul.mubr.bf16.gmra.mrb[0].mxu0 %v938
  %v1892 = vpop.f32.mrb[0].mxu0
  %v1893 = vadd.f32 0.0, %v1892
  %v1894 = vpop.f32.mrb[0].mxu0
  %v1895 = vpop.f32.mrb[0].mxu0
  %v1896 = vadd.f32 0.0, %v1895
  %v1897 = vpop.f32.mrb[0].mxu0
  %1898 = vmatprep.mubr.bf16.mxu0 %v1343
  %1899 = vmatmul.mubr.bf16.gmra.mrb[0].mxu0 %v940
  %v1900 = vpop.f32.mrb[0].mxu0
  %v1901 = vadd.f32 0.0, %v1900
  %v1902 = vpop.f32.mrb[0].mxu0
  %v1903 = vpop.f32.mrb[0].mxu0
  %v1904 = vadd.f32 0.0, %v1903
  %v1905 = vpop.f32.mrb[0].mxu0
  %1906 = vmatprep.mubr.bf16.mxu0 %v1346
  %1907 = vmatmul.mubr.bf16.gmra.mrb[0].mxu0 %v942
  %v1908 = vpop.f32.mrb[0].mxu0
  %v1909 = vadd.f32 0.0, %v1908
  %v1910 = vpop.f32.mrb[0].mxu0
  %v1911 = vpop.f32.mrb[0].mxu0
  %v1912 = vadd.f32 0.0, %v1911
  %v1913 = vpop.f32.mrb[0].mxu0
  %1914 = vmatprep.mubr.bf16.mxu0 %v1349
  %1915 = vmatmul.mubr.bf16.gmra.mrb[0].mxu0 %v944
  %v1916 = vpop.f32.mrb[0].mxu0
  %v1917 = vadd.f32 0.0, %v1916
  %v1918 = vpop.f32.mrb[0].mxu0
  %v1919 = vpop.f32.mrb[0].mxu0
  %v1920 = vadd.f32 0.0, %v1919
  %v1921 = vpop.f32.mrb[0].mxu0
  %1922 = vmatprep.mubr.bf16.mxu0 %v1352
  %1923 = vmatmul.mubr.bf16.gmra.mrb[0].mxu0 %v946
  %v1924 = vpop.f32.mrb[0].mxu0
  %v1925 = vadd.f32 0.0, %v1924
  %v1926 = vpop.f32.mrb[0].mxu0
  %v1927 = vpop.f32.mrb[0].mxu0
  %v1928 = vadd.f32 0.0, %v1927
  %v1929 = vpop.f32.mrb[0].mxu0
  %1930 = vmatprep.mubr.bf16.mxu0 %v1355
  %1931 = vmatmul.mubr.bf16.gmra.mrb[0].mxu0 %v948
  %v1932 = vpop.f32.mrb[0].mxu0
  %v1933 = vadd.f32 0.0, %v1932
  %v1934 = vpop.f32.mrb[0].mxu0
  %v1935 = vpop.f32.mrb[0].mxu0
  %v1936 = vadd.f32 0.0, %v1935
  %v1937 = vpop.f32.mrb[0].mxu0
  %1938 = vmatprep.mubr.bf16.mxu0 %v1358
  %1939 = vmatmul.mubr.bf16.gmra.mrb[0].mxu0 %v950
  %v1940 = vpop.f32.mrb[0].mxu0
  %v1941 = vadd.f32 0.0, %v1940
  %v1942 = vpop.f32.mrb[0].mxu0
  %v1943 = vpop.f32.mrb[0].mxu0
  %v1944 = vadd.f32 0.0, %v1943
  %v1945 = vpop.f32.mrb[0].mxu0
  %1946 = vmatprep.mubr.bf16.mxu0 %v1361
  %1947 = vmatmul.mubr.bf16.gmra.mrb[0].mxu0 %v952
  %v1948 = vpop.f32.mrb[0].mxu0
  %v1949 = vadd.f32 0.0, %v1948
  %v1950 = vpop.f32.mrb[0].mxu0
  %v1951 = vpop.f32.mrb[0].mxu0
  %v1952 = vadd.f32 0.0, %v1951
  %v1953 = vpop.f32.mrb[0].mxu0
  %1954 = vmatprep.mubr.bf16.mxu0 %v1364
  %1955 = vmatmul.mubr.bf16.gmra.mrb[0].mxu0 %v954
  %v1956 = vpop.f32.mrb[0].mxu0
  %v1957 = vadd.f32 0.0, %v1956
  %v1958 = vpop.f32.mrb[0].mxu0
  %v1959 = vpop.f32.mrb[0].mxu0
  %v1960 = vadd.f32 0.0, %v1959
  %v1961 = vpop.f32.mrb[0].mxu0
  %1962 = vmatprep.mubr.bf16.mxu0 %v1367
  %1963 = vmatmul.mubr.bf16.gmra.mrb[0].mxu0 %v956
  %v1964 = vpop.f32.mrb[0].mxu0
  %v1965 = vadd.f32 0.0, %v1964
  %v1966 = vpop.f32.mrb[0].mxu0
  %v1967 = vpop.f32.mrb[0].mxu0
  %v1968 = vadd.f32 0.0, %v1967
  %v1969 = vpop.f32.mrb[0].mxu0
  %1970 = vmatprep.mubr.bf16.mxu0 %v1370
  %1971 = vmatmul.mubr.bf16.gmra.mrb[0].mxu0 %v958
  %v1972 = vpop.f32.mrb[0].mxu0
  %v1973 = vadd.f32 0.0, %v1972
  %v1974 = vpop.f32.mrb[0].mxu0
  %v1975 = vpop.f32.mrb[0].mxu0
  %v1976 = vadd.f32 0.0, %v1975
  %v1977 = vpop.f32.mrb[0].mxu0
  %1978 = vmatprep.mubr.bf16.mxu0 %v1373
  %1979 = vmatmul.mubr.bf16.gmra.mrb[0].mxu0 %v960
  %v1980 = vpop.f32.mrb[0].mxu0
  %v1981 = vadd.f32 0.0, %v1980
  %v1982 = vpop.f32.mrb[0].mxu0
  %v1983 = vpop.f32.mrb[0].mxu0
  %v1984 = vadd.f32 0.0, %v1983
  %v1985 = vpop.f32.mrb[0].mxu0
  %1986 = vmatprep.mubr.bf16.mxu0 %v1376
  %1987 = vmatmul.mubr.bf16.gmra.mrb[0].mxu0 %v962
  %v1988 = vpop.f32.mrb[0].mxu0
  %v1989 = vadd.f32 0.0, %v1988
  %v1990 = vpop.f32.mrb[0].mxu0
  %v1991 = vpop.f32.mrb[0].mxu0
  %v1992 = vadd.f32 0.0, %v1991
  %v1993 = vpop.f32.mrb[0].mxu0
  %1994 = vmatprep.mubr.bf16.mxu0 %v1379
  %1995 = vmatmul.mubr.bf16.gmra.mrb[0].mxu0 %v964
  %v1996 = vpop.f32.mrb[0].mxu0
  %v1997 = vadd.f32 0.0, %v1996
  %v1998 = vpop.f32.mrb[0].mxu0
  %v1999 = vpop.f32.mrb[0].mxu0
  %v2000 = vadd.f32 0.0, %v1999
  %v2001 = vpop.f32.mrb[0].mxu0
  %2002 = vmatprep.mubr.bf16.mxu0 %v1382
  %2003 = vmatmul.mubr.bf16.gmra.mrb[0].mxu0 %v966
  %v2004 = vpop.f32.mrb[0].mxu0
  %v2005 = vadd.f32 0.0, %v2004
  %v2006 = vpop.f32.mrb[0].mxu0
  %v2007 = vpop.f32.mrb[0].mxu0
  %v2008 = vadd.f32 0.0, %v2007
  %v2009 = vpop.f32.mrb[0].mxu0
  %2010 = vmatprep.mubr.bf16.mxu0 %v1385
  %2011 = vmatmul.mubr.bf16.gmra.mrb[0].mxu0 %v968
  %v2012 = vpop.f32.mrb[0].mxu0
  %v2013 = vadd.f32 0.0, %v2012
  %v2014 = vpop.f32.mrb[0].mxu0
  %v2015 = vpop.f32.mrb[0].mxu0
  %v2016 = vadd.f32 0.0, %v2015
  %v2017 = vpop.f32.mrb[0].mxu0
  %2018 = vmatprep.mubr.bf16.mxu0 %v1388
  %2019 = vmatmul.mubr.bf16.gmra.mrb[0].mxu0 %v970
  %v2020 = vpop.f32.mrb[0].mxu0
  %v2021 = vadd.f32 0.0, %v2020
  %v2022 = vpop.f32.mrb[0].mxu0
  %v2023 = vpop.f32.mrb[0].mxu0
  %v2024 = vadd.f32 0.0, %v2023
  %v2025 = vpop.f32.mrb[0].mxu0
  %2026 = vmatprep.mubr.bf16.mxu0 %v1391
  %2027 = vmatmul.mubr.bf16.gmra.mrb[0].mxu0 %v972
  %v2028 = vpop.f32.mrb[0].mxu0
  %v2029 = vadd.f32 0.0, %v2028
  %v2030 = vpop.f32.mrb[0].mxu0
  %v2031 = vpop.f32.mrb[0].mxu0
  %v2032 = vadd.f32 0.0, %v2031
  %v2033 = vpop.f32.mrb[0].mxu0
  %2034 = vmatprep.mubr.bf16.mxu0 %v1394
  %2035 = vmatmul.mubr.bf16.gmra.mrb[0].mxu0 %v974
  %v2036 = vpop.f32.mrb[0].mxu0
  %v2037 = vadd.f32 0.0, %v2036
  %v2038 = vpop.f32.mrb[0].mxu0
  %v2039 = vpop.f32.mrb[0].mxu0
  %v2040 = vadd.f32 0.0, %v2039
  %v2041 = vpop.f32.mrb[0].mxu0
  %2042 = vmatprep.mubr.bf16.mxu0 %v1397
  %2043 = vmatmul.mubr.bf16.gmra.mrb[0].mxu0 %v976
  %v2044 = vpop.f32.mrb[0].mxu0
  %v2045 = vadd.f32 0.0, %v2044
  %v2046 = vpop.f32.mrb[0].mxu0
  %v2047 = vpop.f32.mrb[0].mxu0
  %v2048 = vadd.f32 0.0, %v2047
  %v2049 = vpop.f32.mrb[0].mxu0
  %2050 = vmatprep.mubr.bf16.mxu0 %v1400
  %2051 = vmatmul.mubr.bf16.gmra.mrb[0].mxu0 %v978
  %v2052 = vpop.f32.mrb[0].mxu0
  %v2053 = vadd.f32 0.0, %v2052
  %v2054 = vpop.f32.mrb[0].mxu0
  %v2055 = vpop.f32.mrb[0].mxu0
  %v2056 = vadd.f32 0.0, %v2055
  %v2057 = vpop.f32.mrb[0].mxu0
  %2058 = vmatprep.mubr.bf16.mxu0 %v1403
  %2059 = vmatmul.mubr.bf16.gmra.mrb[0].mxu0 %v980
  %v2060 = vpop.f32.mrb[0].mxu0
  %v2061 = vadd.f32 0.0, %v2060
  %v2062 = vpop.f32.mrb[0].mxu0
  %v2063 = vpop.f32.mrb[0].mxu0
  %v2064 = vadd.f32 0.0, %v2063
  %v2065 = vpop.f32.mrb[0].mxu0
  %2066 = vmatprep.mubr.bf16.mxu0 %v1406
  %2067 = vmatmul.mubr.bf16.gmra.mrb[0].mxu0 %v982
  %v2068 = vpop.f32.mrb[0].mxu0
  %v2069 = vadd.f32 0.0, %v2068
  %v2070 = vpop.f32.mrb[0].mxu0
  %v2071 = vpop.f32.mrb[0].mxu0
  %v2072 = vadd.f32 0.0, %v2071
  %v2073 = vpop.f32.mrb[0].mxu0
  %2074 = vmatprep.mubr.bf16.mxu0 %v1409
  %2075 = vmatmul.mubr.bf16.gmra.mrb[0].mxu0 %v984
  %v2076 = vpop.f32.mrb[0].mxu0
  %v2077 = vadd.f32 0.0, %v2076
  %v2078 = vpop.f32.mrb[0].mxu0
  %v2079 = vpop.f32.mrb[0].mxu0
  %v2080 = vadd.f32 0.0, %v2079
  %v2081 = vpop.f32.mrb[0].mxu0
  %2082 = vmatprep.mubr.bf16.mxu0 %v1412
  %2083 = vmatmul.mubr.bf16.gmra.mrb[0].mxu0 %v986
  %v2084 = vpop.f32.mrb[0].mxu0
  %v2085 = vadd.f32 0.0, %v2084
  %v2086 = vpop.f32.mrb[0].mxu0
  %v2087 = vpop.f32.mrb[0].mxu0
  %v2088 = vadd.f32 0.0, %v2087
  %v2089 = vpop.f32.mrb[0].mxu0
  %2090 = vmatprep.mubr.bf16.mxu0 %v1415
  %2091 = vmatmul.mubr.bf16.gmra.mrb[0].mxu0 %v988
  %v2092 = vpop.f32.mrb[0].mxu0
  %v2093 = vadd.f32 0.0, %v2092
  %v2094 = vpop.f32.mrb[0].mxu0
  %v2095 = vpop.f32.mrb[0].mxu0
  %v2096 = vadd.f32 0.0, %v2095
  %v2097 = vpop.f32.mrb[0].mxu0
  %2098 = vmatprep.mubr.bf16.mxu0 %v1418
  %2099 = vmatmul.mubr.bf16.gmra.mrb[0].mxu0 %v990
  %v2100 = vpop.f32.mrb[0].mxu0
  %v2101 = vadd.f32 0.0, %v2100
  %v2102 = vpop.f32.mrb[0].mxu0
  %v2103 = vpop.f32.mrb[0].mxu0
  %v2104 = vadd.f32 0.0, %v2103
  %v2105 = vpop.f32.mrb[0].mxu0
  %2106 = vmatprep.mubr.bf16.mxu0 %v1421
  %2107 = vmatmul.mubr.bf16.gmra.mrb[0].mxu0 %v992
  %v2108 = vpop.f32.mrb[0].mxu0
  %v2109 = vadd.f32 0.0, %v2108
  %v2110 = vpop.f32.mrb[0].mxu0
  %v2111 = vpop.f32.mrb[0].mxu0
  %v2112 = vadd.f32 0.0, %v2111
  %v2113 = vpop.f32.mrb[0].mxu0
  %2114 = vmatprep.mubr.bf16.mxu0 %v1424
  %2115 = vmatmul.mubr.bf16.gmra.mrb[0].mxu0 %v994
  %v2116 = vpop.f32.mrb[0].mxu0
  %v2117 = vadd.f32 0.0, %v2116
  %v2118 = vpop.f32.mrb[0].mxu0
  %v2119 = vpop.f32.mrb[0].mxu0
  %v2120 = vadd.f32 0.0, %v2119
  %v2121 = vpop.f32.mrb[0].mxu0
  %2122 = vmatprep.mubr.bf16.mxu0 %v1427
  %2123 = vmatmul.mubr.bf16.gmra.mrb[0].mxu0 %v996
  %v2124 = vpop.f32.mrb[0].mxu0
  %v2125 = vadd.f32 0.0, %v2124
  %v2126 = vpop.f32.mrb[0].mxu0
  %v2127 = vpop.f32.mrb[0].mxu0
  %v2128 = vadd.f32 0.0, %v2127
  %v2129 = vpop.f32.mrb[0].mxu0
  %2130 = vmatprep.mubr.bf16.mxu0 %v1430
  %2131 = vmatmul.mubr.bf16.gmra.mrb[0].mxu0 %v998
  %v2132 = vpop.f32.mrb[0].mxu0
  %v2133 = vadd.f32 0.0, %v2132
  %v2134 = vpop.f32.mrb[0].mxu0
  %v2135 = vpop.f32.mrb[0].mxu0
  %v2136 = vadd.f32 0.0, %v2135
  %v2137 = vpop.f32.mrb[0].mxu0
  %2138 = vmatprep.mubr.bf16.mxu0 %v1433
  %2139 = vmatmul.mubr.bf16.gmra.mrb[0].mxu0 %v1000
  %v2140 = vpop.f32.mrb[0].mxu0
  %v2141 = vadd.f32 0.0, %v2140
  %v2142 = vpop.f32.mrb[0].mxu0
  %v2143 = vpop.f32.mrb[0].mxu0
  %v2144 = vadd.f32 0.0, %v2143
  %v2145 = vpop.f32.mrb[0].mxu0
  %2146 = vmatprep.mubr.bf16.mxu0 %v1436
  %2147 = vmatmul.mubr.bf16.gmra.mrb[0].mxu0 %v1002
  %v2148 = vpop.f32.mrb[0].mxu0
  %v2149 = vadd.f32 0.0, %v2148
  %v2150 = vpop.f32.mrb[0].mxu0
  %v2151 = vpop.f32.mrb[0].mxu0
  %v2152 = vadd.f32 0.0, %v2151
  %v2153 = vpop.f32.mrb[0].mxu0
  %2154 = vmatprep.mubr.bf16.mxu0 %v1439
  %2155 = vmatmul.mubr.bf16.gmra.mrb[0].mxu0 %v1004
  %v2156 = vpop.f32.mrb[0].mxu0
  %v2157 = vadd.f32 0.0, %v2156
  %v2158 = vpop.f32.mrb[0].mxu0
  %v2159 = vpop.f32.mrb[0].mxu0
  %v2160 = vadd.f32 0.0, %v2159
  %v2161 = vpop.f32.mrb[0].mxu0
  %2162 = vmatprep.mubr.bf16.mxu0 %v1442
  %2163 = vmatmul.mubr.bf16.gmra.mrb[0].mxu0 %v1006
  %v2164 = vpop.f32.mrb[0].mxu0
  %v2165 = vadd.f32 0.0, %v2164
  %v2166 = vpop.f32.mrb[0].mxu0
  %v2167 = vpop.f32.mrb[0].mxu0
  %v2168 = vadd.f32 0.0, %v2167
  %v2169 = vpop.f32.mrb[0].mxu0
  %2170 = vmatprep.mubr.bf16.mxu0 %v1445
  %2171 = vmatmul.mubr.bf16.gmra.mrb[0].mxu0 %v1008
  %v2172 = vpop.f32.mrb[0].mxu0
  %v2173 = vadd.f32 0.0, %v2172
  %v2174 = vpop.f32.mrb[0].mxu0
  %v2175 = vpop.f32.mrb[0].mxu0
  %v2176 = vadd.f32 0.0, %v2175
  %v2177 = vpop.f32.mrb[0].mxu0
  %2178 = vmatprep.mubr.bf16.mxu0 %v1448
  %2179 = vmatmul.mubr.bf16.gmra.mrb[0].mxu0 %v1010
  %v2180 = vpop.f32.mrb[0].mxu0
  %v2181 = vadd.f32 0.0, %v2180
  %v2182 = vpop.f32.mrb[0].mxu0
  %v2183 = vpop.f32.mrb[0].mxu0
  %v2184 = vadd.f32 0.0, %v2183
  %v2185 = vpop.f32.mrb[0].mxu0
  %2186 = vmatprep.mubr.bf16.mxu0 %v1451
  %2187 = vmatmul.mubr.bf16.gmra.mrb[0].mxu0 %v1012
  %v2188 = vpop.f32.mrb[0].mxu0
  %v2189 = vadd.f32 0.0, %v2188
  %v2190 = vpop.f32.mrb[0].mxu0
  %v2191 = vpop.f32.mrb[0].mxu0
  %v2192 = vadd.f32 0.0, %v2191
  %v2193 = vpop.f32.mrb[0].mxu0
  %2194 = vmatprep.mubr.bf16.mxu0 %v1454
  %2195 = vmatmul.mubr.bf16.gmra.mrb[0].mxu0 %v1014
  %v2196 = vpop.f32.mrb[0].mxu0
  %v2197 = vadd.f32 0.0, %v2196
  %v2198 = vpop.f32.mrb[0].mxu0
  %v2199 = vpop.f32.mrb[0].mxu0
  %v2200 = vadd.f32 0.0, %v2199
  %v2201 = vpop.f32.mrb[0].mxu0
  %2202 = vmatprep.mubr.bf16.mxu0 %v1457
  %2203 = vmatmul.mubr.bf16.gmra.mrb[0].mxu0 %v1016
  %v2204 = vpop.f32.mrb[0].mxu0
  %v2205 = vadd.f32 0.0, %v2204
  %v2206 = vpop.f32.mrb[0].mxu0
  %v2207 = vpop.f32.mrb[0].mxu0
  %v2208 = vadd.f32 0.0, %v2207
  %v2209 = vpop.f32.mrb[0].mxu0
  %2210 = vmatprep.mubr.bf16.mxu0 %v1460
  %2211 = vmatmul.mubr.bf16.gmra.mrb[0].mxu0 %v1018
  %v2212 = vpop.f32.mrb[0].mxu0
  %v2213 = vadd.f32 0.0, %v2212
  %v2214 = vpop.f32.mrb[0].mxu0
  %v2215 = vpop.f32.mrb[0].mxu0
  %v2216 = vadd.f32 0.0, %v2215
  %v2217 = vpop.f32.mrb[0].mxu0
  %2218 = vmatprep.mubr.bf16.mxu0 %v1463
  %2219 = vmatmul.mubr.bf16.gmra.mrb[0].mxu0 %v1020
  %v2220 = vpop.f32.mrb[0].mxu0
  %v2221 = vadd.f32 0.0, %v2220
  %v2222 = vpop.f32.mrb[0].mxu0
  %v2223 = vpop.f32.mrb[0].mxu0
  %v2224 = vadd.f32 0.0, %v2223
  %v2225 = vpop.f32.mrb[0].mxu0
  %2226 = vmatprep.mubr.bf16.mxu0 %v1466
  %2227 = vmatmul.mubr.bf16.gmra.mrb[0].mxu0 %v1022
  %v2228 = vpop.f32.mrb[0].mxu0
  %v2229 = vadd.f32 0.0, %v2228
  %v2230 = vpop.f32.mrb[0].mxu0
  %v2231 = vpop.f32.mrb[0].mxu0
  %v2232 = vadd.f32 0.0, %v2231
  %v2233 = vpop.f32.mrb[0].mxu0
  %2234 = vmatprep.mubr.bf16.mxu0 %v1469
  %2235 = vmatmul.mubr.bf16.gmra.mrb[0].mxu0 %v1024
  %v2236 = vpop.f32.mrb[0].mxu0
  %v2237 = vadd.f32 0.0, %v2236
  %v2238 = vpop.f32.mrb[0].mxu0
  %v2239 = vpop.f32.mrb[0].mxu0
  %v2240 = vadd.f32 0.0, %v2239
  %v2241 = vpop.f32.mrb[0].mxu0
  %2242 = vmatprep.mubr.bf16.mxu0 %v1472
  %2243 = vmatmul.mubr.bf16.gmra.mrb[0].mxu0 %v1026
  %v2244 = vpop.f32.mrb[0].mxu0
  %v2245 = vadd.f32 0.0, %v2244
  %v2246 = vpop.f32.mrb[0].mxu0
  %v2247 = vpop.f32.mrb[0].mxu0
  %v2248 = vadd.f32 0.0, %v2247
  %v2249 = vpop.f32.mrb[0].mxu0
  %2250 = vmatprep.mubr.bf16.mxu0 %v1475
  %2251 = vmatmul.mubr.bf16.gmra.mrb[0].mxu0 %v1028
  %v2252 = vpop.f32.mrb[0].mxu0
  %v2253 = vadd.f32 0.0, %v2252
  %v2254 = vpop.f32.mrb[0].mxu0
  %v2255 = vpop.f32.mrb[0].mxu0
  %v2256 = vadd.f32 0.0, %v2255
  %v2257 = vpop.f32.mrb[0].mxu0
  %2258 = vmatprep.mubr.bf16.mxu0 %v1478
  %2259 = vmatmul.mubr.bf16.gmra.mrb[0].mxu0 %v1030
  %v2260 = vpop.f32.mrb[0].mxu0
  %v2261 = vadd.f32 0.0, %v2260
  %v2262 = vpop.f32.mrb[0].mxu0
  %v2263 = vpop.f32.mrb[0].mxu0
  %v2264 = vadd.f32 0.0, %v2263
  %v2265 = vpop.f32.mrb[0].mxu0
  %2266 = vmatprep.mubr.bf16.mxu0 %v1481
  %2267 = vmatmul.mubr.bf16.gmra.mrb[0].mxu0 %v1032
  %v2268 = vpop.f32.mrb[0].mxu0
  %v2269 = vadd.f32 0.0, %v2268
  %v2270 = vpop.f32.mrb[0].mxu0
  %v2271 = vpop.f32.mrb[0].mxu0
  %v2272 = vadd.f32 0.0, %v2271
  %v2273 = vpop.f32.mrb[0].mxu0
  %2274 = vmatprep.mubr.bf16.mxu0 %v1484
  %2275 = vmatmul.mubr.bf16.gmra.mrb[0].mxu0 %v1034
  %v2276 = vpop.f32.mrb[0].mxu0
  %v2277 = vadd.f32 0.0, %v2276
  %v2278 = vpop.f32.mrb[0].mxu0
  %v2279 = vpop.f32.mrb[0].mxu0
  %v2280 = vadd.f32 0.0, %v2279
  %v2281 = vpop.f32.mrb[0].mxu0
  %2282 = vmatprep.mubr.bf16.mxu0 %v1487
  %2283 = vmatmul.mubr.bf16.gmra.mrb[0].mxu0 %v1036
  %v2284 = vpop.f32.mrb[0].mxu0
  %v2285 = vadd.f32 0.0, %v2284
  %v2286 = vpop.f32.mrb[0].mxu0
  %v2287 = vpop.f32.mrb[0].mxu0
  %v2288 = vadd.f32 0.0, %v2287
  %v2289 = vpop.f32.mrb[0].mxu0
  %2290 = vmatprep.mubr.bf16.mxu0 %v1490
  %2291 = vmatmul.mubr.bf16.gmra.mrb[0].mxu0 %v1038
  %v2292 = vpop.f32.mrb[0].mxu0
  %v2293 = vadd.f32 0.0, %v2292
  %v2294 = vpop.f32.mrb[0].mxu0
  %v2295 = vpop.f32.mrb[0].mxu0
  %v2296 = vadd.f32 0.0, %v2295
  %v2297 = vpop.f32.mrb[0].mxu0
  %2298 = vmatprep.mubr.bf16.mxu0 %v1493
  %2299 = vmatmul.mubr.bf16.gmra.mrb[0].mxu0 %v1040
  %v2300 = vpop.f32.mrb[0].mxu0
  %v2301 = vadd.f32 0.0, %v2300
  %v2302 = vpop.f32.mrb[0].mxu0
  %v2303 = vpop.f32.mrb[0].mxu0
  %v2304 = vadd.f32 0.0, %v2303
  %v2305 = vpop.f32.mrb[0].mxu0
  %2306 = vmatprep.mubr.bf16.mxu0 %v1496
  %2307 = vmatmul.mubr.bf16.gmra.mrb[0].mxu0 %v1042
  %v2308 = vpop.f32.mrb[0].mxu0
  %v2309 = vadd.f32 0.0, %v2308
  %v2310 = vpop.f32.mrb[0].mxu0
  %v2311 = vpop.f32.mrb[0].mxu0
  %v2312 = vadd.f32 0.0, %v2311
  %v2313 = vpop.f32.mrb[0].mxu0
  %2314 = vmatprep.mubr.bf16.mxu0 %v1499
  %2315 = vmatmul.mubr.bf16.gmra.mrb[0].mxu0 %v1044
  %v2316 = vpop.f32.mrb[0].mxu0
  %v2317 = vadd.f32 0.0, %v2316
  %v2318 = vpop.f32.mrb[0].mxu0
  %v2319 = vpop.f32.mrb[0].mxu0
  %v2320 = vadd.f32 0.0, %v2319
  %v2321 = vpop.f32.mrb[0].mxu0
  %2322 = vmatprep.mubr.bf16.mxu0 %v1502
  %2323 = vmatmul.mubr.bf16.gmra.mrb[0].mxu0 %v1046
  %v2324 = vpop.f32.mrb[0].mxu0
  %v2325 = vadd.f32 0.0, %v2324
  %v2326 = vpop.f32.mrb[0].mxu0
  %v2327 = vpop.f32.mrb[0].mxu0
  %v2328 = vadd.f32 0.0, %v2327
  %v2329 = vpop.f32.mrb[0].mxu0
  %2330 = vmatprep.mubr.bf16.mxu0 %v1505
  %2331 = vmatmul.mubr.bf16.gmra.mrb[0].mxu0 %v1048
  %v2332 = vpop.f32.mrb[0].mxu0
  %v2333 = vadd.f32 0.0, %v2332
  %v2334 = vpop.f32.mrb[0].mxu0
  %v2335 = vpop.f32.mrb[0].mxu0
  %v2336 = vadd.f32 0.0, %v2335
  %v2337 = vpop.f32.mrb[0].mxu0
  %2338 = vmatprep.mubr.bf16.mxu0 %v1508
  %2339 = vmatmul.mubr.bf16.gmra.mrb[0].mxu0 %v1050
  %v2340 = vpop.f32.mrb[0].mxu0
  %v2341 = vadd.f32 0.0, %v2340
  %v2342 = vpop.f32.mrb[0].mxu0
  %v2343 = vpop.f32.mrb[0].mxu0
  %v2344 = vadd.f32 0.0, %v2343
  %v2345 = vpop.f32.mrb[0].mxu0
  %2346 = vdwg.mxu0
  %v2347 = vmax.f32 %v1549, %v1749
  %v2348 = vmax.f32 %v1552, %v1752
  %v2349 = vmax.f32 %v1557, %v1757
  %v2350 = vmax.f32 %v1560, %v1760
  %v2351 = vmax.f32 %v1565, %v1765
  %v2352 = vmax.f32 %v1568, %v1768
  %v2353 = vmax.f32 %v1573, %v1773
  %v2354 = vmax.f32 %v1576, %v1776
  %v2355 = vmax.f32 %v1581, %v1781
  %v2356 = vmax.f32 %v1584, %v1784
  %v2357 = vmax.f32 %v1589, %v1789
  %v2358 = vmax.f32 %v1592, %v1792
  %v2359 = vmax.f32 %v1597, %v1797
  %v2360 = vmax.f32 %v1600, %v1800
  %v2361 = vmax.f32 %v1605, %v1805
  %v2362 = vmax.f32 %v1608, %v1808
  %v2363 = vmax.f32 %v1613, %v1813
  %v2364 = vmax.f32 %v1616, %v1816
  %v2365 = vmax.f32 %v1621, %v1821
  %v2366 = vmax.f32 %v1624, %v1824
  %v2367 = vmax.f32 %v1629, %v1829
  %v2368 = vmax.f32 %v1632, %v1832
  %v2369 = vmax.f32 %v1637, %v1837
  %v2370 = vmax.f32 %v1640, %v1840
  %v2371 = vmax.f32 %v1645, %v1845
  %v2372 = vmax.f32 %v1648, %v1848
  %v2373 = vmax.f32 %v1653, %v1853
  %v2374 = vmax.f32 %v1656, %v1856
  %v2375 = vmax.f32 %v1661, %v1861
  %v2376 = vmax.f32 %v1664, %v1864
  %v2377 = vmax.f32 %v1669, %v1869
  %v2378 = vmax.f32 %v1672, %v1872
  %v2379 = vmax.f32 %v1677, %v1877
  %v2380 = vmax.f32 %v1680, %v1880
  %v2381 = vmax.f32 %v1685, %v1885
  %v2382 = vmax.f32 %v1688, %v1888
  %v2383 = vmax.f32 %v1693, %v1893
  %v2384 = vmax.f32 %v1696, %v1896
  %v2385 = vmax.f32 %v1701, %v1901
  %v2386 = vmax.f32 %v1704, %v1904
  %v2387 = vmax.f32 %v1709, %v1909
  %v2388 = vmax.f32 %v1712, %v1912
  %v2389 = vmax.f32 %v1717, %v1917
  %v2390 = vmax.f32 %v1720, %v1920
  %v2391 = vmax.f32 %v1725, %v1925
  %v2392 = vmax.f32 %v1728, %v1928
  %v2393 = vmax.f32 %v1733, %v1933
  %v2394 = vmax.f32 %v1736, %v1936
  %v2395 = vmax.f32 %v1741, %v1941
  %v2396 = vmax.f32 %v1744, %v1944
  %v2397 = vmax.f32 %v1949, %v2149
  %v2398 = vmax.f32 %v1952, %v2152
  %v2399 = vmax.f32 %v1957, %v2157
  %v2400 = vmax.f32 %v1960, %v2160
  %v2401 = vmax.f32 %v1965, %v2165
  %v2402 = vmax.f32 %v1968, %v2168
  %v2403 = vmax.f32 %v1973, %v2173
  %v2404 = vmax.f32 %v1976, %v2176
  %v2405 = vmax.f32 %v1981, %v2181
  %v2406 = vmax.f32 %v1984, %v2184
  %v2407 = vmax.f32 %v1989, %v2189
  %v2408 = vmax.f32 %v1992, %v2192
  %v2409 = vmax.f32 %v1997, %v2197
  %v2410 = vmax.f32 %v2000, %v2200
  %v2411 = vmax.f32 %v2005, %v2205
  %v2412 = vmax.f32 %v2008, %v2208
  %v2413 = vmax.f32 %v2013, %v2213
  %v2414 = vmax.f32 %v2016, %v2216
  %v2415 = vmax.f32 %v2021, %v2221
  %v2416 = vmax.f32 %v2024, %v2224
  %v2417 = vmax.f32 %v2029, %v2229
  %v2418 = vmax.f32 %v2032, %v2232
  %v2419 = vmax.f32 %v2037, %v2237
  %v2420 = vmax.f32 %v2040, %v2240
  %v2421 = vmax.f32 %v2045, %v2245
  %v2422 = vmax.f32 %v2048, %v2248
  %v2423 = vmax.f32 %v2053, %v2253
  %v2424 = vmax.f32 %v2056, %v2256
  %v2425 = vmax.f32 %v2061, %v2261
  %v2426 = vmax.f32 %v2064, %v2264
  %v2427 = vmax.f32 %v2069, %v2269
  %v2428 = vmax.f32 %v2072, %v2272
  %v2429 = vmax.f32 %v2077, %v2277
  %v2430 = vmax.f32 %v2080, %v2280
  %v2431 = vmax.f32 %v2085, %v2285
  %v2432 = vmax.f32 %v2088, %v2288
  %v2433 = vmax.f32 %v2093, %v2293
  %v2434 = vmax.f32 %v2096, %v2296
  %v2435 = vmax.f32 %v2101, %v2301
  %v2436 = vmax.f32 %v2104, %v2304
  %v2437 = vmax.f32 %v2109, %v2309
  %v2438 = vmax.f32 %v2112, %v2312
  %v2439 = vmax.f32 %v2117, %v2317
  %v2440 = vmax.f32 %v2120, %v2320
  %v2441 = vmax.f32 %v2125, %v2325
  %v2442 = vmax.f32 %v2128, %v2328
  %v2443 = vmax.f32 %v2133, %v2333
  %v2444 = vmax.f32 %v2136, %v2336
  %v2445 = vmax.f32 %v2141, %v2341
  %v2446 = vmax.f32 %v2144, %v2344
  %v2447 = vmax.f32 %v2347, %v2397
  %v2448 = vmax.f32 %v2348, %v2398
  %v2449 = vmax.f32 %v2349, %v2399
  %v2450 = vmax.f32 %v2350, %v2400
  %v2451 = vmax.f32 %v2351, %v2401
  %v2452 = vmax.f32 %v2352, %v2402
  %v2453 = vmax.f32 %v2353, %v2403
  %v2454 = vmax.f32 %v2354, %v2404
  %v2455 = vmax.f32 %v2355, %v2405
  %v2456 = vmax.f32 %v2356, %v2406
  %v2457 = vmax.f32 %v2357, %v2407
  %v2458 = vmax.f32 %v2358, %v2408
  %v2459 = vmax.f32 %v2359, %v2409
  %v2460 = vmax.f32 %v2360, %v2410
  %v2461 = vmax.f32 %v2361, %v2411
  %v2462 = vmax.f32 %v2362, %v2412
  %v2463 = vmax.f32 %v2363, %v2413
  %v2464 = vmax.f32 %v2364, %v2414
  %v2465 = vmax.f32 %v2365, %v2415
  %v2466 = vmax.f32 %v2366, %v2416
  %v2467 = vmax.f32 %v2367, %v2417
  %v2468 = vmax.f32 %v2368, %v2418
  %v2469 = vmax.f32 %v2369, %v2419
  %v2470 = vmax.f32 %v2370, %v2420
  %v2471 = vmax.f32 %v2371, %v2421
  %v2472 = vmax.f32 %v2372, %v2422
  %v2473 = vmax.f32 %v2373, %v2423
  %v2474 = vmax.f32 %v2374, %v2424
  %v2475 = vmax.f32 %v2375, %v2425
  %v2476 = vmax.f32 %v2376, %v2426
  %v2477 = vmax.f32 %v2377, %v2427
  %v2478 = vmax.f32 %v2378, %v2428
  %v2479 = vmax.f32 %v2379, %v2429
  %v2480 = vmax.f32 %v2380, %v2430
  %v2481 = vmax.f32 %v2381, %v2431
  %v2482 = vmax.f32 %v2382, %v2432
  %v2483 = vmax.f32 %v2383, %v2433
  %v2484 = vmax.f32 %v2384, %v2434
  %v2485 = vmax.f32 %v2385, %v2435
  %v2486 = vmax.f32 %v2386, %v2436
  %v2487 = vmax.f32 %v2387, %v2437
  %v2488 = vmax.f32 %v2388, %v2438
  %v2489 = vmax.f32 %v2389, %v2439
  %v2490 = vmax.f32 %v2390, %v2440
  %v2491 = vmax.f32 %v2391, %v2441
  %v2492 = vmax.f32 %v2392, %v2442
  %v2493 = vmax.f32 %v2393, %v2443
  %v2494 = vmax.f32 %v2394, %v2444
  %v2495 = vmax.f32 %v2395, %v2445
  %v2496 = vmax.f32 %v2396, %v2446
  %v2497 = vld [vmem:[%s2] sm:$0x1]
  %v2499 = vlaneseq
  %v2500 = vshrl.u32 %v2499, 7
  %v2501 = vsub.s32 0, %v2500
  %v2502 = vrot.slane %v2497, %v2501
  %v2504 = vadd.f32 %v2447, %v2502
  %v2505 = vadd.f32 %v2448, %v2502
  %v2506 = vadd.f32 %v2449, %v2502
  %v2507 = vadd.f32 %v2450, %v2502
  %v2508 = vadd.f32 %v2451, %v2502
  %v2509 = vadd.f32 %v2452, %v2502
  %v2510 = vadd.f32 %v2453, %v2502
  %v2511 = vadd.f32 %v2454, %v2502
  %v2512 = vadd.f32 %v2455, %v2502
  %v2513 = vadd.f32 %v2456, %v2502
  %v2514 = vadd.f32 %v2457, %v2502
  %v2515 = vadd.f32 %v2458, %v2502
  %v2516 = vadd.f32 %v2459, %v2502
  %v2517 = vadd.f32 %v2460, %v2502
  %v2518 = vadd.f32 %v2461, %v2502
  %v2519 = vadd.f32 %v2462, %v2502
  %v2520 = vadd.f32 %v2463, %v2502
  %v2521 = vadd.f32 %v2464, %v2502
  %v2522 = vadd.f32 %v2465, %v2502
  %v2523 = vadd.f32 %v2466, %v2502
  %v2524 = vadd.f32 %v2467, %v2502
  %v2525 = vadd.f32 %v2468, %v2502
  %v2526 = vadd.f32 %v2469, %v2502
  %v2527 = vadd.f32 %v2470, %v2502
  %v2528 = vadd.f32 %v2471, %v2502
  %v2529 = vadd.f32 %v2472, %v2502
  %v2530 = vadd.f32 %v2473, %v2502
  %v2531 = vadd.f32 %v2474, %v2502
  %v2532 = vadd.f32 %v2475, %v2502
  %v2533 = vadd.f32 %v2476, %v2502
  %v2534 = vadd.f32 %v2477, %v2502
  %v2535 = vadd.f32 %v2478, %v2502
  %v2536 = vadd.f32 %v2479, %v2502
  %v2537 = vadd.f32 %v2480, %v2502
  %v2538 = vadd.f32 %v2481, %v2502
  %v2539 = vadd.f32 %v2482, %v2502
  %v2540 = vadd.f32 %v2483, %v2502
  %v2541 = vadd.f32 %v2484, %v2502
  %v2542 = vadd.f32 %v2485, %v2502
  %v2543 = vadd.f32 %v2486, %v2502
  %v2544 = vadd.f32 %v2487, %v2502
  %v2545 = vadd.f32 %v2488, %v2502
  %v2546 = vadd.f32 %v2489, %v2502
  %v2547 = vadd.f32 %v2490, %v2502
  %v2548 = vadd.f32 %v2491, %v2502
  %v2549 = vadd.f32 %v2492, %v2502
  %v2550 = vadd.f32 %v2493, %v2502
  %v2551 = vadd.f32 %v2494, %v2502
  %v2552 = vadd.f32 %v2495, %v2502
  %v2553 = vadd.f32 %v2496, %v2502
  %v2554 = vmax.f32 %v2504, 0.0
  %v2555 = vmax.f32 %v2505, 0.0
  %v2556 = vmax.f32 %v2506, 0.0
  %v2557 = vmax.f32 %v2507, 0.0
  %v2558 = vmax.f32 %v2508, 0.0
  %v2559 = vmax.f32 %v2509, 0.0
  %v2560 = vmax.f32 %v2510, 0.0
  %v2561 = vmax.f32 %v2511, 0.0
  %v2562 = vmax.f32 %v2512, 0.0
  %v2563 = vmax.f32 %v2513, 0.0
  %v2564 = vmax.f32 %v2514, 0.0
  %v2565 = vmax.f32 %v2515, 0.0
  %v2566 = vmax.f32 %v2516, 0.0
  %v2567 = vmax.f32 %v2517, 0.0
  %v2568 = vmax.f32 %v2518, 0.0
  %v2569 = vmax.f32 %v2519, 0.0
  %v2570 = vmax.f32 %v2520, 0.0
  %v2571 = vmax.f32 %v2521, 0.0
  %v2572 = vmax.f32 %v2522, 0.0
  %v2573 = vmax.f32 %v2523, 0.0
  %v2574 = vmax.f32 %v2524, 0.0
  %v2575 = vmax.f32 %v2525, 0.0
  %v2576 = vmax.f32 %v2526, 0.0
  %v2577 = vmax.f32 %v2527, 0.0
  %v2578 = vmax.f32 %v2528, 0.0
  %v2579 = vmax.f32 %v2529, 0.0
  %v2580 = vmax.f32 %v2530, 0.0
  %v2581 = vmax.f32 %v2531, 0.0
  %v2582 = vmax.f32 %v2532, 0.0
  %v2583 = vmax.f32 %v2533, 0.0
  %v2584 = vmax.f32 %v2534, 0.0
  %v2585 = vmax.f32 %v2535, 0.0
  %v2586 = vmax.f32 %v2536, 0.0
  %v2587 = vmax.f32 %v2537, 0.0
  %v2588 = vmax.f32 %v2538, 0.0
  %v2589 = vmax.f32 %v2539, 0.0
  %v2590 = vmax.f32 %v2540, 0.0
  %v2591 = vmax.f32 %v2541, 0.0
  %v2592 = vmax.f32 %v2542, 0.0
  %v2593 = vmax.f32 %v2543, 0.0
  %v2594 = vmax.f32 %v2544, 0.0
  %v2595 = vmax.f32 %v2545, 0.0
  %v2596 = vmax.f32 %v2546, 0.0
  %v2597 = vmax.f32 %v2547, 0.0
  %v2598 = vmax.f32 %v2548, 0.0
  %v2599 = vmax.f32 %v2549, 0.0
  %v2600 = vmax.f32 %v2550, 0.0
  %v2601 = vmax.f32 %v2551, 0.0
  %v2602 = vmax.f32 %v2552, 0.0
  %v2603 = vmax.f32 %v2553, 0.0
  %v2604 = vpack.c.bf16 %v2555, %v2554
  %v2605 = vpack.c.bf16 %v2557, %v2556
  %v2606 = vpack.c.bf16 %v2559, %v2558
  %v2607 = vpack.c.bf16 %v2561, %v2560
  %v2608 = vpack.c.bf16 %v2563, %v2562
  %v2609 = vpack.c.bf16 %v2565, %v2564
  %v2610 = vpack.c.bf16 %v2567, %v2566
  %v2611 = vpack.c.bf16 %v2569, %v2568
  %v2612 = vpack.c.bf16 %v2571, %v2570
  %v2613 = vpack.c.bf16 %v2573, %v2572
  %v2614 = vpack.c.bf16 %v2575, %v2574
  %v2615 = vpack.c.bf16 %v2577, %v2576
  %v2616 = vpack.c.bf16 %v2579, %v2578
  %v2617 = vpack.c.bf16 %v2581, %v2580
  %v2618 = vpack.c.bf16 %v2583, %v2582
  %v2619 = vpack.c.bf16 %v2585, %v2584
  %v2620 = vpack.c.bf16 %v2587, %v2586
  %v2621 = vpack.c.bf16 %v2589, %v2588
  %v2622 = vpack.c.bf16 %v2591, %v2590
  %v2623 = vpack.c.bf16 %v2593, %v2592
  %v2624 = vpack.c.bf16 %v2595, %v2594
  %v2625 = vpack.c.bf16 %v2597, %v2596
  %v2626 = vpack.c.bf16 %v2599, %v2598
  %v2627 = vpack.c.bf16 %v2601, %v2600
  %v2628 = vpack.c.bf16 %v2603, %v2602
  %v2629 = vld [vmem:[%s3] sm:$0xf]
  %v2630 = vld [vmem:[%s3 + $0x4] sm:$0xf]
  %v2631 = vld [vmem:[%s3 + $0x8] sm:$0xf]
  %v2632 = vld [vmem:[%s3 + $0xc] sm:$0xf]
  %v2633 = vld [vmem:[%s3 + $0x10] sm:$0xf]
  %v2634 = vld [vmem:[%s3 + $0x14] sm:$0xf]
  %v2635 = vld [vmem:[%s3 + $0x18] sm:$0xf]
  %v2636 = vld [vmem:[%s3 + $0x1c] sm:$0xf]
  %v2637 = vld [vmem:[%s3 + $0x20] sm:$0xf]
  %v2638 = vld [vmem:[%s3 + $0x24] sm:$0xf]
  %v2639 = vld [vmem:[%s3 + $0x28] sm:$0xf]
  %v2640 = vld [vmem:[%s3 + $0x2c] sm:$0xf]
  %v2641 = vld [vmem:[%s3 + $0x30] sm:$0xf]
  %v2642 = vld [vmem:[%s3 + $0x34] sm:$0xf]
  %v2643 = vld [vmem:[%s3 + $0x38] sm:$0xf]
  %v2644 = vld [vmem:[%s3 + $0x3c] sm:$0xf]
  %v2645 = vld [vmem:[%s3 + $0x40] sm:$0xf]
  %v2646 = vld [vmem:[%s3 + $0x44] sm:$0xf]
  %v2647 = vld [vmem:[%s3 + $0x48] sm:$0xf]
  %v2648 = vld [vmem:[%s3 + $0x4c] sm:$0xf]
  %v2649 = vld [vmem:[%s3 + $0x50] sm:$0xf]
  %v2650 = vld [vmem:[%s3 + $0x54] sm:$0xf]
  %v2651 = vld [vmem:[%s3 + $0x58] sm:$0xf]
  %v2652 = vld [vmem:[%s3 + $0x5c] sm:$0xf]
  %v2653 = vld [vmem:[%s3 + $0x60] sm:$0xf]
  %v2654 = vld [vmem:[%s3 + $0x64] sm:$0xf]
  %v2655 = vld [vmem:[%s3 + $0x68] sm:$0xf]
  %v2656 = vld [vmem:[%s3 + $0x6c] sm:$0xf]
  %v2657 = vld [vmem:[%s3 + $0x70] sm:$0xf]
  %v2658 = vld [vmem:[%s3 + $0x74] sm:$0xf]
  %v2659 = vld [vmem:[%s3 + $0x78] sm:$0xf]
  %v2660 = vld [vmem:[%s3 + $0x7c] sm:$0xf]
  %v2661 = vld [vmem:[%s3 + $0x80] sm:$0xf]
  %v2662 = vld [vmem:[%s3 + $0x84] sm:$0xf]
  %v2663 = vld [vmem:[%s3 + $0x88] sm:$0xf]
  %v2664 = vld [vmem:[%s3 + $0x8c] sm:$0xf]
  %v2665 = vld [vmem:[%s3 + $0x90] sm:$0xf]
  %v2666 = vld [vmem:[%s3 + $0x94] sm:$0xf]
  %v2667 = vld [vmem:[%s3 + $0x98] sm:$0xf]
  %v2668 = vld [vmem:[%s3 + $0x9c] sm:$0xf]
  %v2669 = vld [vmem:[%s3 + $0xa0] sm:$0xf]
  %v2670 = vld [vmem:[%s3 + $0xa4] sm:$0xf]
  %v2671 = vld [vmem:[%s3 + $0xa8] sm:$0xf]
  %v2672 = vld [vmem:[%s3 + $0xac] sm:$0xf]
  %v2673 = vld [vmem:[%s3 + $0xb0] sm:$0xf]
  %v2674 = vld [vmem:[%s3 + $0xb4] sm:$0xf]
  %v2675 = vld [vmem:[%s3 + $0xb8] sm:$0xf]
  %v2676 = vld [vmem:[%s3 + $0xbc] sm:$0xf]
  %v2677 = vld [vmem:[%s3 + $0xc0] sm:$0xf]
  %v2678 = vld [vmem:[%s3 + $0xc4] sm:$0xf]
  %v2681 = vunpack.c.l.b16 %v2631
  %v2682 = vunpack.c.l.b16 %v2632
  %v2683 = vpack.c.b16 %v2682, %v2681
  %vm2685 = vcmask 130048
  %v2687 = vsel %vm2685, %v2605, 0
  %2689 = vmatprep.subr.bf16.mxu0 0
  %2690 = vmatpush1.bf16.msra.mxu0 %v2683
  %2691 = vmatprep.subr.bf16.mxu0 0
  %2692 = vmatpush1.bf16.msra.mxu0 0
  %2693 = vmatprep.subr.bf16.mxu0 0
  %2694 = vmatpush1.bf16.msra.mxu0 0
  %2695 = vmatprep.subr.bf16.mxu0 0
  %2696 = vmatpush1.bf16.msra.mxu0 0
  %2697 = vmatprep.subr.bf16.mxu0 0
  %2698 = vmatpush1.bf16.msra.mxu0 0
  %2699 = vmatprep.subr.bf16.mxu0 0
  %2700 = vmatpush1.bf16.msra.mxu0 0
  %2701 = vmatprep.subr.bf16.mxu0 0
  %2702 = vmatpush1.bf16.msra.mxu0 0
  %2703 = vmatprep.subr.bf16.mxu0 0
  %2704 = vmatpush1.bf16.msra.mxu0 0
  %2705 = vmatprep.subr.bf16.mxu0 0
  %2706 = vmatpush1.bf16.msra.mxu0 0
  %2707 = vmatprep.subr.bf16.mxu0 0
  %2708 = vmatpush1.bf16.msra.mxu0 0
  %2709 = vmatprep.subr.bf16.mxu0 0
  %2710 = vmatpush1.bf16.msra.mxu0 0
  %2711 = vmatprep.subr.bf16.mxu0 0
  %2712 = vmatpush1.bf16.msra.mxu0 0
  %2713 = vmatprep.subr.bf16.mxu0 0
  %2714 = vmatpush1.bf16.msra.mxu0 0
  %2715 = vmatprep.subr.bf16.mxu0 0
  %2716 = vmatpush1.bf16.msra.mxu0 0
  %2717 = vmatprep.subr.bf16.mxu0 0
  %2718 = vmatpush1.bf16.msra.mxu0 0
  %2719 = vmatprep.subr.bf16.mxu0 0
  %2720 = vmatpush1.bf16.msra.mxu0 0
  %2721 = vmatprep.mubr.bf16.mxu0 0
  %2722 = vmatmul.mubr.bf16.gmra.mrb[0].mxu0 %v2687
  %v2723 = vpop.f32.mrb[0].mxu0
  %v2724 = vadd.f32 0.0, %v2723
  %v2725 = vpop.f32.mrb[0].mxu0
  %v2726 = vpop.f32.mrb[0].mxu0
  %v2727 = vadd.f32 0.0, %v2726
  %v2728 = vpop.f32.mrb[0].mxu0
  %2729 = vdwg.mxu0
  %v2732 = vunpack.c.l.b16 %v2629
  %v2733 = vunpack.c.l.b16 %v2630
  %v2734 = vpack.c.b16 %v2733, %v2732
  %v2737 = vsel %vm2685, %v2604, 0
  %2739 = vmatprep.subr.bf16.mxu0 0
  %2740 = vmatpush1.bf16.msra.mxu0 %v2734
  %2741 = vmatprep.subr.bf16.mxu0 0
  %2742 = vmatpush1.bf16.msra.mxu0 0
  %2743 = vmatprep.subr.bf16.mxu0 0
  %2744 = vmatpush1.bf16.msra.mxu0 0
  %2745 = vmatprep.subr.bf16.mxu0 0
  %2746 = vmatpush1.bf16.msra.mxu0 0
  %2747 = vmatprep.subr.bf16.mxu0 0
  %2748 = vmatpush1.bf16.msra.mxu0 0
  %2749 = vmatprep.subr.bf16.mxu0 0
  %2750 = vmatpush1.bf16.msra.mxu0 0
  %2751 = vmatprep.subr.bf16.mxu0 0
  %2752 = vmatpush1.bf16.msra.mxu0 0
  %2753 = vmatprep.subr.bf16.mxu0 0
  %2754 = vmatpush1.bf16.msra.mxu0 0
  %2755 = vmatprep.subr.bf16.mxu0 0
  %2756 = vmatpush1.bf16.msra.mxu0 0
  %2757 = vmatprep.subr.bf16.mxu0 0
  %2758 = vmatpush1.bf16.msra.mxu0 0
  %2759 = vmatprep.subr.bf16.mxu0 0
  %2760 = vmatpush1.bf16.msra.mxu0 0
  %2761 = vmatprep.subr.bf16.mxu0 0
  %2762 = vmatpush1.bf16.msra.mxu0 0
  %2763 = vmatprep.subr.bf16.mxu0 0
  %2764 = vmatpush1.bf16.msra.mxu0 0
  %2765 = vmatprep.subr.bf16.mxu0 0
  %2766 = vmatpush1.bf16.msra.mxu0 0
  %2767 = vmatprep.subr.bf16.mxu0 0
  %2768 = vmatpush1.bf16.msra.mxu0 0
  %2769 = vmatprep.subr.bf16.mxu0 0
  %2770 = vmatpush1.bf16.msra.mxu0 0
  %2771 = vmatprep.mubr.bf16.mxu0 0
  %2772 = vmatmul.mubr.bf16.gmra.mrb[0].mxu0 %v2737
  %v2773 = vpop.f32.mrb[0].mxu0
  %v2774 = vadd.f32 %v2724, %v2773
  %v2775 = vpop.f32.mrb[0].mxu0
  %v2776 = vpop.f32.mrb[0].mxu0
  %v2777 = vadd.f32 %v2727, %v2776
  %v2778 = vpop.f32.mrb[0].mxu0
  %2779 = vdwg.mxu0
  %v2782 = vunpack.c.l.b16 %v2633
  %v2783 = vunpack.c.l.b16 %v2634
  %v2784 = vpack.c.b16 %v2783, %v2782
  %v2787 = vsel %vm2685, %v2606, 0
  %2789 = vmatprep.subr.bf16.mxu0 0
  %2790 = vmatpush1.bf16.msra.mxu0 %v2784
  %2791 = vmatprep.subr.bf16.mxu0 0
  %2792 = vmatpush1.bf16.msra.mxu0 0
  %2793 = vmatprep.subr.bf16.mxu0 0
  %2794 = vmatpush1.bf16.msra.mxu0 0
  %2795 = vmatprep.subr.bf16.mxu0 0
  %2796 = vmatpush1.bf16.msra.mxu0 0
  %2797 = vmatprep.subr.bf16.mxu0 0
  %2798 = vmatpush1.bf16.msra.mxu0 0
  %2799 = vmatprep.subr.bf16.mxu0 0
  %2800 = vmatpush1.bf16.msra.mxu0 0
  %2801 = vmatprep.subr.bf16.mxu0 0
  %2802 = vmatpush1.bf16.msra.mxu0 0
  %2803 = vmatprep.subr.bf16.mxu0 0
  %2804 = vmatpush1.bf16.msra.mxu0 0
  %2805 = vmatprep.subr.bf16.mxu0 0
  %2806 = vmatpush1.bf16.msra.mxu0 0
  %2807 = vmatprep.subr.bf16.mxu0 0
  %2808 = vmatpush1.bf16.msra.mxu0 0
  %2809 = vmatprep.subr.bf16.mxu0 0
  %2810 = vmatpush1.bf16.msra.mxu0 0
  %2811 = vmatprep.subr.bf16.mxu0 0
  %2812 = vmatpush1.bf16.msra.mxu0 0
  %2813 = vmatprep.subr.bf16.mxu0 0
  %2814 = vmatpush1.bf16.msra.mxu0 0
  %2815 = vmatprep.subr.bf16.mxu0 0
  %2816 = vmatpush1.bf16.msra.mxu0 0
  %2817 = vmatprep.subr.bf16.mxu0 0
  %2818 = vmatpush1.bf16.msra.mxu0 0
  %2819 = vmatprep.subr.bf16.mxu0 0
  %2820 = vmatpush1.bf16.msra.mxu0 0
  %2821 = vmatprep.mubr.bf16.mxu0 0
  %2822 = vmatmul.mubr.bf16.gmra.mrb[0].mxu0 %v2787
  %v2823 = vpop.f32.mrb[0].mxu0
  %v2824 = vadd.f32 0.0, %v2823
  %v2825 = vpop.f32.mrb[0].mxu0
  %v2826 = vpop.f32.mrb[0].mxu0
  %v2827 = vadd.f32 0.0, %v2826
  %v2828 = vpop.f32.mrb[0].mxu0
  %2829 = vdwg.mxu0
  %v2830 = vadd.f32 %v2774, %v2824
  %v2831 = vadd.f32 %v2777, %v2827
  %v2834 = vunpack.c.l.b16 %v2635
  %v2835 = vunpack.c.l.b16 %v2636
  %v2836 = vpack.c.b16 %v2835, %v2834
  %v2839 = vsel %vm2685, %v2607, 0
  %2841 = vmatprep.subr.bf16.mxu0 0
  %2842 = vmatpush1.bf16.msra.mxu0 %v2836
  %2843 = vmatprep.subr.bf16.mxu0 0
  %2844 = vmatpush1.bf16.msra.mxu0 0
  %2845 = vmatprep.subr.bf16.mxu0 0
  %2846 = vmatpush1.bf16.msra.mxu0 0
  %2847 = vmatprep.subr.bf16.mxu0 0
  %2848 = vmatpush1.bf16.msra.mxu0 0
  %2849 = vmatprep.subr.bf16.mxu0 0
  %2850 = vmatpush1.bf16.msra.mxu0 0
  %2851 = vmatprep.subr.bf16.mxu0 0
  %2852 = vmatpush1.bf16.msra.mxu0 0
  %2853 = vmatprep.subr.bf16.mxu0 0
  %2854 = vmatpush1.bf16.msra.mxu0 0
  %2855 = vmatprep.subr.bf16.mxu0 0
  %2856 = vmatpush1.bf16.msra.mxu0 0
  %2857 = vmatprep.subr.bf16.mxu0 0
  %2858 = vmatpush1.bf16.msra.mxu0 0
  %2859 = vmatprep.subr.bf16.mxu0 0
  %2860 = vmatpush1.bf16.msra.mxu0 0
  %2861 = vmatprep.subr.bf16.mxu0 0
  %2862 = vmatpush1.bf16.msra.mxu0 0
  %2863 = vmatprep.subr.bf16.mxu0 0
  %2864 = vmatpush1.bf16.msra.mxu0 0
  %2865 = vmatprep.subr.bf16.mxu0 0
  %2866 = vmatpush1.bf16.msra.mxu0 0
  %2867 = vmatprep.subr.bf16.mxu0 0
  %2868 = vmatpush1.bf16.msra.mxu0 0
  %2869 = vmatprep.subr.bf16.mxu0 0
  %2870 = vmatpush1.bf16.msra.mxu0 0
  %2871 = vmatprep.subr.bf16.mxu0 0
  %2872 = vmatpush1.bf16.msra.mxu0 0
  %2873 = vmatprep.mubr.bf16.mxu0 0
  %2874 = vmatmul.mubr.bf16.gmra.mrb[0].mxu0 %v2839
  %v2875 = vpop.f32.mrb[0].mxu0
  %v2876 = vadd.f32 0.0, %v2875
  %v2877 = vpop.f32.mrb[0].mxu0
  %v2878 = vpop.f32.mrb[0].mxu0
  %v2879 = vadd.f32 0.0, %v2878
  %v2880 = vpop.f32.mrb[0].mxu0
  %2881 = vdwg.mxu0
  %v2882 = vadd.f32 %v2830, %v2876
  %v2883 = vadd.f32 %v2831, %v2879
  %v2886 = vunpack.c.l.b16 %v2637
  %v2887 = vunpack.c.l.b16 %v2638
  %v2888 = vpack.c.b16 %v2887, %v2886
  %v2891 = vsel %vm2685, %v2608, 0
  %2893 = vmatprep.subr.bf16.mxu0 0
  %2894 = vmatpush1.bf16.msra.mxu0 %v2888
  %2895 = vmatprep.subr.bf16.mxu0 0
  %2896 = vmatpush1.bf16.msra.mxu0 0
  %2897 = vmatprep.subr.bf16.mxu0 0
  %2898 = vmatpush1.bf16.msra.mxu0 0
  %2899 = vmatprep.subr.bf16.mxu0 0
  %2900 = vmatpush1.bf16.msra.mxu0 0
  %2901 = vmatprep.subr.bf16.mxu0 0
  %2902 = vmatpush1.bf16.msra.mxu0 0
  %2903 = vmatprep.subr.bf16.mxu0 0
  %2904 = vmatpush1.bf16.msra.mxu0 0
  %2905 = vmatprep.subr.bf16.mxu0 0
  %2906 = vmatpush1.bf16.msra.mxu0 0
  %2907 = vmatprep.subr.bf16.mxu0 0
  %2908 = vmatpush1.bf16.msra.mxu0 0
  %2909 = vmatprep.subr.bf16.mxu0 0
  %2910 = vmatpush1.bf16.msra.mxu0 0
  %2911 = vmatprep.subr.bf16.mxu0 0
  %2912 = vmatpush1.bf16.msra.mxu0 0
  %2913 = vmatprep.subr.bf16.mxu0 0
  %2914 = vmatpush1.bf16.msra.mxu0 0
  %2915 = vmatprep.subr.bf16.mxu0 0
  %2916 = vmatpush1.bf16.msra.mxu0 0
  %2917 = vmatprep.subr.bf16.mxu0 0
  %2918 = vmatpush1.bf16.msra.mxu0 0
  %2919 = vmatprep.subr.bf16.mxu0 0
  %2920 = vmatpush1.bf16.msra.mxu0 0
  %2921 = vmatprep.subr.bf16.mxu0 0
  %2922 = vmatpush1.bf16.msra.mxu0 0
  %2923 = vmatprep.subr.bf16.mxu0 0
  %2924 = vmatpush1.bf16.msra.mxu0 0
  %2925 = vmatprep.mubr.bf16.mxu0 0
  %2926 = vmatmul.mubr.bf16.gmra.mrb[0].mxu0 %v2891
  %v2927 = vpop.f32.mrb[0].mxu0
  %v2928 = vadd.f32 0.0, %v2927
  %v2929 = vpop.f32.mrb[0].mxu0
  %v2930 = vpop.f32.mrb[0].mxu0
  %v2931 = vadd.f32 0.0, %v2930
  %v2932 = vpop.f32.mrb[0].mxu0
  %2933 = vdwg.mxu0
  %v2934 = vadd.f32 %v2882, %v2928
  %v2935 = vadd.f32 %v2883, %v2931
  %v2938 = vunpack.c.l.b16 %v2639
  %v2939 = vunpack.c.l.b16 %v2640
  %v2940 = vpack.c.b16 %v2939, %v2938
  %v2943 = vsel %vm2685, %v2609, 0
  %2945 = vmatprep.subr.bf16.mxu0 0
  %2946 = vmatpush1.bf16.msra.mxu0 %v2940
  %2947 = vmatprep.subr.bf16.mxu0 0
  %2948 = vmatpush1.bf16.msra.mxu0 0
  %2949 = vmatprep.subr.bf16.mxu0 0
  %2950 = vmatpush1.bf16.msra.mxu0 0
  %2951 = vmatprep.subr.bf16.mxu0 0
  %2952 = vmatpush1.bf16.msra.mxu0 0
  %2953 = vmatprep.subr.bf16.mxu0 0
  %2954 = vmatpush1.bf16.msra.mxu0 0
  %2955 = vmatprep.subr.bf16.mxu0 0
  %2956 = vmatpush1.bf16.msra.mxu0 0
  %2957 = vmatprep.subr.bf16.mxu0 0
  %2958 = vmatpush1.bf16.msra.mxu0 0
  %2959 = vmatprep.subr.bf16.mxu0 0
  %2960 = vmatpush1.bf16.msra.mxu0 0
  %2961 = vmatprep.subr.bf16.mxu0 0
  %2962 = vmatpush1.bf16.msra.mxu0 0
  %2963 = vmatprep.subr.bf16.mxu0 0
  %2964 = vmatpush1.bf16.msra.mxu0 0
  %2965 = vmatprep.subr.bf16.mxu0 0
  %2966 = vmatpush1.bf16.msra.mxu0 0
  %2967 = vmatprep.subr.bf16.mxu0 0
  %2968 = vmatpush1.bf16.msra.mxu0 0
  %2969 = vmatprep.subr.bf16.mxu0 0
  %2970 = vmatpush1.bf16.msra.mxu0 0
  %2971 = vmatprep.subr.bf16.mxu0 0
  %2972 = vmatpush1.bf16.msra.mxu0 0
  %2973 = vmatprep.subr.bf16.mxu0 0
  %2974 = vmatpush1.bf16.msra.mxu0 0
  %2975 = vmatprep.subr.bf16.mxu0 0
  %2976 = vmatpush1.bf16.msra.mxu0 0
  %2977 = vmatprep.mubr.bf16.mxu0 0
  %2978 = vmatmul.mubr.bf16.gmra.mrb[0].mxu0 %v2943
  %v2979 = vpop.f32.mrb[0].mxu0
  %v2980 = vadd.f32 0.0, %v2979
  %v2981 = vpop.f32.mrb[0].mxu0
  %v2982 = vpop.f32.mrb[0].mxu0
  %v2983 = vadd.f32 0.0, %v2982
  %v2984 = vpop.f32.mrb[0].mxu0
  %2985 = vdwg.mxu0
  %v2986 = vadd.f32 %v2934, %v2980
  %v2987 = vadd.f32 %v2935, %v2983
  %v2990 = vunpack.c.l.b16 %v2641
  %v2991 = vunpack.c.l.b16 %v2642
  %v2992 = vpack.c.b16 %v2991, %v2990
  %v2995 = vsel %vm2685, %v2610, 0
  %2997 = vmatprep.subr.bf16.mxu0 0
  %2998 = vmatpush1.bf16.msra.mxu0 %v2992
  %2999 = vmatprep.subr.bf16.mxu0 0
  %3000 = vmatpush1.bf16.msra.mxu0 0
  %3001 = vmatprep.subr.bf16.mxu0 0
  %3002 = vmatpush1.bf16.msra.mxu0 0
  %3003 = vmatprep.subr.bf16.mxu0 0
  %3004 = vmatpush1.bf16.msra.mxu0 0
  %3005 = vmatprep.subr.bf16.mxu0 0
  %3006 = vmatpush1.bf16.msra.mxu0 0
  %3007 = vmatprep.subr.bf16.mxu0 0
  %3008 = vmatpush1.bf16.msra.mxu0 0
  %3009 = vmatprep.subr.bf16.mxu0 0
  %3010 = vmatpush1.bf16.msra.mxu0 0
  %3011 = vmatprep.subr.bf16.mxu0 0
  %3012 = vmatpush1.bf16.msra.mxu0 0
  %3013 = vmatprep.subr.bf16.mxu0 0
  %3014 = vmatpush1.bf16.msra.mxu0 0
  %3015 = vmatprep.subr.bf16.mxu0 0
  %3016 = vmatpush1.bf16.msra.mxu0 0
  %3017 = vmatprep.subr.bf16.mxu0 0
  %3018 = vmatpush1.bf16.msra.mxu0 0
  %3019 = vmatprep.subr.bf16.mxu0 0
  %3020 = vmatpush1.bf16.msra.mxu0 0
  %3021 = vmatprep.subr.bf16.mxu0 0
  %3022 = vmatpush1.bf16.msra.mxu0 0
  %3023 = vmatprep.subr.bf16.mxu0 0
  %3024 = vmatpush1.bf16.msra.mxu0 0
  %3025 = vmatprep.subr.bf16.mxu0 0
  %3026 = vmatpush1.bf16.msra.mxu0 0
  %3027 = vmatprep.subr.bf16.mxu0 0
  %3028 = vmatpush1.bf16.msra.mxu0 0
  %3029 = vmatprep.mubr.bf16.mxu0 0
  %3030 = vmatmul.mubr.bf16.gmra.mrb[0].mxu0 %v2995
  %v3031 = vpop.f32.mrb[0].mxu0
  %v3032 = vadd.f32 0.0, %v3031
  %v3033 = vpop.f32.mrb[0].mxu0
  %v3034 = vpop.f32.mrb[0].mxu0
  %v3035 = vadd.f32 0.0, %v3034
  %v3036 = vpop.f32.mrb[0].mxu0
  %3037 = vdwg.mxu0
  %v3038 = vadd.f32 %v2986, %v3032
  %v3039 = vadd.f32 %v2987, %v3035
  %v3042 = vunpack.c.l.b16 %v2643
  %v3043 = vunpack.c.l.b16 %v2644
  %v3044 = vpack.c.b16 %v3043, %v3042
  %v3047 = vsel %vm2685, %v2611, 0
  %3049 = vmatprep.subr.bf16.mxu0 0
  %3050 = vmatpush1.bf16.msra.mxu0 %v3044
  %3051 = vmatprep.subr.bf16.mxu0 0
  %3052 = vmatpush1.bf16.msra.mxu0 0
  %3053 = vmatprep.subr.bf16.mxu0 0
  %3054 = vmatpush1.bf16.msra.mxu0 0
  %3055 = vmatprep.subr.bf16.mxu0 0
  %3056 = vmatpush1.bf16.msra.mxu0 0
  %3057 = vmatprep.subr.bf16.mxu0 0
  %3058 = vmatpush1.bf16.msra.mxu0 0
  %3059 = vmatprep.subr.bf16.mxu0 0
  %3060 = vmatpush1.bf16.msra.mxu0 0
  %3061 = vmatprep.subr.bf16.mxu0 0
  %3062 = vmatpush1.bf16.msra.mxu0 0
  %3063 = vmatprep.subr.bf16.mxu0 0
  %3064 = vmatpush1.bf16.msra.mxu0 0
  %3065 = vmatprep.subr.bf16.mxu0 0
  %3066 = vmatpush1.bf16.msra.mxu0 0
  %3067 = vmatprep.subr.bf16.mxu0 0
  %3068 = vmatpush1.bf16.msra.mxu0 0
  %3069 = vmatprep.subr.bf16.mxu0 0
  %3070 = vmatpush1.bf16.msra.mxu0 0
  %3071 = vmatprep.subr.bf16.mxu0 0
  %3072 = vmatpush1.bf16.msra.mxu0 0
  %3073 = vmatprep.subr.bf16.mxu0 0
  %3074 = vmatpush1.bf16.msra.mxu0 0
  %3075 = vmatprep.subr.bf16.mxu0 0
  %3076 = vmatpush1.bf16.msra.mxu0 0
  %3077 = vmatprep.subr.bf16.mxu0 0
  %3078 = vmatpush1.bf16.msra.mxu0 0
  %3079 = vmatprep.subr.bf16.mxu0 0
  %3080 = vmatpush1.bf16.msra.mxu0 0
  %3081 = vmatprep.mubr.bf16.mxu0 0
  %3082 = vmatmul.mubr.bf16.gmra.mrb[0].mxu0 %v3047
  %v3083 = vpop.f32.mrb[0].mxu0
  %v3084 = vadd.f32 0.0, %v3083
  %v3085 = vpop.f32.mrb[0].mxu0
  %v3086 = vpop.f32.mrb[0].mxu0
  %v3087 = vadd.f32 0.0, %v3086
  %v3088 = vpop.f32.mrb[0].mxu0
  %3089 = vdwg.mxu0
  %v3090 = vadd.f32 %v3038, %v3084
  %v3091 = vadd.f32 %v3039, %v3087
  %v3094 = vunpack.c.l.b16 %v2645
  %v3095 = vunpack.c.l.b16 %v2646
  %v3096 = vpack.c.b16 %v3095, %v3094
  %v3099 = vsel %vm2685, %v2612, 0
  %3101 = vmatprep.subr.bf16.mxu0 0
  %3102 = vmatpush1.bf16.msra.mxu0 %v3096
  %3103 = vmatprep.subr.bf16.mxu0 0
  %3104 = vmatpush1.bf16.msra.mxu0 0
  %3105 = vmatprep.subr.bf16.mxu0 0
  %3106 = vmatpush1.bf16.msra.mxu0 0
  %3107 = vmatprep.subr.bf16.mxu0 0
  %3108 = vmatpush1.bf16.msra.mxu0 0
  %3109 = vmatprep.subr.bf16.mxu0 0
  %3110 = vmatpush1.bf16.msra.mxu0 0
  %3111 = vmatprep.subr.bf16.mxu0 0
  %3112 = vmatpush1.bf16.msra.mxu0 0
  %3113 = vmatprep.subr.bf16.mxu0 0
  %3114 = vmatpush1.bf16.msra.mxu0 0
  %3115 = vmatprep.subr.bf16.mxu0 0
  %3116 = vmatpush1.bf16.msra.mxu0 0
  %3117 = vmatprep.subr.bf16.mxu0 0
  %3118 = vmatpush1.bf16.msra.mxu0 0
  %3119 = vmatprep.subr.bf16.mxu0 0
  %3120 = vmatpush1.bf16.msra.mxu0 0
  %3121 = vmatprep.subr.bf16.mxu0 0
  %3122 = vmatpush1.bf16.msra.mxu0 0
  %3123 = vmatprep.subr.bf16.mxu0 0
  %3124 = vmatpush1.bf16.msra.mxu0 0
  %3125 = vmatprep.subr.bf16.mxu0 0
  %3126 = vmatpush1.bf16.msra.mxu0 0
  %3127 = vmatprep.subr.bf16.mxu0 0
  %3128 = vmatpush1.bf16.msra.mxu0 0
  %3129 = vmatprep.subr.bf16.mxu0 0
  %3130 = vmatpush1.bf16.msra.mxu0 0
  %3131 = vmatprep.subr.bf16.mxu0 0
  %3132 = vmatpush1.bf16.msra.mxu0 0
  %3133 = vmatprep.mubr.bf16.mxu0 0
  %3134 = vmatmul.mubr.bf16.gmra.mrb[0].mxu0 %v3099
  %v3135 = vpop.f32.mrb[0].mxu0
  %v3136 = vadd.f32 0.0, %v3135
  %v3137 = vpop.f32.mrb[0].mxu0
  %v3138 = vpop.f32.mrb[0].mxu0
  %v3139 = vadd.f32 0.0, %v3138
  %v3140 = vpop.f32.mrb[0].mxu0
  %3141 = vdwg.mxu0
  %v3142 = vadd.f32 %v3090, %v3136
  %v3143 = vadd.f32 %v3091, %v3139
  %v3146 = vunpack.c.l.b16 %v2647
  %v3147 = vunpack.c.l.b16 %v2648
  %v3148 = vpack.c.b16 %v3147, %v3146
  %v3151 = vsel %vm2685, %v2613, 0
  %3153 = vmatprep.subr.bf16.mxu0 0
  %3154 = vmatpush1.bf16.msra.mxu0 %v3148
  %3155 = vmatprep.subr.bf16.mxu0 0
  %3156 = vmatpush1.bf16.msra.mxu0 0
  %3157 = vmatprep.subr.bf16.mxu0 0
  %3158 = vmatpush1.bf16.msra.mxu0 0
  %3159 = vmatprep.subr.bf16.mxu0 0
  %3160 = vmatpush1.bf16.msra.mxu0 0
  %3161 = vmatprep.subr.bf16.mxu0 0
  %3162 = vmatpush1.bf16.msra.mxu0 0
  %3163 = vmatprep.subr.bf16.mxu0 0
  %3164 = vmatpush1.bf16.msra.mxu0 0
  %3165 = vmatprep.subr.bf16.mxu0 0
  %3166 = vmatpush1.bf16.msra.mxu0 0
  %3167 = vmatprep.subr.bf16.mxu0 0
  %3168 = vmatpush1.bf16.msra.mxu0 0
  %3169 = vmatprep.subr.bf16.mxu0 0
  %3170 = vmatpush1.bf16.msra.mxu0 0
  %3171 = vmatprep.subr.bf16.mxu0 0
  %3172 = vmatpush1.bf16.msra.mxu0 0
  %3173 = vmatprep.subr.bf16.mxu0 0
  %3174 = vmatpush1.bf16.msra.mxu0 0
  %3175 = vmatprep.subr.bf16.mxu0 0
  %3176 = vmatpush1.bf16.msra.mxu0 0
  %3177 = vmatprep.subr.bf16.mxu0 0
  %3178 = vmatpush1.bf16.msra.mxu0 0
  %3179 = vmatprep.subr.bf16.mxu0 0
  %3180 = vmatpush1.bf16.msra.mxu0 0
  %3181 = vmatprep.subr.bf16.mxu0 0
  %3182 = vmatpush1.bf16.msra.mxu0 0
  %3183 = vmatprep.subr.bf16.mxu0 0
  %3184 = vmatpush1.bf16.msra.mxu0 0
  %3185 = vmatprep.mubr.bf16.mxu0 0
  %3186 = vmatmul.mubr.bf16.gmra.mrb[0].mxu0 %v3151
  %v3187 = vpop.f32.mrb[0].mxu0
  %v3188 = vadd.f32 0.0, %v3187
  %v3189 = vpop.f32.mrb[0].mxu0
  %v3190 = vpop.f32.mrb[0].mxu0
  %v3191 = vadd.f32 0.0, %v3190
  %v3192 = vpop.f32.mrb[0].mxu0
  %3193 = vdwg.mxu0
  %v3194 = vadd.f32 %v3142, %v3188
  %v3195 = vadd.f32 %v3143, %v3191
  %v3198 = vunpack.c.l.b16 %v2649
  %v3199 = vunpack.c.l.b16 %v2650
  %v3200 = vpack.c.b16 %v3199, %v3198
  %v3203 = vsel %vm2685, %v2614, 0
  %3205 = vmatprep.subr.bf16.mxu0 0
  %3206 = vmatpush1.bf16.msra.mxu0 %v3200
  %3207 = vmatprep.subr.bf16.mxu0 0
  %3208 = vmatpush1.bf16.msra.mxu0 0
  %3209 = vmatprep.subr.bf16.mxu0 0
  %3210 = vmatpush1.bf16.msra.mxu0 0
  %3211 = vmatprep.subr.bf16.mxu0 0
  %3212 = vmatpush1.bf16.msra.mxu0 0
  %3213 = vmatprep.subr.bf16.mxu0 0
  %3214 = vmatpush1.bf16.msra.mxu0 0
  %3215 = vmatprep.subr.bf16.mxu0 0
  %3216 = vmatpush1.bf16.msra.mxu0 0
  %3217 = vmatprep.subr.bf16.mxu0 0
  %3218 = vmatpush1.bf16.msra.mxu0 0
  %3219 = vmatprep.subr.bf16.mxu0 0
  %3220 = vmatpush1.bf16.msra.mxu0 0
  %3221 = vmatprep.subr.bf16.mxu0 0
  %3222 = vmatpush1.bf16.msra.mxu0 0
  %3223 = vmatprep.subr.bf16.mxu0 0
  %3224 = vmatpush1.bf16.msra.mxu0 0
  %3225 = vmatprep.subr.bf16.mxu0 0
  %3226 = vmatpush1.bf16.msra.mxu0 0
  %3227 = vmatprep.subr.bf16.mxu0 0
  %3228 = vmatpush1.bf16.msra.mxu0 0
  %3229 = vmatprep.subr.bf16.mxu0 0
  %3230 = vmatpush1.bf16.msra.mxu0 0
  %3231 = vmatprep.subr.bf16.mxu0 0
  %3232 = vmatpush1.bf16.msra.mxu0 0
  %3233 = vmatprep.subr.bf16.mxu0 0
  %3234 = vmatpush1.bf16.msra.mxu0 0
  %3235 = vmatprep.subr.bf16.mxu0 0
  %3236 = vmatpush1.bf16.msra.mxu0 0
  %3237 = vmatprep.mubr.bf16.mxu0 0
  %3238 = vmatmul.mubr.bf16.gmra.mrb[0].mxu0 %v3203
  %v3239 = vpop.f32.mrb[0].mxu0
  %v3240 = vadd.f32 0.0, %v3239
  %v3241 = vpop.f32.mrb[0].mxu0
  %v3242 = vpop.f32.mrb[0].mxu0
  %v3243 = vadd.f32 0.0, %v3242
  %v3244 = vpop.f32.mrb[0].mxu0
  %3245 = vdwg.mxu0
  %v3246 = vadd.f32 %v3194, %v3240
  %v3247 = vadd.f32 %v3195, %v3243
  %v3250 = vunpack.c.l.b16 %v2651
  %v3251 = vunpack.c.l.b16 %v2652
  %v3252 = vpack.c.b16 %v3251, %v3250
  %v3255 = vsel %vm2685, %v2615, 0
  %3257 = vmatprep.subr.bf16.mxu0 0
  %3258 = vmatpush1.bf16.msra.mxu0 %v3252
  %3259 = vmatprep.subr.bf16.mxu0 0
  %3260 = vmatpush1.bf16.msra.mxu0 0
  %3261 = vmatprep.subr.bf16.mxu0 0
  %3262 = vmatpush1.bf16.msra.mxu0 0
  %3263 = vmatprep.subr.bf16.mxu0 0
  %3264 = vmatpush1.bf16.msra.mxu0 0
  %3265 = vmatprep.subr.bf16.mxu0 0
  %3266 = vmatpush1.bf16.msra.mxu0 0
  %3267 = vmatprep.subr.bf16.mxu0 0
  %3268 = vmatpush1.bf16.msra.mxu0 0
  %3269 = vmatprep.subr.bf16.mxu0 0
  %3270 = vmatpush1.bf16.msra.mxu0 0
  %3271 = vmatprep.subr.bf16.mxu0 0
  %3272 = vmatpush1.bf16.msra.mxu0 0
  %3273 = vmatprep.subr.bf16.mxu0 0
  %3274 = vmatpush1.bf16.msra.mxu0 0
  %3275 = vmatprep.subr.bf16.mxu0 0
  %3276 = vmatpush1.bf16.msra.mxu0 0
  %3277 = vmatprep.subr.bf16.mxu0 0
  %3278 = vmatpush1.bf16.msra.mxu0 0
  %3279 = vmatprep.subr.bf16.mxu0 0
  %3280 = vmatpush1.bf16.msra.mxu0 0
  %3281 = vmatprep.subr.bf16.mxu0 0
  %3282 = vmatpush1.bf16.msra.mxu0 0
  %3283 = vmatprep.subr.bf16.mxu0 0
  %3284 = vmatpush1.bf16.msra.mxu0 0
  %3285 = vmatprep.subr.bf16.mxu0 0
  %3286 = vmatpush1.bf16.msra.mxu0 0
  %3287 = vmatprep.subr.bf16.mxu0 0
  %3288 = vmatpush1.bf16.msra.mxu0 0
  %3289 = vmatprep.mubr.bf16.mxu0 0
  %3290 = vmatmul.mubr.bf16.gmra.mrb[0].mxu0 %v3255
  %v3291 = vpop.f32.mrb[0].mxu0
  %v3292 = vadd.f32 0.0, %v3291
  %v3293 = vpop.f32.mrb[0].mxu0
  %v3294 = vpop.f32.mrb[0].mxu0
  %v3295 = vadd.f32 0.0, %v3294
  %v3296 = vpop.f32.mrb[0].mxu0
  %3297 = vdwg.mxu0
  %v3298 = vadd.f32 %v3246, %v3292
  %v3299 = vadd.f32 %v3247, %v3295
  %v3302 = vunpack.c.l.b16 %v2653
  %v3303 = vunpack.c.l.b16 %v2654
  %v3304 = vpack.c.b16 %v3303, %v3302
  %v3307 = vsel %vm2685, %v2616, 0
  %3309 = vmatprep.subr.bf16.mxu0 0
  %3310 = vmatpush1.bf16.msra.mxu0 %v3304
  %3311 = vmatprep.subr.bf16.mxu0 0
  %3312 = vmatpush1.bf16.msra.mxu0 0
  %3313 = vmatprep.subr.bf16.mxu0 0
  %3314 = vmatpush1.bf16.msra.mxu0 0
  %3315 = vmatprep.subr.bf16.mxu0 0
  %3316 = vmatpush1.bf16.msra.mxu0 0
  %3317 = vmatprep.subr.bf16.mxu0 0
  %3318 = vmatpush1.bf16.msra.mxu0 0
  %3319 = vmatprep.subr.bf16.mxu0 0
  %3320 = vmatpush1.bf16.msra.mxu0 0
  %3321 = vmatprep.subr.bf16.mxu0 0
  %3322 = vmatpush1.bf16.msra.mxu0 0
  %3323 = vmatprep.subr.bf16.mxu0 0
  %3324 = vmatpush1.bf16.msra.mxu0 0
  %3325 = vmatprep.subr.bf16.mxu0 0
  %3326 = vmatpush1.bf16.msra.mxu0 0
  %3327 = vmatprep.subr.bf16.mxu0 0
  %3328 = vmatpush1.bf16.msra.mxu0 0
  %3329 = vmatprep.subr.bf16.mxu0 0
  %3330 = vmatpush1.bf16.msra.mxu0 0
  %3331 = vmatprep.subr.bf16.mxu0 0
  %3332 = vmatpush1.bf16.msra.mxu0 0
  %3333 = vmatprep.subr.bf16.mxu0 0
  %3334 = vmatpush1.bf16.msra.mxu0 0
  %3335 = vmatprep.subr.bf16.mxu0 0
  %3336 = vmatpush1.bf16.msra.mxu0 0
  %3337 = vmatprep.subr.bf16.mxu0 0
  %3338 = vmatpush1.bf16.msra.mxu0 0
  %3339 = vmatprep.subr.bf16.mxu0 0
  %3340 = vmatpush1.bf16.msra.mxu0 0
  %3341 = vmatprep.mubr.bf16.mxu0 0
  %3342 = vmatmul.mubr.bf16.gmra.mrb[0].mxu0 %v3307
  %v3343 = vpop.f32.mrb[0].mxu0
  %v3344 = vadd.f32 0.0, %v3343
  %v3345 = vpop.f32.mrb[0].mxu0
  %v3346 = vpop.f32.mrb[0].mxu0
  %v3347 = vadd.f32 0.0, %v3346
  %v3348 = vpop.f32.mrb[0].mxu0
  %3349 = vdwg.mxu0
  %v3350 = vadd.f32 %v3298, %v3344
  %v3351 = vadd.f32 %v3299, %v3347
  %v3354 = vunpack.c.l.b16 %v2655
  %v3355 = vunpack.c.l.b16 %v2656
  %v3356 = vpack.c.b16 %v3355, %v3354
  %v3359 = vsel %vm2685, %v2617, 0
  %3361 = vmatprep.subr.bf16.mxu0 0
  %3362 = vmatpush1.bf16.msra.mxu0 %v3356
  %3363 = vmatprep.subr.bf16.mxu0 0
  %3364 = vmatpush1.bf16.msra.mxu0 0
  %3365 = vmatprep.subr.bf16.mxu0 0
  %3366 = vmatpush1.bf16.msra.mxu0 0
  %3367 = vmatprep.subr.bf16.mxu0 0
  %3368 = vmatpush1.bf16.msra.mxu0 0
  %3369 = vmatprep.subr.bf16.mxu0 0
  %3370 = vmatpush1.bf16.msra.mxu0 0
  %3371 = vmatprep.subr.bf16.mxu0 0
  %3372 = vmatpush1.bf16.msra.mxu0 0
  %3373 = vmatprep.subr.bf16.mxu0 0
  %3374 = vmatpush1.bf16.msra.mxu0 0
  %3375 = vmatprep.subr.bf16.mxu0 0
  %3376 = vmatpush1.bf16.msra.mxu0 0
  %3377 = vmatprep.subr.bf16.mxu0 0
  %3378 = vmatpush1.bf16.msra.mxu0 0
  %3379 = vmatprep.subr.bf16.mxu0 0
  %3380 = vmatpush1.bf16.msra.mxu0 0
  %3381 = vmatprep.subr.bf16.mxu0 0
  %3382 = vmatpush1.bf16.msra.mxu0 0
  %3383 = vmatprep.subr.bf16.mxu0 0
  %3384 = vmatpush1.bf16.msra.mxu0 0
  %3385 = vmatprep.subr.bf16.mxu0 0
  %3386 = vmatpush1.bf16.msra.mxu0 0
  %3387 = vmatprep.subr.bf16.mxu0 0
  %3388 = vmatpush1.bf16.msra.mxu0 0
  %3389 = vmatprep.subr.bf16.mxu0 0
  %3390 = vmatpush1.bf16.msra.mxu0 0
  %3391 = vmatprep.subr.bf16.mxu0 0
  %3392 = vmatpush1.bf16.msra.mxu0 0
  %3393 = vmatprep.mubr.bf16.mxu0 0
  %3394 = vmatmul.mubr.bf16.gmra.mrb[0].mxu0 %v3359
  %v3395 = vpop.f32.mrb[0].mxu0
  %v3396 = vadd.f32 0.0, %v3395
  %v3397 = vpop.f32.mrb[0].mxu0
  %v3398 = vpop.f32.mrb[0].mxu0
  %v3399 = vadd.f32 0.0, %v3398
  %v3400 = vpop.f32.mrb[0].mxu0
  %3401 = vdwg.mxu0
  %v3402 = vadd.f32 %v3350, %v3396
  %v3403 = vadd.f32 %v3351, %v3399
  %v3406 = vunpack.c.l.b16 %v2657
  %v3407 = vunpack.c.l.b16 %v2658
  %v3408 = vpack.c.b16 %v3407, %v3406
  %v3411 = vsel %vm2685, %v2618, 0
  %3413 = vmatprep.subr.bf16.mxu0 0
  %3414 = vmatpush1.bf16.msra.mxu0 %v3408
  %3415 = vmatprep.subr.bf16.mxu0 0
  %3416 = vmatpush1.bf16.msra.mxu0 0
  %3417 = vmatprep.subr.bf16.mxu0 0
  %3418 = vmatpush1.bf16.msra.mxu0 0
  %3419 = vmatprep.subr.bf16.mxu0 0
  %3420 = vmatpush1.bf16.msra.mxu0 0
  %3421 = vmatprep.subr.bf16.mxu0 0
  %3422 = vmatpush1.bf16.msra.mxu0 0
  %3423 = vmatprep.subr.bf16.mxu0 0
  %3424 = vmatpush1.bf16.msra.mxu0 0
  %3425 = vmatprep.subr.bf16.mxu0 0
  %3426 = vmatpush1.bf16.msra.mxu0 0
  %3427 = vmatprep.subr.bf16.mxu0 0
  %3428 = vmatpush1.bf16.msra.mxu0 0
  %3429 = vmatprep.subr.bf16.mxu0 0
  %3430 = vmatpush1.bf16.msra.mxu0 0
  %3431 = vmatprep.subr.bf16.mxu0 0
  %3432 = vmatpush1.bf16.msra.mxu0 0
  %3433 = vmatprep.subr.bf16.mxu0 0
  %3434 = vmatpush1.bf16.msra.mxu0 0
  %3435 = vmatprep.subr.bf16.mxu0 0
  %3436 = vmatpush1.bf16.msra.mxu0 0
  %3437 = vmatprep.subr.bf16.mxu0 0
  %3438 = vmatpush1.bf16.msra.mxu0 0
  %3439 = vmatprep.subr.bf16.mxu0 0
  %3440 = vmatpush1.bf16.msra.mxu0 0
  %3441 = vmatprep.subr.bf16.mxu0 0
  %3442 = vmatpush1.bf16.msra.mxu0 0
  %3443 = vmatprep.subr.bf16.mxu0 0
  %3444 = vmatpush1.bf16.msra.mxu0 0
  %3445 = vmatprep.mubr.bf16.mxu0 0
  %3446 = vmatmul.mubr.bf16.gmra.mrb[0].mxu0 %v3411
  %v3447 = vpop.f32.mrb[0].mxu0
  %v3448 = vadd.f32 0.0, %v3447
  %v3449 = vpop.f32.mrb[0].mxu0
  %v3450 = vpop.f32.mrb[0].mxu0
  %v3451 = vadd.f32 0.0, %v3450
  %v3452 = vpop.f32.mrb[0].mxu0
  %3453 = vdwg.mxu0
  %v3454 = vadd.f32 %v3402, %v3448
  %v3455 = vadd.f32 %v3403, %v3451
  %v3458 = vunpack.c.l.b16 %v2659
  %v3459 = vunpack.c.l.b16 %v2660
  %v3460 = vpack.c.b16 %v3459, %v3458
  %v3463 = vsel %vm2685, %v2619, 0
  %3465 = vmatprep.subr.bf16.mxu0 0
  %3466 = vmatpush1.bf16.msra.mxu0 %v3460
  %3467 = vmatprep.subr.bf16.mxu0 0
  %3468 = vmatpush1.bf16.msra.mxu0 0
  %3469 = vmatprep.subr.bf16.mxu0 0
  %3470 = vmatpush1.bf16.msra.mxu0 0
  %3471 = vmatprep.subr.bf16.mxu0 0
  %3472 = vmatpush1.bf16.msra.mxu0 0
  %3473 = vmatprep.subr.bf16.mxu0 0
  %3474 = vmatpush1.bf16.msra.mxu0 0
  %3475 = vmatprep.subr.bf16.mxu0 0
  %3476 = vmatpush1.bf16.msra.mxu0 0
  %3477 = vmatprep.subr.bf16.mxu0 0
  %3478 = vmatpush1.bf16.msra.mxu0 0
  %3479 = vmatprep.subr.bf16.mxu0 0
  %3480 = vmatpush1.bf16.msra.mxu0 0
  %3481 = vmatprep.subr.bf16.mxu0 0
  %3482 = vmatpush1.bf16.msra.mxu0 0
  %3483 = vmatprep.subr.bf16.mxu0 0
  %3484 = vmatpush1.bf16.msra.mxu0 0
  %3485 = vmatprep.subr.bf16.mxu0 0
  %3486 = vmatpush1.bf16.msra.mxu0 0
  %3487 = vmatprep.subr.bf16.mxu0 0
  %3488 = vmatpush1.bf16.msra.mxu0 0
  %3489 = vmatprep.subr.bf16.mxu0 0
  %3490 = vmatpush1.bf16.msra.mxu0 0
  %3491 = vmatprep.subr.bf16.mxu0 0
  %3492 = vmatpush1.bf16.msra.mxu0 0
  %3493 = vmatprep.subr.bf16.mxu0 0
  %3494 = vmatpush1.bf16.msra.mxu0 0
  %3495 = vmatprep.subr.bf16.mxu0 0
  %3496 = vmatpush1.bf16.msra.mxu0 0
  %3497 = vmatprep.mubr.bf16.mxu0 0
  %3498 = vmatmul.mubr.bf16.gmra.mrb[0].mxu0 %v3463
  %v3499 = vpop.f32.mrb[0].mxu0
  %v3500 = vadd.f32 0.0, %v3499
  %v3501 = vpop.f32.mrb[0].mxu0
  %v3502 = vpop.f32.mrb[0].mxu0
  %v3503 = vadd.f32 0.0, %v3502
  %v3504 = vpop.f32.mrb[0].mxu0
  %3505 = vdwg.mxu0
  %v3506 = vadd.f32 %v3454, %v3500
  %v3507 = vadd.f32 %v3455, %v3503
  %v3510 = vunpack.c.l.b16 %v2661
  %v3511 = vunpack.c.l.b16 %v2662
  %v3512 = vpack.c.b16 %v3511, %v3510
  %v3515 = vsel %vm2685, %v2620, 0
  %3517 = vmatprep.subr.bf16.mxu0 0
  %3518 = vmatpush1.bf16.msra.mxu0 %v3512
  %3519 = vmatprep.subr.bf16.mxu0 0
  %3520 = vmatpush1.bf16.msra.mxu0 0
  %3521 = vmatprep.subr.bf16.mxu0 0
  %3522 = vmatpush1.bf16.msra.mxu0 0
  %3523 = vmatprep.subr.bf16.mxu0 0
  %3524 = vmatpush1.bf16.msra.mxu0 0
  %3525 = vmatprep.subr.bf16.mxu0 0
  %3526 = vmatpush1.bf16.msra.mxu0 0
  %3527 = vmatprep.subr.bf16.mxu0 0
  %3528 = vmatpush1.bf16.msra.mxu0 0
  %3529 = vmatprep.subr.bf16.mxu0 0
  %3530 = vmatpush1.bf16.msra.mxu0 0
  %3531 = vmatprep.subr.bf16.mxu0 0
  %3532 = vmatpush1.bf16.msra.mxu0 0
  %3533 = vmatprep.subr.bf16.mxu0 0
  %3534 = vmatpush1.bf16.msra.mxu0 0
  %3535 = vmatprep.subr.bf16.mxu0 0
  %3536 = vmatpush1.bf16.msra.mxu0 0
  %3537 = vmatprep.subr.bf16.mxu0 0
  %3538 = vmatpush1.bf16.msra.mxu0 0
  %3539 = vmatprep.subr.bf16.mxu0 0
  %3540 = vmatpush1.bf16.msra.mxu0 0
  %3541 = vmatprep.subr.bf16.mxu0 0
  %3542 = vmatpush1.bf16.msra.mxu0 0
  %3543 = vmatprep.subr.bf16.mxu0 0
  %3544 = vmatpush1.bf16.msra.mxu0 0
  %3545 = vmatprep.subr.bf16.mxu0 0
  %3546 = vmatpush1.bf16.msra.mxu0 0
  %3547 = vmatprep.subr.bf16.mxu0 0
  %3548 = vmatpush1.bf16.msra.mxu0 0
  %3549 = vmatprep.mubr.bf16.mxu0 0
  %3550 = vmatmul.mubr.bf16.gmra.mrb[0].mxu0 %v3515
  %v3551 = vpop.f32.mrb[0].mxu0
  %v3552 = vadd.f32 0.0, %v3551
  %v3553 = vpop.f32.mrb[0].mxu0
  %v3554 = vpop.f32.mrb[0].mxu0
  %v3555 = vadd.f32 0.0, %v3554
  %v3556 = vpop.f32.mrb[0].mxu0
  %3557 = vdwg.mxu0
  %v3558 = vadd.f32 %v3506, %v3552
  %v3559 = vadd.f32 %v3507, %v3555
  %v3562 = vunpack.c.l.b16 %v2663
  %v3563 = vunpack.c.l.b16 %v2664
  %v3564 = vpack.c.b16 %v3563, %v3562
  %v3567 = vsel %vm2685, %v2621, 0
  %3569 = vmatprep.subr.bf16.mxu0 0
  %3570 = vmatpush1.bf16.msra.mxu0 %v3564
  %3571 = vmatprep.subr.bf16.mxu0 0
  %3572 = vmatpush1.bf16.msra.mxu0 0
  %3573 = vmatprep.subr.bf16.mxu0 0
  %3574 = vmatpush1.bf16.msra.mxu0 0
  %3575 = vmatprep.subr.bf16.mxu0 0
  %3576 = vmatpush1.bf16.msra.mxu0 0
  %3577 = vmatprep.subr.bf16.mxu0 0
  %3578 = vmatpush1.bf16.msra.mxu0 0
  %3579 = vmatprep.subr.bf16.mxu0 0
  %3580 = vmatpush1.bf16.msra.mxu0 0
  %3581 = vmatprep.subr.bf16.mxu0 0
  %3582 = vmatpush1.bf16.msra.mxu0 0
  %3583 = vmatprep.subr.bf16.mxu0 0
  %3584 = vmatpush1.bf16.msra.mxu0 0
  %3585 = vmatprep.subr.bf16.mxu0 0
  %3586 = vmatpush1.bf16.msra.mxu0 0
  %3587 = vmatprep.subr.bf16.mxu0 0
  %3588 = vmatpush1.bf16.msra.mxu0 0
  %3589 = vmatprep.subr.bf16.mxu0 0
  %3590 = vmatpush1.bf16.msra.mxu0 0
  %3591 = vmatprep.subr.bf16.mxu0 0
  %3592 = vmatpush1.bf16.msra.mxu0 0
  %3593 = vmatprep.subr.bf16.mxu0 0
  %3594 = vmatpush1.bf16.msra.mxu0 0
  %3595 = vmatprep.subr.bf16.mxu0 0
  %3596 = vmatpush1.bf16.msra.mxu0 0
  %3597 = vmatprep.subr.bf16.mxu0 0
  %3598 = vmatpush1.bf16.msra.mxu0 0
  %3599 = vmatprep.subr.bf16.mxu0 0
  %3600 = vmatpush1.bf16.msra.mxu0 0
  %3601 = vmatprep.mubr.bf16.mxu0 0
  %3602 = vmatmul.mubr.bf16.gmra.mrb[0].mxu0 %v3567
  %v3603 = vpop.f32.mrb[0].mxu0
  %v3604 = vadd.f32 0.0, %v3603
  %v3605 = vpop.f32.mrb[0].mxu0
  %v3606 = vpop.f32.mrb[0].mxu0
  %v3607 = vadd.f32 0.0, %v3606
  %v3608 = vpop.f32.mrb[0].mxu0
  %3609 = vdwg.mxu0
  %v3610 = vadd.f32 %v3558, %v3604
  %v3611 = vadd.f32 %v3559, %v3607
  %v3614 = vunpack.c.l.b16 %v2665
  %v3615 = vunpack.c.l.b16 %v2666
  %v3616 = vpack.c.b16 %v3615, %v3614
  %v3619 = vsel %vm2685, %v2622, 0
  %3621 = vmatprep.subr.bf16.mxu0 0
  %3622 = vmatpush1.bf16.msra.mxu0 %v3616
  %3623 = vmatprep.subr.bf16.mxu0 0
  %3624 = vmatpush1.bf16.msra.mxu0 0
  %3625 = vmatprep.subr.bf16.mxu0 0
  %3626 = vmatpush1.bf16.msra.mxu0 0
  %3627 = vmatprep.subr.bf16.mxu0 0
  %3628 = vmatpush1.bf16.msra.mxu0 0
  %3629 = vmatprep.subr.bf16.mxu0 0
  %3630 = vmatpush1.bf16.msra.mxu0 0
  %3631 = vmatprep.subr.bf16.mxu0 0
  %3632 = vmatpush1.bf16.msra.mxu0 0
  %3633 = vmatprep.subr.bf16.mxu0 0
  %3634 = vmatpush1.bf16.msra.mxu0 0
  %3635 = vmatprep.subr.bf16.mxu0 0
  %3636 = vmatpush1.bf16.msra.mxu0 0
  %3637 = vmatprep.subr.bf16.mxu0 0
  %3638 = vmatpush1.bf16.msra.mxu0 0
  %3639 = vmatprep.subr.bf16.mxu0 0
  %3640 = vmatpush1.bf16.msra.mxu0 0
  %3641 = vmatprep.subr.bf16.mxu0 0
  %3642 = vmatpush1.bf16.msra.mxu0 0
  %3643 = vmatprep.subr.bf16.mxu0 0
  %3644 = vmatpush1.bf16.msra.mxu0 0
  %3645 = vmatprep.subr.bf16.mxu0 0
  %3646 = vmatpush1.bf16.msra.mxu0 0
  %3647 = vmatprep.subr.bf16.mxu0 0
  %3648 = vmatpush1.bf16.msra.mxu0 0
  %3649 = vmatprep.subr.bf16.mxu0 0
  %3650 = vmatpush1.bf16.msra.mxu0 0
  %3651 = vmatprep.subr.bf16.mxu0 0
  %3652 = vmatpush1.bf16.msra.mxu0 0
  %3653 = vmatprep.mubr.bf16.mxu0 0
  %3654 = vmatmul.mubr.bf16.gmra.mrb[0].mxu0 %v3619
  %v3655 = vpop.f32.mrb[0].mxu0
  %v3656 = vadd.f32 0.0, %v3655
  %v3657 = vpop.f32.mrb[0].mxu0
  %v3658 = vpop.f32.mrb[0].mxu0
  %v3659 = vadd.f32 0.0, %v3658
  %v3660 = vpop.f32.mrb[0].mxu0
  %3661 = vdwg.mxu0
  %v3662 = vadd.f32 %v3610, %v3656
  %v3663 = vadd.f32 %v3611, %v3659
  %v3666 = vunpack.c.l.b16 %v2667
  %v3667 = vunpack.c.l.b16 %v2668
  %v3668 = vpack.c.b16 %v3667, %v3666
  %v3671 = vsel %vm2685, %v2623, 0
  %3673 = vmatprep.subr.bf16.mxu0 0
  %3674 = vmatpush1.bf16.msra.mxu0 %v3668
  %3675 = vmatprep.subr.bf16.mxu0 0
  %3676 = vmatpush1.bf16.msra.mxu0 0
  %3677 = vmatprep.subr.bf16.mxu0 0
  %3678 = vmatpush1.bf16.msra.mxu0 0
  %3679 = vmatprep.subr.bf16.mxu0 0
  %3680 = vmatpush1.bf16.msra.mxu0 0
  %3681 = vmatprep.subr.bf16.mxu0 0
  %3682 = vmatpush1.bf16.msra.mxu0 0
  %3683 = vmatprep.subr.bf16.mxu0 0
  %3684 = vmatpush1.bf16.msra.mxu0 0
  %3685 = vmatprep.subr.bf16.mxu0 0
  %3686 = vmatpush1.bf16.msra.mxu0 0
  %3687 = vmatprep.subr.bf16.mxu0 0
  %3688 = vmatpush1.bf16.msra.mxu0 0
  %3689 = vmatprep.subr.bf16.mxu0 0
  %3690 = vmatpush1.bf16.msra.mxu0 0
  %3691 = vmatprep.subr.bf16.mxu0 0
  %3692 = vmatpush1.bf16.msra.mxu0 0
  %3693 = vmatprep.subr.bf16.mxu0 0
  %3694 = vmatpush1.bf16.msra.mxu0 0
  %3695 = vmatprep.subr.bf16.mxu0 0
  %3696 = vmatpush1.bf16.msra.mxu0 0
  %3697 = vmatprep.subr.bf16.mxu0 0
  %3698 = vmatpush1.bf16.msra.mxu0 0
  %3699 = vmatprep.subr.bf16.mxu0 0
  %3700 = vmatpush1.bf16.msra.mxu0 0
  %3701 = vmatprep.subr.bf16.mxu0 0
  %3702 = vmatpush1.bf16.msra.mxu0 0
  %3703 = vmatprep.subr.bf16.mxu0 0
  %3704 = vmatpush1.bf16.msra.mxu0 0
  %3705 = vmatprep.mubr.bf16.mxu0 0
  %3706 = vmatmul.mubr.bf16.gmra.mrb[0].mxu0 %v3671
  %v3707 = vpop.f32.mrb[0].mxu0
  %v3708 = vadd.f32 0.0, %v3707
  %v3709 = vpop.f32.mrb[0].mxu0
  %v3710 = vpop.f32.mrb[0].mxu0
  %v3711 = vadd.f32 0.0, %v3710
  %v3712 = vpop.f32.mrb[0].mxu0
  %3713 = vdwg.mxu0
  %v3714 = vadd.f32 %v3662, %v3708
  %v3715 = vadd.f32 %v3663, %v3711
  %v3718 = vunpack.c.l.b16 %v2669
  %v3719 = vunpack.c.l.b16 %v2670
  %v3720 = vpack.c.b16 %v3719, %v3718
  %v3723 = vsel %vm2685, %v2624, 0
  %3725 = vmatprep.subr.bf16.mxu0 0
  %3726 = vmatpush1.bf16.msra.mxu0 %v3720
  %3727 = vmatprep.subr.bf16.mxu0 0
  %3728 = vmatpush1.bf16.msra.mxu0 0
  %3729 = vmatprep.subr.bf16.mxu0 0
  %3730 = vmatpush1.bf16.msra.mxu0 0
  %3731 = vmatprep.subr.bf16.mxu0 0
  %3732 = vmatpush1.bf16.msra.mxu0 0
  %3733 = vmatprep.subr.bf16.mxu0 0
  %3734 = vmatpush1.bf16.msra.mxu0 0
  %3735 = vmatprep.subr.bf16.mxu0 0
  %3736 = vmatpush1.bf16.msra.mxu0 0
  %3737 = vmatprep.subr.bf16.mxu0 0
  %3738 = vmatpush1.bf16.msra.mxu0 0
  %3739 = vmatprep.subr.bf16.mxu0 0
  %3740 = vmatpush1.bf16.msra.mxu0 0
  %3741 = vmatprep.subr.bf16.mxu0 0
  %3742 = vmatpush1.bf16.msra.mxu0 0
  %3743 = vmatprep.subr.bf16.mxu0 0
  %3744 = vmatpush1.bf16.msra.mxu0 0
  %3745 = vmatprep.subr.bf16.mxu0 0
  %3746 = vmatpush1.bf16.msra.mxu0 0
  %3747 = vmatprep.subr.bf16.mxu0 0
  %3748 = vmatpush1.bf16.msra.mxu0 0
  %3749 = vmatprep.subr.bf16.mxu0 0
  %3750 = vmatpush1.bf16.msra.mxu0 0
  %3751 = vmatprep.subr.bf16.mxu0 0
  %3752 = vmatpush1.bf16.msra.mxu0 0
  %3753 = vmatprep.subr.bf16.mxu0 0
  %3754 = vmatpush1.bf16.msra.mxu0 0
  %3755 = vmatprep.subr.bf16.mxu0 0
  %3756 = vmatpush1.bf16.msra.mxu0 0
  %3757 = vmatprep.mubr.bf16.mxu0 0
  %3758 = vmatmul.mubr.bf16.gmra.mrb[0].mxu0 %v3723
  %v3759 = vpop.f32.mrb[0].mxu0
  %v3760 = vadd.f32 0.0, %v3759
  %v3761 = vpop.f32.mrb[0].mxu0
  %v3762 = vpop.f32.mrb[0].mxu0
  %v3763 = vadd.f32 0.0, %v3762
  %v3764 = vpop.f32.mrb[0].mxu0
  %3765 = vdwg.mxu0
  %v3766 = vadd.f32 %v3714, %v3760
  %v3767 = vadd.f32 %v3715, %v3763
  %v3770 = vunpack.c.l.b16 %v2671
  %v3771 = vunpack.c.l.b16 %v2672
  %v3772 = vpack.c.b16 %v3771, %v3770
  %v3775 = vsel %vm2685, %v2625, 0
  %3777 = vmatprep.subr.bf16.mxu0 0
  %3778 = vmatpush1.bf16.msra.mxu0 %v3772
  %3779 = vmatprep.subr.bf16.mxu0 0
  %3780 = vmatpush1.bf16.msra.mxu0 0
  %3781 = vmatprep.subr.bf16.mxu0 0
  %3782 = vmatpush1.bf16.msra.mxu0 0
  %3783 = vmatprep.subr.bf16.mxu0 0
  %3784 = vmatpush1.bf16.msra.mxu0 0
  %3785 = vmatprep.subr.bf16.mxu0 0
  %3786 = vmatpush1.bf16.msra.mxu0 0
  %3787 = vmatprep.subr.bf16.mxu0 0
  %3788 = vmatpush1.bf16.msra.mxu0 0
  %3789 = vmatprep.subr.bf16.mxu0 0
  %3790 = vmatpush1.bf16.msra.mxu0 0
  %3791 = vmatprep.subr.bf16.mxu0 0
  %3792 = vmatpush1.bf16.msra.mxu0 0
  %3793 = vmatprep.subr.bf16.mxu0 0
  %3794 = vmatpush1.bf16.msra.mxu0 0
  %3795 = vmatprep.subr.bf16.mxu0 0
  %3796 = vmatpush1.bf16.msra.mxu0 0
  %3797 = vmatprep.subr.bf16.mxu0 0
  %3798 = vmatpush1.bf16.msra.mxu0 0
  %3799 = vmatprep.subr.bf16.mxu0 0
  %3800 = vmatpush1.bf16.msra.mxu0 0
  %3801 = vmatprep.subr.bf16.mxu0 0
  %3802 = vmatpush1.bf16.msra.mxu0 0
  %3803 = vmatprep.subr.bf16.mxu0 0
  %3804 = vmatpush1.bf16.msra.mxu0 0
  %3805 = vmatprep.subr.bf16.mxu0 0
  %3806 = vmatpush1.bf16.msra.mxu0 0
  %3807 = vmatprep.subr.bf16.mxu0 0
  %3808 = vmatpush1.bf16.msra.mxu0 0
  %3809 = vmatprep.mubr.bf16.mxu0 0
  %3810 = vmatmul.mubr.bf16.gmra.mrb[0].mxu0 %v3775
  %v3811 = vpop.f32.mrb[0].mxu0
  %v3812 = vadd.f32 0.0, %v3811
  %v3813 = vpop.f32.mrb[0].mxu0
  %v3814 = vpop.f32.mrb[0].mxu0
  %v3815 = vadd.f32 0.0, %v3814
  %v3816 = vpop.f32.mrb[0].mxu0
  %3817 = vdwg.mxu0
  %v3818 = vadd.f32 %v3766, %v3812
  %v3819 = vadd.f32 %v3767, %v3815
  %v3822 = vunpack.c.l.b16 %v2673
  %v3823 = vunpack.c.l.b16 %v2674
  %v3824 = vpack.c.b16 %v3823, %v3822
  %v3827 = vsel %vm2685, %v2626, 0
  %3829 = vmatprep.subr.bf16.mxu0 0
  %3830 = vmatpush1.bf16.msra.mxu0 %v3824
  %3831 = vmatprep.subr.bf16.mxu0 0
  %3832 = vmatpush1.bf16.msra.mxu0 0
  %3833 = vmatprep.subr.bf16.mxu0 0
  %3834 = vmatpush1.bf16.msra.mxu0 0
  %3835 = vmatprep.subr.bf16.mxu0 0
  %3836 = vmatpush1.bf16.msra.mxu0 0
  %3837 = vmatprep.subr.bf16.mxu0 0
  %3838 = vmatpush1.bf16.msra.mxu0 0
  %3839 = vmatprep.subr.bf16.mxu0 0
  %3840 = vmatpush1.bf16.msra.mxu0 0
  %3841 = vmatprep.subr.bf16.mxu0 0
  %3842 = vmatpush1.bf16.msra.mxu0 0
  %3843 = vmatprep.subr.bf16.mxu0 0
  %3844 = vmatpush1.bf16.msra.mxu0 0
  %3845 = vmatprep.subr.bf16.mxu0 0
  %3846 = vmatpush1.bf16.msra.mxu0 0
  %3847 = vmatprep.subr.bf16.mxu0 0
  %3848 = vmatpush1.bf16.msra.mxu0 0
  %3849 = vmatprep.subr.bf16.mxu0 0
  %3850 = vmatpush1.bf16.msra.mxu0 0
  %3851 = vmatprep.subr.bf16.mxu0 0
  %3852 = vmatpush1.bf16.msra.mxu0 0
  %3853 = vmatprep.subr.bf16.mxu0 0
  %3854 = vmatpush1.bf16.msra.mxu0 0
  %3855 = vmatprep.subr.bf16.mxu0 0
  %3856 = vmatpush1.bf16.msra.mxu0 0
  %3857 = vmatprep.subr.bf16.mxu0 0
  %3858 = vmatpush1.bf16.msra.mxu0 0
  %3859 = vmatprep.subr.bf16.mxu0 0
  %3860 = vmatpush1.bf16.msra.mxu0 0
  %3861 = vmatprep.mubr.bf16.mxu0 0
  %3862 = vmatmul.mubr.bf16.gmra.mrb[0].mxu0 %v3827
  %v3863 = vpop.f32.mrb[0].mxu0
  %v3864 = vadd.f32 0.0, %v3863
  %v3865 = vpop.f32.mrb[0].mxu0
  %v3866 = vpop.f32.mrb[0].mxu0
  %v3867 = vadd.f32 0.0, %v3866
  %v3868 = vpop.f32.mrb[0].mxu0
  %3869 = vdwg.mxu0
  %v3870 = vadd.f32 %v3818, %v3864
  %v3871 = vadd.f32 %v3819, %v3867
  %v3874 = vunpack.c.l.b16 %v2675
  %v3875 = vunpack.c.l.b16 %v2676
  %v3876 = vpack.c.b16 %v3875, %v3874
  %v3879 = vsel %vm2685, %v2627, 0
  %3881 = vmatprep.subr.bf16.mxu0 0
  %3882 = vmatpush1.bf16.msra.mxu0 %v3876
  %3883 = vmatprep.subr.bf16.mxu0 0
  %3884 = vmatpush1.bf16.msra.mxu0 0
  %3885 = vmatprep.subr.bf16.mxu0 0
  %3886 = vmatpush1.bf16.msra.mxu0 0
  %3887 = vmatprep.subr.bf16.mxu0 0
  %3888 = vmatpush1.bf16.msra.mxu0 0
  %3889 = vmatprep.subr.bf16.mxu0 0
  %3890 = vmatpush1.bf16.msra.mxu0 0
  %3891 = vmatprep.subr.bf16.mxu0 0
  %3892 = vmatpush1.bf16.msra.mxu0 0
  %3893 = vmatprep.subr.bf16.mxu0 0
  %3894 = vmatpush1.bf16.msra.mxu0 0
  %3895 = vmatprep.subr.bf16.mxu0 0
  %3896 = vmatpush1.bf16.msra.mxu0 0
  %3897 = vmatprep.subr.bf16.mxu0 0
  %3898 = vmatpush1.bf16.msra.mxu0 0
  %3899 = vmatprep.subr.bf16.mxu0 0
  %3900 = vmatpush1.bf16.msra.mxu0 0
  %3901 = vmatprep.subr.bf16.mxu0 0
  %3902 = vmatpush1.bf16.msra.mxu0 0
  %3903 = vmatprep.subr.bf16.mxu0 0
  %3904 = vmatpush1.bf16.msra.mxu0 0
  %3905 = vmatprep.subr.bf16.mxu0 0
  %3906 = vmatpush1.bf16.msra.mxu0 0
  %3907 = vmatprep.subr.bf16.mxu0 0
  %3908 = vmatpush1.bf16.msra.mxu0 0
  %3909 = vmatprep.subr.bf16.mxu0 0
  %3910 = vmatpush1.bf16.msra.mxu0 0
  %3911 = vmatprep.subr.bf16.mxu0 0
  %3912 = vmatpush1.bf16.msra.mxu0 0
  %3913 = vmatprep.mubr.bf16.mxu0 0
  %3914 = vmatmul.mubr.bf16.gmra.mrb[0].mxu0 %v3879
  %v3915 = vpop.f32.mrb[0].mxu0
  %v3916 = vadd.f32 0.0, %v3915
  %v3917 = vpop.f32.mrb[0].mxu0
  %v3918 = vpop.f32.mrb[0].mxu0
  %v3919 = vadd.f32 0.0, %v3918
  %v3920 = vpop.f32.mrb[0].mxu0
  %3921 = vdwg.mxu0
  %v3922 = vadd.f32 %v3870, %v3916
  %v3923 = vadd.f32 %v3871, %v3919
  %v3926 = vunpack.c.l.b16 %v2677
  %v3927 = vunpack.c.l.b16 %v2678
  %v3928 = vpack.c.b16 %v3927, %v3926
  %v3931 = vsel %vm2685, %v2628, 0
  %3933 = vmatprep.subr.bf16.mxu0 0
  %3934 = vmatpush1.bf16.msra.mxu0 %v3928
  %3935 = vmatprep.subr.bf16.mxu0 0
  %3936 = vmatpush1.bf16.msra.mxu0 0
  %3937 = vmatprep.subr.bf16.mxu0 0
  %3938 = vmatpush1.bf16.msra.mxu0 0
  %3939 = vmatprep.subr.bf16.mxu0 0
  %3940 = vmatpush1.bf16.msra.mxu0 0
  %3941 = vmatprep.subr.bf16.mxu0 0
  %3942 = vmatpush1.bf16.msra.mxu0 0
  %3943 = vmatprep.subr.bf16.mxu0 0
  %3944 = vmatpush1.bf16.msra.mxu0 0
  %3945 = vmatprep.subr.bf16.mxu0 0
  %3946 = vmatpush1.bf16.msra.mxu0 0
  %3947 = vmatprep.subr.bf16.mxu0 0
  %3948 = vmatpush1.bf16.msra.mxu0 0
  %3949 = vmatprep.subr.bf16.mxu0 0
  %3950 = vmatpush1.bf16.msra.mxu0 0
  %3951 = vmatprep.subr.bf16.mxu0 0
  %3952 = vmatpush1.bf16.msra.mxu0 0
  %3953 = vmatprep.subr.bf16.mxu0 0
  %3954 = vmatpush1.bf16.msra.mxu0 0
  %3955 = vmatprep.subr.bf16.mxu0 0
  %3956 = vmatpush1.bf16.msra.mxu0 0
  %3957 = vmatprep.subr.bf16.mxu0 0
  %3958 = vmatpush1.bf16.msra.mxu0 0
  %3959 = vmatprep.subr.bf16.mxu0 0
  %3960 = vmatpush1.bf16.msra.mxu0 0
  %3961 = vmatprep.subr.bf16.mxu0 0
  %3962 = vmatpush1.bf16.msra.mxu0 0
  %3963 = vmatprep.subr.bf16.mxu0 0
  %3964 = vmatpush1.bf16.msra.mxu0 0
  %3965 = vmatprep.mubr.bf16.mxu0 0
  %3966 = vmatmul.mubr.bf16.gmra.mrb[0].mxu0 %v3931
  %v3967 = vpop.f32.mrb[0].mxu0
  %v3968 = vadd.f32 0.0, %v3967
  %v3969 = vpop.f32.mrb[0].mxu0
  %v3970 = vpop.f32.mrb[0].mxu0
  %v3971 = vadd.f32 0.0, %v3970
  %v3972 = vpop.f32.mrb[0].mxu0
  %3973 = vdwg.mxu0
  %v3974 = vadd.f32 %v3922, %v3968
  %v3975 = vadd.f32 %v3923, %v3971
  %v3976 = vld [vmem:[%s4] sm:$0x1]
  %v3978 = vlaneseq
  %v3979 = vshrl.u32 %v3978, 7
  %v3980 = vsub.s32 0, %v3979
  %v3981 = vrot.slane %v3976, %v3980
  %v3983 = vadd.f32 %v3974, %v3981
  %v3984 = vadd.f32 %v3975, %v3981
  %v3985 = vmax.f32 %v3983, 0.0
  %v3986 = vmax.f32 %v3984, 0.0
  %v3987 = vpack.c.bf16 %v3986, %v3985
  %v3988 = vld [vmem:[%s5] sm:$0xf]
  %v3989 = vld [vmem:[%s5 + $0x4] sm:$0xf]
  %v3990 = vld [vmem:[%s5 + $0x8] sm:$0xf]
  %v3991 = vld [vmem:[%s5 + $0xc] sm:$0xf]
  %v3992 = vld [vmem:[%s5 + $0x10] sm:$0xf]
  %v3993 = vld [vmem:[%s5 + $0x14] sm:$0xf]
  %v3994 = vld [vmem:[%s5 + $0x18] sm:$0xf]
  %v3995 = vld [vmem:[%s5 + $0x1c] sm:$0xf]
  %v3996 = vld [vmem:[%s5 + $0x20] sm:$0xf]
  %v3997 = vld [vmem:[%s5 + $0x24] sm:$0xf]
  %v3998 = vld [vmem:[%s5 + $0x28] sm:$0xf]
  %v3999 = vld [vmem:[%s5 + $0x2c] sm:$0xf]
  %v4000 = vld [vmem:[%s5 + $0x30] sm:$0xf]
  %v4001 = vld [vmem:[%s5 + $0x34] sm:$0xf]
  %v4002 = vld [vmem:[%s5 + $0x38] sm:$0xf]
  %v4003 = vld [vmem:[%s6] sm:$0x1]
  %v4005 = vlaneseq
  %v4006 = vshrl.u32 %v4005, 7
  %v4007 = vsub.s32 0, %v4006
  %v4008 = vrot.slane %v4003, %v4007
  %v4025 = vunpack.c.l.b16 %v3988
  %v4026 = vunpack.c.l.b16 %v3989
  %v4027 = vunpack.c.l.b16 %v3990
  %v4028 = vunpack.c.l.b16 %v3991
  %v4029 = vunpack.c.l.b16 %v3992
  %v4030 = vunpack.c.l.b16 %v3993
  %v4031 = vunpack.c.l.b16 %v3994
  %v4032 = vunpack.c.l.b16 %v3995
  %v4033 = vunpack.c.l.b16 %v3996
  %v4034 = vunpack.c.l.b16 %v3997
  %v4035 = vunpack.c.l.b16 %v3998
  %v4036 = vunpack.c.l.b16 %v3999
  %v4037 = vunpack.c.l.b16 %v4000
  %v4038 = vunpack.c.l.b16 %v4001
  %v4039 = vunpack.c.l.b16 %v4002
  %v4040 = vpack.c.b16 %v4026, %v4025
  %v4041 = vpack.c.b16 %v4028, %v4027
  %v4042 = vpack.c.b16 %v4030, %v4029
  %v4043 = vpack.c.b16 %v4032, %v4031
  %v4044 = vpack.c.b16 %v4034, %v4033
  %v4045 = vpack.c.b16 %v4036, %v4035
  %v4046 = vpack.c.b16 %v4038, %v4037
  %v4047 = vpack.c.b16 %v4039, %v4039
  %vm4055 = vcmask 982016
  %v4057 = vsel %vm4055, %v3987, 0
  %vm4059 = vcmask 1043456
  %v4061 = vsel %vm4059, %v4047, 0
  %4063 = vmatprep.subr.bf16.mxu0 0
  %4064 = vmatpush1.bf16.msra.mxu0 %v4040
  %4065 = vmatprep.subr.bf16.mxu0 0
  %4066 = vmatpush1.bf16.msra.mxu0 %v4041
  %4067 = vmatprep.subr.bf16.mxu0 0
  %4068 = vmatpush1.bf16.msra.mxu0 %v4042
  %4069 = vmatprep.subr.bf16.mxu0 0
  %4070 = vmatpush1.bf16.msra.mxu0 %v4043
  %4071 = vmatprep.subr.bf16.mxu0 0
  %4072 = vmatpush1.bf16.msra.mxu0 %v4044
  %4073 = vmatprep.subr.bf16.mxu0 0
  %4074 = vmatpush1.bf16.msra.mxu0 %v4045
  %4075 = vmatprep.subr.bf16.mxu0 0
  %4076 = vmatpush1.bf16.msra.mxu0 %v4046
  %4077 = vmatprep.subr.bf16.mxu0 0
  %4078 = vmatpush1.bf16.msra.mxu0 %v4061
  %4079 = vmatprep.subr.bf16.mxu0 0
  %4080 = vmatpush1.bf16.msra.mxu0 0
  %4081 = vmatprep.subr.bf16.mxu0 0
  %4082 = vmatpush1.bf16.msra.mxu0 0
  %4083 = vmatprep.subr.bf16.mxu0 0
  %4084 = vmatpush1.bf16.msra.mxu0 0
  %4085 = vmatprep.subr.bf16.mxu0 0
  %4086 = vmatpush1.bf16.msra.mxu0 0
  %4087 = vmatprep.subr.bf16.mxu0 0
  %4088 = vmatpush1.bf16.msra.mxu0 0
  %4089 = vmatprep.subr.bf16.mxu0 0
  %4090 = vmatpush1.bf16.msra.mxu0 0
  %4091 = vmatprep.subr.bf16.mxu0 0
  %4092 = vmatpush1.bf16.msra.mxu0 0
  %4093 = vmatprep.subr.bf16.mxu0 0
  %4094 = vmatpush1.bf16.msra.mxu0 0
  %4095 = vmatprep.mubr.bf16.mxu0 0
  %4096 = vmatmul.mubr.bf16.gmra.mrb[0].mxu0 %v4057
  %v4097 = vpop.f32.mrb[0].mxu0
  %v4098 = vadd.f32 %v4008, %v4097
  %v4099 = vpop.f32.mrb[0].mxu0
  %v4100 = vpop.f32.mrb[0].mxu0
  %v4101 = vadd.f32 %v4008, %v4100
  %v4102 = vpop.f32.mrb[0].mxu0
  %4103 = vdwg.mxu0
  %v4104 = vmax.f32 %v4098, 0.0
  %v4105 = vmax.f32 %v4101, 0.0
  %v4106 = vpack.c.bf16 %v4105, %v4104
  %v4107 = vld [vmem:[%s7] sm:$0xf]
  %v4108 = vld [vmem:[%s7 + $0x4] sm:$0xf]
  %v4109 = vld [vmem:[%s7 + $0x8] sm:$0xf]
  %v4110 = vld [vmem:[%s7 + $0xc] sm:$0xf]
  %v4111 = vld [vmem:[%s7 + $0x10] sm:$0xf]
  %v4112 = vld [vmem:[%s7 + $0x14] sm:$0xf]
  %v4113 = vld [vmem:[%s7 + $0x18] sm:$0xf]
  %v4114 = vld [vmem:[%s7 + $0x1c] sm:$0xf]
  %v4115 = vld [vmem:[%s7 + $0x20] sm:$0xf]
  %v4116 = vld [vmem:[%s7 + $0x24] sm:$0xf]
  %v4117 = vld [vmem:[%s7 + $0x28] sm:$0x3]
  %v4118 = vld [vmem:[%s8] sm:$0x1]
  %v4120 = vlaneseq
  %v4121 = vshrl.u32 %v4120, 7
  %v4122 = vsub.s32 0, %v4121
  %v4123 = vrot.slane %v4118, %v4122
  %v4136 = vunpack.c.l.b16 %v4107
  %v4137 = vunpack.c.l.b16 %v4108
  %v4138 = vunpack.c.l.b16 %v4109
  %v4139 = vunpack.c.l.b16 %v4110
  %v4140 = vunpack.c.l.b16 %v4111
  %v4141 = vunpack.c.l.b16 %v4112
  %v4142 = vunpack.c.l.b16 %v4113
  %v4143 = vunpack.c.l.b16 %v4114
  %v4144 = vunpack.c.l.b16 %v4115
  %v4145 = vunpack.c.l.b16 %v4116
  %v4146 = vunpack.c.l.b16 %v4117
  %v4147 = vpack.c.b16 %v4137, %v4136
  %v4148 = vpack.c.b16 %v4139, %v4138
  %v4149 = vpack.c.b16 %v4141, %v4140
  %v4150 = vpack.c.b16 %v4143, %v4142
  %v4151 = vpack.c.b16 %v4145, %v4144
  %v4152 = vpack.c.b16 %v4146, %v4146
  %vm4158 = vcmask 687104
  %v4160 = vsel %vm4158, %v4106, 0
  %vm4162 = vcmask 1041408
  %v4164 = vsel %vm4162, %v4152, 0
  %4166 = vmatprep.subr.bf16.mxu0 0
  %4167 = vmatpush1.bf16.msra.mxu0 %v4147
  %4168 = vmatprep.subr.bf16.mxu0 0
  %4169 = vmatpush1.bf16.msra.mxu0 %v4148
  %4170 = vmatprep.subr.bf16.mxu0 0
  %4171 = vmatpush1.bf16.msra.mxu0 %v4149
  %4172 = vmatprep.subr.bf16.mxu0 0
  %4173 = vmatpush1.bf16.msra.mxu0 %v4150
  %4174 = vmatprep.subr.bf16.mxu0 0
  %4175 = vmatpush1.bf16.msra.mxu0 %v4151
  %4176 = vmatprep.subr.bf16.mxu0 0
  %4177 = vmatpush1.bf16.msra.mxu0 %v4164
  %4178 = vmatprep.subr.bf16.mxu0 0
  %4179 = vmatpush1.bf16.msra.mxu0 0
  %4180 = vmatprep.subr.bf16.mxu0 0
  %4181 = vmatpush1.bf16.msra.mxu0 0
  %4182 = vmatprep.subr.bf16.mxu0 0
  %4183 = vmatpush1.bf16.msra.mxu0 0
  %4184 = vmatprep.subr.bf16.mxu0 0
  %4185 = vmatpush1.bf16.msra.mxu0 0
  %4186 = vmatprep.subr.bf16.mxu0 0
  %4187 = vmatpush1.bf16.msra.mxu0 0
  %4188 = vmatprep.subr.bf16.mxu0 0
  %4189 = vmatpush1.bf16.msra.mxu0 0
  %4190 = vmatprep.subr.bf16.mxu0 0
  %4191 = vmatpush1.bf16.msra.mxu0 0
  %4192 = vmatprep.subr.bf16.mxu0 0
  %4193 = vmatpush1.bf16.msra.mxu0 0
  %4194 = vmatprep.subr.bf16.mxu0 0
  %4195 = vmatpush1.bf16.msra.mxu0 0
  %4196 = vmatprep.subr.bf16.mxu0 0
  %4197 = vmatpush1.bf16.msra.mxu0 0
  %4198 = vmatprep.mubr.bf16.mxu0 0
  %4199 = vmatmul.mubr.bf16.gmra.mrb[0].mxu0 %v4160
  %v4200 = vpop.f32.mrb[0].mxu0
  %v4201 = vadd.f32 %v4123, %v4200
  %v4202 = vpop.f32.mrb[0].mxu0
  %v4203 = vpop.f32.mrb[0].mxu0
  %v4204 = vadd.f32 %v4123, %v4203
  %v4205 = vpop.f32.mrb[0].mxu0
  %4206 = vdwg.mxu0
  %vm4207 = vcmask 80896
  %4208 = vst.msk [vmem:[%s9] sm:$0xff] %vm4207, %v4201
  %4209 = vst.msk [vmem:[%s9 + $0x8] sm:$0xff] %vm4207, %v4204
  // Predicated region
  $region38: #{cnn_cifar_forward.3} parent=0 // pred_check
    _
  $region39: #{cnn_cifar_forward.3} parent=0 // pred_check_branch
    %4211 = sbr.rel (0) target = $region41
  $region40: #{cnn_cifar_forward.3} parent=0 // pred_region
    _
  $region41: #{cnn_cifar_forward.3} parent=0 // pred_fallthru
    _
  // Predicated region
  $region42: #{cnn_cifar_forward.3} parent=0 // pred_check
    _
  $region43: #{cnn_cifar_forward.3} parent=0 // pred_check_branch
    %4213 = sbr.rel (0) target = $region45
  $region44: #{cnn_cifar_forward.3} parent=0 // pred_region
    _
  $region45: #{cnn_cifar_forward.3} parent=0 // pred_fallthru
    _

</llo_original>
